<compile_context>
chip_gen: v7x
topology: tpu7x:2x2x1
jax: 0.10.0
libtpu: 0.0.40
codegen_flags: <defaults>
</compile_context>

<pallas_src>
import jax
import jax.numpy as jnp
from jax.experimental import pallas as pl
from jax.experimental.pallas import tpu as pltpu


# --------------------------------------------------------------------- weight reformulation

def _band_3x3_weights(w_hwio, W):
    """(3, 3, Cin, Cout) HWIO conv weights -> (3, W*Cin, W*Cout) banded matmul weights.

    For kernel row kh:  B_kh[wi*Cin+ci, wo*Cout+co] = w[kh, wi-wo+1, ci, co] when
    |wi - wo| <= 1, else 0, so a stride-1 SAME 3x3 conv in the (H, W*C) row layout is
    y_rows = sum_kh row_shift(x_rows, kh-1) @ B_kh  (W-direction zero padding is folded
    into the band structure).
    """
    _, _, cin, cout = w_hwio.shape
    wi = jnp.arange(W)[:, None]
    wo = jnp.arange(W)[None, :]
    d = wi - wo + 1                                      # kw index, valid in [0, 2]
    valid = (d >= 0) & (d <= 2)
    blocks = w_hwio[:, jnp.clip(d, 0, 2)]                # (3, W, W, cin, cout)
    blocks = jnp.where(valid[None, :, :, None, None], blocks, 0.0)
    return blocks.transpose(0, 1, 3, 2, 4).reshape(3, W * cin, W * cout)


def _blockdiag_1x1_weights(w_io, W):
    """(Cin, Cout) 1x1 conv weights -> (W*Cin, W*Cout) block-diagonal matmul weights."""
    cin, cout = w_io.shape
    eye = jnp.eye(W, dtype=w_io.dtype)
    return (eye[:, None, :, None] * w_io[None, :, None, :]).reshape(W * cin, W * cout)


def _tile_row(v, W):
    """Per-channel vector (C,) -> per-row vector (1, W*C) matching the row layout."""
    return jnp.tile(v, W).reshape(1, W * v.shape[0]).astype(jnp.float32)


# ----------------------------------------------------------------------------- fused forward

def residual_block_forward(params, x_nchw, mm_dtype=jnp.bfloat16):
    """ResidualBlock.forward (eval mode).  x_nchw: (N, Cin, H, W) -> (N, Cout, H, W)."""
    N, cin, H, W = x_nchw.shape
    cout = params["shortcut_w"].shape[-1]
    num_layers = len(params["layers"])
    wcout = W * cout

    # NCHW -> lane-dense row layout (N, H, W*Cin); contiguous reshape, done at XLA level.
    x_rows = jnp.transpose(x_nchw, (0, 2, 3, 1)).astype(jnp.float32).reshape(N, H, W * cin)

    # Reformulated weights (small one-time XLA ops; constant-foldable under jit).
    sw_bd = _blockdiag_1x1_weights(params["shortcut_w"], W).astype(mm_dtype)
    sb_row = _tile_row(params["shortcut_b"], W)

    inputs = [x_rows, sw_bd, sb_row]
    in_specs = [
        pl.BlockSpec((1, H, W * cin), lambda n: (n, 0, 0)),
        pl.BlockSpec((W * cin, wcout), lambda n: (0, 0)),
        pl.BlockSpec((1, wcout), lambda n: (0, 0)),
    ]
    for layer in params["layers"]:
        cin_l = layer["w"].shape[2]
        inputs += [
            _band_3x3_weights(layer["w"], W).astype(mm_dtype),
            _tile_row(layer["scale"], W),
            _tile_row(layer["bias"], W),
        ]
        in_specs += [
            pl.BlockSpec((3, W * cin_l, wcout), lambda n: (0, 0, 0)),
            pl.BlockSpec((1, wcout), lambda n: (0, 0)),
            pl.BlockSpec((1, wcout), lambda n: (0, 0)),
        ]

    def kernel(*refs):
        x_ref, sw_ref, sb_ref = refs[0], refs[1], refs[2]
        lrefs = refs[3:3 + 3 * num_layers]
        o_ref = refs[3 + 3 * num_layers]

        # One-row shift matrices (SAME padding along H):
        #   (s_dn @ a)[h] = a[h-1]  (zero row at h = 0)
        #   (s_up @ a)[h] = a[h+1]  (zero row at h = H-1)
        ri = jax.lax.broadcasted_iota(jnp.int32, (H, H), 0)
        ci = jax.lax.broadcasted_iota(jnp.int32, (H, H), 1)
        one = jnp.float32(1.0)
        zero = jnp.float32(0.0)
        s_dn = jnp.where(ci == ri - 1, one, zero).astype(mm_dtype)
        s_up = jnp.where(ci == ri + 1, one, zero).astype(mm_dtype)

        x0m = x_ref[0].astype(mm_dtype)                  # (H, W*Cin) block input (bf16)
        act_m = x0m
        act_f32 = None
        for li in range(num_layers):
            w_ref = lrefs[3 * li]
            scale_ref = lrefs[3 * li + 1]
            bias_ref = lrefs[3 * li + 2]
            # Row-shifted copies (exact: 0/1 products, f32 accumulation, bf16-valued data).
            a_dn = jnp.dot(s_dn, act_m, preferred_element_type=jnp.float32).astype(mm_dtype)
            a_up = jnp.dot(s_up, act_m, preferred_element_type=jnp.float32).astype(mm_dtype)
            # 3x3 conv == 3 banded matmuls; clean f32 "+=" accumulation chain.
            acc = jnp.dot(a_dn, w_ref[0], preferred_element_type=jnp.float32)
            acc = acc + jnp.dot(act_m, w_ref[1], preferred_element_type=jnp.float32)
            acc = acc + jnp.dot(a_up, w_ref[2], preferred_element_type=jnp.float32)
            y = acc * scale_ref[...] + bias_ref[...]      # folded eval-mode BatchNorm (f32)
            act_f32 = y * (1.0 / (1.0 + jnp.exp(-y)))     # SiLU / 'swish-1' (f32)
            if li < num_layers - 1:
                act_m = act_f32.astype(mm_dtype)          # next layer's MXU operand

        # 1x1 shortcut conv (block-diagonal matmul) + bias, residual add in f32.
        sc = jnp.dot(x0m, sw_ref[...], preferred_element_type=jnp.float32) + sb_ref[...]
        o_ref[0] = (act_f32 + sc).astype(o_ref.dtype)     # lane-dense (H, W*Cout) store

    out_rows = pl.pallas_call(
        kernel,
        out_shape=jax.ShapeDtypeStruct((N, H, wcout), jnp.float32),
        grid=(N,),
        in_specs=in_specs,
        out_specs=pl.BlockSpec((1, H, wcout), lambda n: (n, 0, 0)),
        compiler_params=pltpu.CompilerParams(dimension_semantics=("parallel",)),
    )(*inputs)

    out = out_rows.reshape(N, H, W, cout)
    return jnp.transpose(out, (0, 3, 1, 2))               # back to NCHW (PyTorch layout)


# ----------------------------------------------------------------------------------- params

def init_params(key, in_channels, out_channels, num_layers, bn_eps=1e-5):
    """Conv/BN parameters for one ResidualBlock (BN folded into eval-mode scale/bias)."""
    key, k1, k2 = jax.random.split(key, 3)
    params = {
        "shortcut_w": jax.random.normal(k1, (in_channels, out_channels), jnp.float32)
                      / jnp.sqrt(float(in_channels)),
        "shortcut_b": 0.01 * jax.random.normal(k2, (out_channels,), jnp.float32),
        "layers": [],
    }
    cin = in_channels
    for _ in range(num_layers):
        key, kw, kg, kb = jax.random.split(key, 4)
        w = jax.random.normal(kw, (3, 3, cin, out_channels), jnp.float32) / jnp.sqrt(9.0 * cin)
        gamma = 1.0 + 0.1 * jax.random.normal(kg, (out_channels,), jnp.float32)
        beta = 0.1 * jax.random.normal(kb, (out_channels,), jnp.float32)
        run_mean = jnp.zeros((out_channels,), jnp.float32)
        run_var = jnp.ones((out_channels,), jnp.float32)
        scale = gamma / jnp.sqrt(run_var + bn_eps)        # eval-mode BN fold
        bias = beta - run_mean * scale
        params["layers"].append({"w": w, "scale": scale, "bias": bias})
        cin = out_channels
    return params


# -------------------------------------------------------------------------------- references

def _ref_forward(params, x_nchw, mm_dtype=None):
    """Eval-mode ResidualBlock forward via lax.conv.  mm_dtype=None -> pure f32;
    otherwise matmul operands are cast to mm_dtype (mirrors the kernel's MXU dtype)."""
    dn = ("NHWC", "HWIO", "NHWC")
    cast = (lambda a: a) if mm_dtype is None else (lambda a: a.astype(mm_dtype))
    x = jnp.transpose(x_nchw, (0, 2, 3, 1)).astype(jnp.float32)
    cin = x.shape[-1]
    cout = params["shortcut_w"].shape[-1]
    sw = params["shortcut_w"].reshape(1, 1, cin, cout)
    sc = jax.lax.conv_general_dilated(
        cast(x), cast(sw), (1, 1), "VALID", dimension_numbers=dn,
        preferred_element_type=jnp.float32) + params["shortcut_b"]
    h = x
    for layer in params["layers"]:
        y = jax.lax.conv_general_dilated(
            cast(h), cast(layer["w"]), (1, 1), "SAME", dimension_numbers=dn,
            preferred_element_type=jnp.float32)
        y = y * layer["scale"] + layer["bias"]
        h = y * (1.0 / (1.0 + jnp.exp(-y)))               # SiLU, f32
    out = h + sc
    return jnp.transpose(out, (0, 3, 1, 2))


# -------------------------------------------------------------------------------------- main

if __name__ == "__main__":
    key = jax.random.PRNGKey(0)
    key, kx, kp = jax.random.split(key, 3)

    # ResidualBlock(in_channels=4, out_channels=32, num_layers=2) with defaults:
    # activation='swish-1', batchnorm=True, dropout=0, conditioning=False, conv_bias=False.
    N, in_channels, H, W = 2, 4, 16, 16
    out_channels, num_layers = 32, 2
    x = jax.random.normal(kx, (N, in_channels, H, W), jnp.float32)    # NCHW like PyTorch
    params = init_params(kp, in_channels, out_channels, num_layers)

    out = jax.block_until_ready(residual_block_forward(params, x))
    assert out.shape == (N, out_channels, H, W), out.shape

    # Tight check vs a reference that uses the same bf16 MXU operands (isolates the
    # banded-matmul reformulation), plus a looser check vs the pure-f32 reference.
    ref_matched = jax.block_until_ready(_ref_forward(params, x, mm_dtype=jnp.bfloat16))
    ref_f32 = jax.block_until_ready(_ref_forward(params, x))
    err_matched = float(jnp.max(jnp.abs(out - ref_matched)))
    err_f32 = float(jnp.max(jnp.abs(out - ref_f32)))
    assert err_matched < 5e-3, f"mismatch vs bf16-matched reference: {err_matched}"
    assert err_f32 < 8e-2, f"mismatch vs f32 reference: {err_f32}"

    print("KERNEL_OK")
</pallas_src>

<mosaic_0001>
module attributes {stable_mosaic.version = 11 : i64} {
  func.func @kernel(%arg0: i32, %arg1: memref<1x16x64xf32, #tpu.memory_space<vmem>>, %arg2: memref<64x512xbf16, #tpu.memory_space<vmem>>, %arg3: memref<1x512xf32, #tpu.memory_space<vmem>>, %arg4: memref<3x64x512xbf16, #tpu.memory_space<vmem>>, %arg5: memref<1x512xf32, #tpu.memory_space<vmem>>, %arg6: memref<1x512xf32, #tpu.memory_space<vmem>>, %arg7: memref<3x512x512xbf16, #tpu.memory_space<vmem>>, %arg8: memref<1x512xf32, #tpu.memory_space<vmem>>, %arg9: memref<1x512xf32, #tpu.memory_space<vmem>>, %arg10: memref<1x16x512xf32, #tpu.memory_space<vmem>>) attributes {dimension_semantics = [#tpu.dimension_semantics<parallel>], iteration_bounds = array<i64: 2>, scalar_prefetch = 0 : i64, scratch_operands = 0 : i64, tpu.core_type = #tpu.core_type<tc>, window_params = [{transform_indices = @transform_0, window_bounds = array<i64: 1, 16, 64>}, {pipeline_mode = #tpu.pipeline_mode<synchronous>, transform_indices = @transform_1, window_bounds = array<i64: 64, 512>}, {pipeline_mode = #tpu.pipeline_mode<synchronous>, transform_indices = @transform_2, window_bounds = array<i64: 1, 512>}, {pipeline_mode = #tpu.pipeline_mode<synchronous>, transform_indices = @transform_3, window_bounds = array<i64: 3, 64, 512>}, {pipeline_mode = #tpu.pipeline_mode<synchronous>, transform_indices = @transform_4, window_bounds = array<i64: 1, 512>}, {pipeline_mode = #tpu.pipeline_mode<synchronous>, transform_indices = @transform_5, window_bounds = array<i64: 1, 512>}, {pipeline_mode = #tpu.pipeline_mode<synchronous>, transform_indices = @transform_6, window_bounds = array<i64: 3, 512, 512>}, {pipeline_mode = #tpu.pipeline_mode<synchronous>, transform_indices = @transform_7, window_bounds = array<i64: 1, 512>}, {pipeline_mode = #tpu.pipeline_mode<synchronous>, transform_indices = @transform_8, window_bounds = array<i64: 1, 512>}, {transform_indices = @transform_9, window_bounds = array<i64: 1, 16, 512>}]} {
    %0 = tpu.iota {dimensions = array<i32: 0>} : vector<16x16xi32>
    %1 = tpu.iota {dimensions = array<i32: 1>} : vector<16x16xi32>
    %c1_i32 = arith.constant 1 : i32
    %2 = vector.broadcast %c1_i32 : i32 to vector<16x16xi32>
    %3 = arith.subi %0, %2 : vector<16x16xi32>
    %4 = arith.cmpi eq, %1, %3 : vector<16x16xi32>
    %cst = arith.constant 1.000000e+00 : f32
    %cst_0 = arith.constant 0.000000e+00 : f32
    %5 = vector.broadcast %cst : f32 to vector<16x16xf32>
    %6 = vector.broadcast %cst_0 : f32 to vector<16x16xf32>
    %7 = arith.select %4, %5, %6 : vector<16x16xi1>, vector<16x16xf32>
    %8 = arith.truncf %7 : vector<16x16xf32> to vector<16x16xbf16>
    %c1_i32_1 = arith.constant 1 : i32
    %9 = vector.broadcast %c1_i32_1 : i32 to vector<16x16xi32>
    %10 = arith.addi %0, %9 : vector<16x16xi32>
    %11 = arith.cmpi eq, %1, %10 : vector<16x16xi32>
    %cst_2 = arith.constant 1.000000e+00 : f32
    %cst_3 = arith.constant 0.000000e+00 : f32
    %12 = vector.broadcast %cst_2 : f32 to vector<16x16xf32>
    %13 = vector.broadcast %cst_3 : f32 to vector<16x16xf32>
    %14 = arith.select %11, %12, %13 : vector<16x16xi1>, vector<16x16xf32>
    %15 = arith.truncf %14 : vector<16x16xf32> to vector<16x16xbf16>
    %c0 = arith.constant 0 : index
    %c0_4 = arith.constant 0 : index
    %c0_5 = arith.constant 0 : index
    %16 = vector.load %arg1[%c0, %c0_4, %c0_5] : memref<1x16x64xf32, #tpu.memory_space<vmem>>, vector<1x16x64xf32>
    %17 = vector.shape_cast %16 : vector<1x16x64xf32> to vector<16x64xf32>
    %18 = arith.truncf %17 : vector<16x64xf32> to vector<16x64xbf16>
    %cst_6 = arith.constant dense<0.000000e+00> : vector<16x64xf32>
    %19 = tpu.matmul %8, %18, %cst_6 {dimension_numbers = #tpu.dot_dimension_numbers<[1], [0], [0], [1], [0, 0, 1, 1], [], []>} : vector<16x16xbf16>, vector<16x64xbf16>, vector<16x64xf32> -> vector<16x64xf32>
    %20 = arith.truncf %19 : vector<16x64xf32> to vector<16x64xbf16>
    %cst_7 = arith.constant dense<0.000000e+00> : vector<16x64xf32>
    %21 = tpu.matmul %15, %18, %cst_7 {dimension_numbers = #tpu.dot_dimension_numbers<[1], [0], [0], [1], [0, 0, 1, 1], [], []>} : vector<16x16xbf16>, vector<16x64xbf16>, vector<16x64xf32> -> vector<16x64xf32>
    %22 = arith.truncf %21 : vector<16x64xf32> to vector<16x64xbf16>
    %c0_8 = arith.constant 0 : index
    %c0_9 = arith.constant 0 : index
    %c0_10 = arith.constant 0 : index
    %23 = vector.load %arg4[%c0_8, %c0_9, %c0_10] : memref<3x64x512xbf16, #tpu.memory_space<vmem>>, vector<1x64x512xbf16>
    %24 = vector.shape_cast %23 : vector<1x64x512xbf16> to vector<64x512xbf16>
    %cst_11 = arith.constant dense<0.000000e+00> : vector<16x512xf32>
    %25 = tpu.matmul %20, %24, %cst_11 {dimension_numbers = #tpu.dot_dimension_numbers<[1], [0], [0], [1], [0, 0, 1, 1], [], []>} : vector<16x64xbf16>, vector<64x512xbf16>, vector<16x512xf32> -> vector<16x512xf32>
    %c1 = arith.constant 1 : index
    %c0_12 = arith.constant 0 : index
    %c0_13 = arith.constant 0 : index
    %26 = vector.load %arg4[%c1, %c0_12, %c0_13] : memref<3x64x512xbf16, #tpu.memory_space<vmem>>, vector<1x64x512xbf16>
    %27 = vector.shape_cast %26 : vector<1x64x512xbf16> to vector<64x512xbf16>
    %cst_14 = arith.constant dense<0.000000e+00> : vector<16x512xf32>
    %28 = tpu.matmul %18, %27, %cst_14 {dimension_numbers = #tpu.dot_dimension_numbers<[1], [0], [0], [1], [0, 0, 1, 1], [], []>} : vector<16x64xbf16>, vector<64x512xbf16>, vector<16x512xf32> -> vector<16x512xf32>
    %29 = arith.addf %25, %28 : vector<16x512xf32>
    %c2 = arith.constant 2 : index
    %c0_15 = arith.constant 0 : index
    %c0_16 = arith.constant 0 : index
    %30 = vector.load %arg4[%c2, %c0_15, %c0_16] : memref<3x64x512xbf16, #tpu.memory_space<vmem>>, vector<1x64x512xbf16>
    %31 = vector.shape_cast %30 : vector<1x64x512xbf16> to vector<64x512xbf16>
    %cst_17 = arith.constant dense<0.000000e+00> : vector<16x512xf32>
    %32 = tpu.matmul %22, %31, %cst_17 {dimension_numbers = #tpu.dot_dimension_numbers<[1], [0], [0], [1], [0, 0, 1, 1], [], []>} : vector<16x64xbf16>, vector<64x512xbf16>, vector<16x512xf32> -> vector<16x512xf32>
    %33 = arith.addf %29, %32 : vector<16x512xf32>
    %c0_18 = arith.constant 0 : index
    %c0_19 = arith.constant 0 : index
    %34 = vector.load %arg5[%c0_18, %c0_19] : memref<1x512xf32, #tpu.memory_space<vmem>>, vector<1x512xf32>
    %35 = vector.broadcast %34 : vector<1x512xf32> to vector<16x512xf32>
    %36 = arith.mulf %33, %35 : vector<16x512xf32>
    %c0_20 = arith.constant 0 : index
    %c0_21 = arith.constant 0 : index
    %37 = vector.load %arg6[%c0_20, %c0_21] : memref<1x512xf32, #tpu.memory_space<vmem>>, vector<1x512xf32>
    %38 = vector.broadcast %37 : vector<1x512xf32> to vector<16x512xf32>
    %39 = arith.addf %36, %38 : vector<16x512xf32>
    %cst_22 = arith.constant 0.000000e+00 : f32
    %40 = vector.broadcast %cst_22 : f32 to vector<16x512xf32>
    %41 = arith.subf %40, %39 : vector<16x512xf32>
    %42 = math.exp %41 : vector<16x512xf32>
    %cst_23 = arith.constant 1.000000e+00 : f32
    %43 = vector.broadcast %cst_23 : f32 to vector<16x512xf32>
    %44 = arith.addf %43, %42 : vector<16x512xf32>
    %cst_24 = arith.constant 1.000000e+00 : f32
    %45 = vector.broadcast %cst_24 : f32 to vector<16x512xf32>
    %46 = arith.divf %45, %44 : vector<16x512xf32>
    %47 = arith.mulf %39, %46 : vector<16x512xf32>
    %48 = arith.truncf %47 : vector<16x512xf32> to vector<16x512xbf16>
    %cst_25 = arith.constant dense<0.000000e+00> : vector<16x512xf32>
    %49 = tpu.matmul %8, %48, %cst_25 {dimension_numbers = #tpu.dot_dimension_numbers<[1], [0], [0], [1], [0, 0, 1, 1], [], []>} : vector<16x16xbf16>, vector<16x512xbf16>, vector<16x512xf32> -> vector<16x512xf32>
    %50 = arith.truncf %49 : vector<16x512xf32> to vector<16x512xbf16>
    %cst_26 = arith.constant dense<0.000000e+00> : vector<16x512xf32>
    %51 = tpu.matmul %15, %48, %cst_26 {dimension_numbers = #tpu.dot_dimension_numbers<[1], [0], [0], [1], [0, 0, 1, 1], [], []>} : vector<16x16xbf16>, vector<16x512xbf16>, vector<16x512xf32> -> vector<16x512xf32>
    %52 = arith.truncf %51 : vector<16x512xf32> to vector<16x512xbf16>
    %c0_27 = arith.constant 0 : index
    %c0_28 = arith.constant 0 : index
    %c0_29 = arith.constant 0 : index
    %53 = vector.load %arg7[%c0_27, %c0_28, %c0_29] : memref<3x512x512xbf16, #tpu.memory_space<vmem>>, vector<1x512x512xbf16>
    %54 = vector.shape_cast %53 : vector<1x512x512xbf16> to vector<512x512xbf16>
    %cst_30 = arith.constant dense<0.000000e+00> : vector<16x512xf32>
    %55 = tpu.matmul %50, %54, %cst_30 {dimension_numbers = #tpu.dot_dimension_numbers<[1], [0], [0], [1], [0, 0, 1, 1], [], []>} : vector<16x512xbf16>, vector<512x512xbf16>, vector<16x512xf32> -> vector<16x512xf32>
    %c1_31 = arith.constant 1 : index
    %c0_32 = arith.constant 0 : index
    %c0_33 = arith.constant 0 : index
    %56 = vector.load %arg7[%c1_31, %c0_32, %c0_33] : memref<3x512x512xbf16, #tpu.memory_space<vmem>>, vector<1x512x512xbf16>
    %57 = vector.shape_cast %56 : vector<1x512x512xbf16> to vector<512x512xbf16>
    %cst_34 = arith.constant dense<0.000000e+00> : vector<16x512xf32>
    %58 = tpu.matmul %48, %57, %cst_34 {dimension_numbers = #tpu.dot_dimension_numbers<[1], [0], [0], [1], [0, 0, 1, 1], [], []>} : vector<16x512xbf16>, vector<512x512xbf16>, vector<16x512xf32> -> vector<16x512xf32>
    %59 = arith.addf %55, %58 : vector<16x512xf32>
    %c2_35 = arith.constant 2 : index
    %c0_36 = arith.constant 0 : index
    %c0_37 = arith.constant 0 : index
    %60 = vector.load %arg7[%c2_35, %c0_36, %c0_37] : memref<3x512x512xbf16, #tpu.memory_space<vmem>>, vector<1x512x512xbf16>
    %61 = vector.shape_cast %60 : vector<1x512x512xbf16> to vector<512x512xbf16>
    %cst_38 = arith.constant dense<0.000000e+00> : vector<16x512xf32>
    %62 = tpu.matmul %52, %61, %cst_38 {dimension_numbers = #tpu.dot_dimension_numbers<[1], [0], [0], [1], [0, 0, 1, 1], [], []>} : vector<16x512xbf16>, vector<512x512xbf16>, vector<16x512xf32> -> vector<16x512xf32>
    %63 = arith.addf %59, %62 : vector<16x512xf32>
    %c0_39 = arith.constant 0 : index
    %c0_40 = arith.constant 0 : index
    %64 = vector.load %arg8[%c0_39, %c0_40] : memref<1x512xf32, #tpu.memory_space<vmem>>, vector<1x512xf32>
    %65 = vector.broadcast %64 : vector<1x512xf32> to vector<16x512xf32>
    %66 = arith.mulf %63, %65 : vector<16x512xf32>
    %c0_41 = arith.constant 0 : index
    %c0_42 = arith.constant 0 : index
    %67 = vector.load %arg9[%c0_41, %c0_42] : memref<1x512xf32, #tpu.memory_space<vmem>>, vector<1x512xf32>
    %68 = vector.broadcast %67 : vector<1x512xf32> to vector<16x512xf32>
    %69 = arith.addf %66, %68 : vector<16x512xf32>
    %cst_43 = arith.constant 0.000000e+00 : f32
    %70 = vector.broadcast %cst_43 : f32 to vector<16x512xf32>
    %71 = arith.subf %70, %69 : vector<16x512xf32>
    %72 = math.exp %71 : vector<16x512xf32>
    %cst_44 = arith.constant 1.000000e+00 : f32
    %73 = vector.broadcast %cst_44 : f32 to vector<16x512xf32>
    %74 = arith.addf %73, %72 : vector<16x512xf32>
    %cst_45 = arith.constant 1.000000e+00 : f32
    %75 = vector.broadcast %cst_45 : f32 to vector<16x512xf32>
    %76 = arith.divf %75, %74 : vector<16x512xf32>
    %77 = arith.mulf %69, %76 : vector<16x512xf32>
    %c0_46 = arith.constant 0 : index
    %c0_47 = arith.constant 0 : index
    %78 = vector.load %arg2[%c0_46, %c0_47] : memref<64x512xbf16, #tpu.memory_space<vmem>>, vector<64x512xbf16>
    %cst_48 = arith.constant dense<0.000000e+00> : vector<16x512xf32>
    %79 = tpu.matmul %18, %78, %cst_48 {dimension_numbers = #tpu.dot_dimension_numbers<[1], [0], [0], [1], [0, 0, 1, 1], [], []>} : vector<16x64xbf16>, vector<64x512xbf16>, vector<16x512xf32> -> vector<16x512xf32>
    %c0_49 = arith.constant 0 : index
    %c0_50 = arith.constant 0 : index
    %80 = vector.load %arg3[%c0_49, %c0_50] : memref<1x512xf32, #tpu.memory_space<vmem>>, vector<1x512xf32>
    %81 = vector.broadcast %80 : vector<1x512xf32> to vector<16x512xf32>
    %82 = arith.addf %79, %81 : vector<16x512xf32>
    %83 = arith.addf %77, %82 : vector<16x512xf32>
    %c0_51 = arith.constant 0 : index
    %c0_52 = arith.constant 0 : index
    %c0_53 = arith.constant 0 : index
    %84 = vector.load %arg10[%c0_51, %c0_52, %c0_53] : memref<1x16x512xf32, #tpu.memory_space<vmem>>, vector<1x16x512xf32>
    %85 = vector.shape_cast %84 : vector<1x16x512xf32> to vector<16x512xf32>
    %86 = vector.shape_cast %83 : vector<16x512xf32> to vector<1x16x512xf32>
    tpu.vector_store %arg10[%c0_51, %c0_52, %c0_53], %86 {strides = array<i32>} : memref<1x16x512xf32, #tpu.memory_space<vmem>>, vector<1x16x512xf32>,
    return
  }
  func.func @transform_0(%arg0: i32) -> (i32, i32, i32) {
    %c0_i32 = arith.constant 0 : i32
    %c0_i32_0 = arith.constant 0 : i32
    %c0_i32_1 = arith.constant 0 : i32
    return %arg0, %c0_i32, %c0_i32_0 : i32, i32, i32
  }
  func.func @transform_1(%arg0: i32) -> (i32, i32) {
    %c0_i32 = arith.constant 0 : i32
    %c0_i32_0 = arith.constant 0 : i32
    %c0_i32_1 = arith.constant 0 : i32
    return %c0_i32, %c0_i32_0 : i32, i32
  }
  func.func @transform_2(%arg0: i32) -> (i32, i32) {
    %c0_i32 = arith.constant 0 : i32
    %c0_i32_0 = arith.constant 0 : i32
    %c0_i32_1 = arith.constant 0 : i32
    return %c0_i32, %c0_i32_0 : i32, i32
  }
  func.func @transform_3(%arg0: i32) -> (i32, i32, i32) {
    %c0_i32 = arith.constant 0 : i32
    %c0_i32_0 = arith.constant 0 : i32
    %c0_i32_1 = arith.constant 0 : i32
    %c0_i32_2 = arith.constant 0 : i32
    return %c0_i32, %c0_i32_0, %c0_i32_1 : i32, i32, i32
  }
  func.func @transform_4(%arg0: i32) -> (i32, i32) {
    %c0_i32 = arith.constant 0 : i32
    %c0_i32_0 = arith.constant 0 : i32
    %c0_i32_1 = arith.constant 0 : i32
    return %c0_i32, %c0_i32_0 : i32, i32
  }
  func.func @transform_5(%arg0: i32) -> (i32, i32) {
    %c0_i32 = arith.constant 0 : i32
    %c0_i32_0 = arith.constant 0 : i32
    %c0_i32_1 = arith.constant 0 : i32
    return %c0_i32, %c0_i32_0 : i32, i32
  }
  func.func @transform_6(%arg0: i32) -> (i32, i32, i32) {
    %c0_i32 = arith.constant 0 : i32
    %c0_i32_0 = arith.constant 0 : i32
    %c0_i32_1 = arith.constant 0 : i32
    %c0_i32_2 = arith.constant 0 : i32
    return %c0_i32, %c0_i32_0, %c0_i32_1 : i32, i32, i32
  }
  func.func @transform_7(%arg0: i32) -> (i32, i32) {
    %c0_i32 = arith.constant 0 : i32
    %c0_i32_0 = arith.constant 0 : i32
    %c0_i32_1 = arith.constant 0 : i32
    return %c0_i32, %c0_i32_0 : i32, i32
  }
  func.func @transform_8(%arg0: i32) -> (i32, i32) {
    %c0_i32 = arith.constant 0 : i32
    %c0_i32_0 = arith.constant 0 : i32
    %c0_i32_1 = arith.constant 0 : i32
    return %c0_i32, %c0_i32_0 : i32, i32
  }
  func.func @transform_9(%arg0: i32) -> (i32, i32, i32) {
    %c0_i32 = arith.constant 0 : i32
    %c0_i32_0 = arith.constant 0 : i32
    %c0_i32_1 = arith.constant 0 : i32
    return %arg0, %c0_i32, %c0_i32_0 : i32, i32, i32
  }
}

</mosaic_0001>

<llo_original>
// kernel: tpu_custom_call.1
$region0: #{tpu_custom_call.1}
  #allocation0 [shape = 'u32[]', space=smem, size = 0x4, offset = 0x4, fixed_abs, tag = 'smem constant byte address 0x4 - core index']
  #allocation1 [shape = 'u32[144,128]{1,0:T(1,128)}', space=vmem, size = 0x12000, scoped, tag = 'internal scratch']
  %s0 = inlined_call_operand.hbm [shape: f32[2,16,64], index: 0, kind: input, shape index: {}]
  %s1 = inlined_call_operand.hbm [shape: bf16[64,512], index: 1, kind: input, shape index: {}]
  %s2 = inlined_call_operand.hbm [shape: f32[1,512], index: 2, kind: input, shape index: {}]
  %s3 = inlined_call_operand.hbm [shape: bf16[3,64,512], index: 3, kind: input, shape index: {}]
  %s4 = inlined_call_operand.hbm [shape: f32[1,512], index: 4, kind: input, shape index: {}]
  %s5 = inlined_call_operand.hbm [shape: f32[1,512], index: 5, kind: input, shape index: {}]
  %s6 = inlined_call_operand.hbm [shape: bf16[3,512,512], index: 6, kind: input, shape index: {}]
  %s7 = inlined_call_operand.hbm [shape: f32[1,512], index: 7, kind: input, shape index: {}]
  %s8 = inlined_call_operand.hbm [shape: f32[1,512], index: 8, kind: input, shape index: {}]
  %s9 = inlined_call_operand.hbm [shape: f32[2,16,512], index: 9, kind: output, shape index: {}]
  %s10 = sld [smem:[#allocation0]]
  $region105: #{tpu_custom_call.1} parent=0
    _
  %s12 = ssub.s32 1, %s10
  %s13 = scalar_select 0, %s12, %s10
  $region1: #{tpu_custom_call.1} parent=0
    #allocation2 [shape = 'u8[16384]{0}', space=vmem, size = 0x4000, scoped, tag = 'input window, operand 0']
    #allocation3 [shape = 's32[2]{0}', space=sflag, size = 0x8, scoped, tag = 'scoped memory for tpu_custom_call.1']
    #allocation4 [shape = 's32[2]{0}', space=sflag, size = 0x8, scoped, tag = 'scoped memory for tpu_custom_call.1']
    #allocation5 [shape = 'u8[65536]{0}', space=vmem, size = 0x10000, scoped, tag = 'input window, operand 1, single buffered']
    #allocation6 [shape = 's32[1]{0}', space=sflag, size = 0x4, scoped, tag = 'scoped memory for tpu_custom_call.1']
    #allocation7 [shape = 'u8[2048]{0}', space=vmem, size = 0x800, scoped, tag = 'input window, operand 2, single buffered']
    #allocation8 [shape = 'u8[196608]{0}', space=vmem, size = 0x30000, scoped, tag = 'input window, operand 3, single buffered']
    #allocation9 [shape = 's32[1]{0}', space=sflag, size = 0x4, scoped, tag = 'scoped memory for tpu_custom_call.1']
    #allocation10 [shape = 'u8[2048]{0}', space=vmem, size = 0x800, scoped, tag = 'input window, operand 4, single buffered']
    #allocation11 [shape = 'u8[2048]{0}', space=vmem, size = 0x800, scoped, tag = 'input window, operand 5, single buffered']
    #allocation12 [shape = 's32[1]{0}', space=sflag, size = 0x4, scoped, tag = 'scoped memory for tpu_custom_call.1']
    #allocation13 [shape = 'u8[1572864]{0}', space=vmem, size = 0x180000, scoped, tag = 'input window, operand 6, single buffered']
    #allocation14 [shape = 'u8[2048]{0}', space=vmem, size = 0x800, scoped, tag = 'input window, operand 7, single buffered']
    #allocation15 [shape = 's32[1]{0}', space=sflag, size = 0x4, scoped, tag = 'scoped memory for tpu_custom_call.1']
    #allocation16 [shape = 'u8[2048]{0}', space=vmem, size = 0x800, scoped, tag = 'input window, operand 8, single buffered']
    #allocation17 [shape = 'u8[65536]{0}', space=vmem, size = 0x10000, scoped, tag = 'output window, operand 0']
    %14 = vsyncpa [#allocation3], 0
    %s15 = scalar_lea.sflag [#allocation3], 1
    %16 = vsyncpa %s15, 0
    %17 = vsyncpa [#allocation6], 0
    %18 = vsyncpa [#allocation9], 0
    %19 = vsyncpa [#allocation12], 0
    %20 = vsyncpa [#allocation15], 0
    %21 = vsyncpa [#allocation4], 0
    %s22 = scalar_lea.sflag [#allocation4], 1
    %23 = vsyncpa %s22, 0
    loop: start=0, step=1, limit=4
    $region2: #{tpu_custom_call.1} parent=1 // loop_pre_header
      _
    $region3: #{tpu_custom_call.1} parent=1 // loop_header
      %s25 = sphi 0, %s29
      %p26 = scmp.ge.s32.totalorder %s25, 4
      %s35 = sphi 0, %s37
      %s38 = sphi 0, %s35
      %s39 = sphi 0, %s38
      %s55 = sphi 0, %s39
      %s59 = sphi 0, %s59
      %s61 = sphi 0, %s59
      %s62 = sphi 0, %s61
      %s76 = sphi 0, %s62
      %s80 = sphi 0, %s80
      %s82 = sphi 0, %s80
      %s83 = sphi 0, %s82
      %s97 = sphi 0, %s83
      %s101 = sphi 0, %s101
      %s103 = sphi 0, %s101
      %s104 = sphi 0, %s103
      %s118 = sphi 0, %s104
      %s122 = sphi 0, %s122
      %s124 = sphi 0, %s122
      %s125 = sphi 0, %s124
      %s139 = sphi 0, %s125
      %s143 = sphi 0, %s143
      %s145 = sphi 0, %s143
      %s146 = sphi 0, %s145
      %s160 = sphi 0, %s146
      %s164 = sphi 0, %s164
      %s166 = sphi 0, %s164
      %s167 = sphi 0, %s166
      %s181 = sphi 0, %s167
      %s185 = sphi 0, %s185
      %s187 = sphi 0, %s185
      %s188 = sphi 0, %s187
      %s202 = sphi 0, %s188
      %s206 = sphi 0, %s206
      %s208 = sphi 0, %s206
      %s209 = sphi 0, %s208
      %s223 = sphi 0, %s209
      %s229 = sphi 0, %s231
      %s232 = sphi 0, %s229
      %s233 = sphi 0, %s232
      %s249 = sphi 0, %s233
    $region4: #{tpu_custom_call.1} parent=1 // loop_header_branch
      %28 = sbr.rel (%p26) target = $region8
    $region5: #{tpu_custom_call.1} parent=1 // loop_body
      %s30 = ssub.s32 %s25, 1
      %s31 = ssub.s32 %s25, 2
      %s32 = sadd.s32 %s25, 1
      %s33 = ssub.s32 %s25, %s32
      %p34 = scmp.eq.s32.totalorder %s33, 0
      %s36 = sadd.s32 %s35, 1
      %s37 = scalar_select %p34, %s35, %s36
      %p40 = pneg %p34
      %p41 = scmp.eq.s32.totalorder %s25, 1
      %p42 = por %p40, %p41
      %p43 = scmp.ne.s32.totalorder %s35, %s38
      %p44 = scmp.eq.s32.totalorder %s25, 0
      %p45 = por %p43, %p44
      %p46 = scmp.ne.s32.totalorder %s35, %s38
      %p47 = scmp.eq.s32.totalorder %s30, 1
      %p48 = por %p46, %p47
      %p49 = scmp.ne.s32.totalorder %s38, %s39
      %p50 = scmp.eq.s32.totalorder %s30, 0
      %p51 = por %p49, %p50
      %p52 = scmp.ne.s32.totalorder %s38, %s39
      %p53 = scmp.eq.s32.totalorder %s31, 1
      %p54 = por %p52, %p53
      %p56 = scmp.ne.s32.totalorder %s39, %s55
      %p57 = scmp.eq.s32.totalorder %s31, 0
      %p58 = por %p56, %p57
      %s60 = sadd.s32 %s59, 1
      %p63 = scmp.eq.s32.totalorder %s25, 1
      %p64 = scmp.ne.s32.totalorder %s59, %s61
      %p65 = scmp.eq.s32.totalorder %s25, 0
      %p66 = por %p64, %p65
      %p67 = scmp.ne.s32.totalorder %s59, %s61
      %p68 = scmp.eq.s32.totalorder %s30, 1
      %p69 = por %p67, %p68
      %p70 = scmp.ne.s32.totalorder %s61, %s62
      %p71 = scmp.eq.s32.totalorder %s30, 0
      %p72 = por %p70, %p71
      %p73 = scmp.ne.s32.totalorder %s61, %s62
      %p74 = scmp.eq.s32.totalorder %s31, 1
      %p75 = por %p73, %p74
      %p77 = scmp.ne.s32.totalorder %s62, %s76
      %p78 = scmp.eq.s32.totalorder %s31, 0
      %p79 = por %p77, %p78
      %s81 = sadd.s32 %s80, 1
      %p84 = scmp.eq.s32.totalorder %s25, 1
      %p85 = scmp.ne.s32.totalorder %s80, %s82
      %p86 = scmp.eq.s32.totalorder %s25, 0
      %p87 = por %p85, %p86
      %p88 = scmp.ne.s32.totalorder %s80, %s82
      %p89 = scmp.eq.s32.totalorder %s30, 1
      %p90 = por %p88, %p89
      %p91 = scmp.ne.s32.totalorder %s82, %s83
      %p92 = scmp.eq.s32.totalorder %s30, 0
      %p93 = por %p91, %p92
      %p94 = scmp.ne.s32.totalorder %s82, %s83
      %p95 = scmp.eq.s32.totalorder %s31, 1
      %p96 = por %p94, %p95
      %p98 = scmp.ne.s32.totalorder %s83, %s97
      %p99 = scmp.eq.s32.totalorder %s31, 0
      %p100 = por %p98, %p99
      %s102 = sadd.s32 %s101, 1
      %p105 = scmp.eq.s32.totalorder %s25, 1
      %p106 = scmp.ne.s32.totalorder %s101, %s103
      %p107 = scmp.eq.s32.totalorder %s25, 0
      %p108 = por %p106, %p107
      %p109 = scmp.ne.s32.totalorder %s101, %s103
      %p110 = scmp.eq.s32.totalorder %s30, 1
      %p111 = por %p109, %p110
      %p112 = scmp.ne.s32.totalorder %s103, %s104
      %p113 = scmp.eq.s32.totalorder %s30, 0
      %p114 = por %p112, %p113
      %p115 = scmp.ne.s32.totalorder %s103, %s104
      %p116 = scmp.eq.s32.totalorder %s31, 1
      %p117 = por %p115, %p116
      %p119 = scmp.ne.s32.totalorder %s104, %s118
      %p120 = scmp.eq.s32.totalorder %s31, 0
      %p121 = por %p119, %p120
      %s123 = sadd.s32 %s122, 1
      %p126 = scmp.eq.s32.totalorder %s25, 1
      %p127 = scmp.ne.s32.totalorder %s122, %s124
      %p128 = scmp.eq.s32.totalorder %s25, 0
      %p129 = por %p127, %p128
      %p130 = scmp.ne.s32.totalorder %s122, %s124
      %p131 = scmp.eq.s32.totalorder %s30, 1
      %p132 = por %p130, %p131
      %p133 = scmp.ne.s32.totalorder %s124, %s125
      %p134 = scmp.eq.s32.totalorder %s30, 0
      %p135 = por %p133, %p134
      %p136 = scmp.ne.s32.totalorder %s124, %s125
      %p137 = scmp.eq.s32.totalorder %s31, 1
      %p138 = por %p136, %p137
      %p140 = scmp.ne.s32.totalorder %s125, %s139
      %p141 = scmp.eq.s32.totalorder %s31, 0
      %p142 = por %p140, %p141
      %s144 = sadd.s32 %s143, 1
      %p147 = scmp.eq.s32.totalorder %s25, 1
      %p148 = scmp.ne.s32.totalorder %s143, %s145
      %p149 = scmp.eq.s32.totalorder %s25, 0
      %p150 = por %p148, %p149
      %p151 = scmp.ne.s32.totalorder %s143, %s145
      %p152 = scmp.eq.s32.totalorder %s30, 1
      %p153 = por %p151, %p152
      %p154 = scmp.ne.s32.totalorder %s145, %s146
      %p155 = scmp.eq.s32.totalorder %s30, 0
      %p156 = por %p154, %p155
      %p157 = scmp.ne.s32.totalorder %s145, %s146
      %p158 = scmp.eq.s32.totalorder %s31, 1
      %p159 = por %p157, %p158
      %p161 = scmp.ne.s32.totalorder %s146, %s160
      %p162 = scmp.eq.s32.totalorder %s31, 0
      %p163 = por %p161, %p162
      %s165 = sadd.s32 %s164, 1
      %p168 = scmp.eq.s32.totalorder %s25, 1
      %p169 = scmp.ne.s32.totalorder %s164, %s166
      %p170 = scmp.eq.s32.totalorder %s25, 0
      %p171 = por %p169, %p170
      %p172 = scmp.ne.s32.totalorder %s164, %s166
      %p173 = scmp.eq.s32.totalorder %s30, 1
      %p174 = por %p172, %p173
      %p175 = scmp.ne.s32.totalorder %s166, %s167
      %p176 = scmp.eq.s32.totalorder %s30, 0
      %p177 = por %p175, %p176
      %p178 = scmp.ne.s32.totalorder %s166, %s167
      %p179 = scmp.eq.s32.totalorder %s31, 1
      %p180 = por %p178, %p179
      %p182 = scmp.ne.s32.totalorder %s167, %s181
      %p183 = scmp.eq.s32.totalorder %s31, 0
      %p184 = por %p182, %p183
      %s186 = sadd.s32 %s185, 1
      %p189 = scmp.eq.s32.totalorder %s25, 1
      %p190 = scmp.ne.s32.totalorder %s185, %s187
      %p191 = scmp.eq.s32.totalorder %s25, 0
      %p192 = por %p190, %p191
      %p193 = scmp.ne.s32.totalorder %s185, %s187
      %p194 = scmp.eq.s32.totalorder %s30, 1
      %p195 = por %p193, %p194
      %p196 = scmp.ne.s32.totalorder %s187, %s188
      %p197 = scmp.eq.s32.totalorder %s30, 0
      %p198 = por %p196, %p197
      %p199 = scmp.ne.s32.totalorder %s187, %s188
      %p200 = scmp.eq.s32.totalorder %s31, 1
      %p201 = por %p199, %p200
      %p203 = scmp.ne.s32.totalorder %s188, %s202
      %p204 = scmp.eq.s32.totalorder %s31, 0
      %p205 = por %p203, %p204
      %s207 = sadd.s32 %s206, 1
      %p210 = scmp.eq.s32.totalorder %s25, 1
      %p211 = scmp.ne.s32.totalorder %s206, %s208
      %p212 = scmp.eq.s32.totalorder %s25, 0
      %p213 = por %p211, %p212
      %p214 = scmp.ne.s32.totalorder %s206, %s208
      %p215 = scmp.eq.s32.totalorder %s30, 1
      %p216 = por %p214, %p215
      %p217 = scmp.ne.s32.totalorder %s208, %s209
      %p218 = scmp.eq.s32.totalorder %s30, 0
      %p219 = por %p217, %p218
      %p220 = scmp.ne.s32.totalorder %s208, %s209
      %p221 = scmp.eq.s32.totalorder %s31, 1
      %p222 = por %p220, %p221
      %p224 = scmp.ne.s32.totalorder %s209, %s223
      %p225 = scmp.eq.s32.totalorder %s31, 0
      %p226 = por %p224, %p225
      %s227 = ssub.s32 %s25, %s32
      %p228 = scmp.eq.s32.totalorder %s227, 0
      %s230 = sadd.s32 %s229, 1
      %s231 = scalar_select %p228, %s229, %s230
      %p234 = pneg %p228
      %p235 = scmp.eq.s32.totalorder %s25, 1
      %p236 = por %p234, %p235
      %p237 = scmp.ne.s32.totalorder %s229, %s232
      %p238 = scmp.eq.s32.totalorder %s25, 0
      %p239 = por %p237, %p238
      %p240 = scmp.ne.s32.totalorder %s229, %s232
      %p241 = scmp.eq.s32.totalorder %s30, 1
      %p242 = por %p240, %p241
      %p243 = scmp.ne.s32.totalorder %s232, %s233
      %p244 = scmp.eq.s32.totalorder %s30, 0
      %p245 = por %p243, %p244
      %p246 = scmp.ne.s32.totalorder %s232, %s233
      %p247 = scmp.eq.s32.totalorder %s31, 1
      %p248 = por %p246, %p247
      %p250 = scmp.ne.s32.totalorder %s233, %s249
      %p251 = scmp.eq.s32.totalorder %s31, 0
      %p252 = por %p250, %p251
      %p253 = scmp.le.s32.totalorder 1, %s25
      %p254 = scmp.lt.s32.totalorder %s25, 3
      %p255 = pnand %p253, %p254
      %p256 = pneg %p255
      // Predicated region
      $region9: #{tpu_custom_call.1} parent=5 // pred_check
        _
      $region10: #{tpu_custom_call.1} parent=5 // pred_check_branch
        %258 = sbr.rel (%p255) target = $region12
      $region11: #{tpu_custom_call.1} parent=5 // pred_region
        %s259 = ssub.s32 %s25, 1
        // Predicated region
        $region13: #{tpu_custom_call.1} parent=11 // pred_check
          %p260 = pneg %p72
        $region14: #{tpu_custom_call.1} parent=11 // pred_check_branch
          %262 = sbr.rel (%p260) target = $region16
        $region15: #{tpu_custom_call.1} parent=11 // pred_region
          %s264 = ssub.s32 2048, 2048
          %265 = vsyncadd [#allocation6], %s264
          %s266 = sshll.u32 [#allocation5], 4
          %s267 = int_to_ptr.vmem [resolvable:$true] %s266
          %272 = dma.hbm_to_vmem [thread:$0]  %s1, 2048, %s267, [#allocation6], 256, 256, 16
        $region16: #{tpu_custom_call.1} parent=11 // pred_fallthru
          _
        // Predicated region
        $region17: #{tpu_custom_call.1} parent=11 // pred_check
          %p273 = pneg %p93
        $region18: #{tpu_custom_call.1} parent=11 // pred_check_branch
          %275 = sbr.rel (%p273) target = $region20
        $region19: #{tpu_custom_call.1} parent=11 // pred_region
          %s277 = ssub.s32 64, 64
          %278 = vsyncadd [#allocation6], %s277
          %s280 = sshll.u32 [#allocation7], 4
          %s281 = int_to_ptr.vmem [resolvable:$true] %s280
          %283 = dma.hbm_to_vmem [thread:$0]  %s2, 64, %s281, [#allocation6]
        $region20: #{tpu_custom_call.1} parent=11 // pred_fallthru
          _
        // Predicated region
        $region21: #{tpu_custom_call.1} parent=11 // pred_check
          %p284 = pneg %p114
        $region22: #{tpu_custom_call.1} parent=11 // pred_check_branch
          %286 = sbr.rel (%p284) target = $region24
        $region23: #{tpu_custom_call.1} parent=11 // pred_region
          %s288 = ssub.s32 6144, 6144
          %289 = vsyncadd [#allocation9], %s288
          %s290 = sshll.u32 [#allocation8], 4
          %s291 = int_to_ptr.vmem [resolvable:$true] %s290
          %296 = dma.hbm_to_vmem [thread:$0]  %s3, 6144, %s291, [#allocation9], 256, 256, 16
        $region24: #{tpu_custom_call.1} parent=11 // pred_fallthru
          _
        // Predicated region
        $region25: #{tpu_custom_call.1} parent=11 // pred_check
          %p297 = pneg %p135
        $region26: #{tpu_custom_call.1} parent=11 // pred_check_branch
          %299 = sbr.rel (%p297) target = $region28
        $region27: #{tpu_custom_call.1} parent=11 // pred_region
          %s301 = ssub.s32 64, 64
          %302 = vsyncadd [#allocation9], %s301
          %s304 = sshll.u32 [#allocation10], 4
          %s305 = int_to_ptr.vmem [resolvable:$true] %s304
          %307 = dma.hbm_to_vmem [thread:$0]  %s4, 64, %s305, [#allocation9]
        $region28: #{tpu_custom_call.1} parent=11 // pred_fallthru
          _
        // Predicated region
        $region29: #{tpu_custom_call.1} parent=11 // pred_check
          %p308 = pneg %p156
        $region30: #{tpu_custom_call.1} parent=11 // pred_check_branch
          %310 = sbr.rel (%p308) target = $region32
        $region31: #{tpu_custom_call.1} parent=11 // pred_region
          %s312 = ssub.s32 64, 64
          %313 = vsyncadd [#allocation12], %s312
          %s315 = sshll.u32 [#allocation11], 4
          %s316 = int_to_ptr.vmem [resolvable:$true] %s315
          %318 = dma.hbm_to_vmem [thread:$0]  %s5, 64, %s316, [#allocation12]
        $region32: #{tpu_custom_call.1} parent=11 // pred_fallthru
          _
        // Predicated region
        $region33: #{tpu_custom_call.1} parent=11 // pred_check
          %p319 = pneg %p177
        $region34: #{tpu_custom_call.1} parent=11 // pred_check_branch
          %321 = sbr.rel (%p319) target = $region36
        $region35: #{tpu_custom_call.1} parent=11 // pred_region
          %s323 = ssub.s32 49152, 49152
          %324 = vsyncadd [#allocation12], %s323
          %s325 = sshll.u32 [#allocation13], 4
          %s326 = int_to_ptr.vmem [resolvable:$true] %s325
          %331 = dma.hbm_to_vmem [thread:$0]  %s6, 49152, %s326, [#allocation12], 256, 256, 16
        $region36: #{tpu_custom_call.1} parent=11 // pred_fallthru
          _
        // Predicated region
        $region37: #{tpu_custom_call.1} parent=11 // pred_check
          %p332 = pneg %p198
        $region38: #{tpu_custom_call.1} parent=11 // pred_check_branch
          %334 = sbr.rel (%p332) target = $region40
        $region39: #{tpu_custom_call.1} parent=11 // pred_region
          %s336 = ssub.s32 64, 64
          %337 = vsyncadd [#allocation15], %s336
          %s339 = sshll.u32 [#allocation14], 4
          %s340 = int_to_ptr.vmem [resolvable:$true] %s339
          %342 = dma.hbm_to_vmem [thread:$0]  %s7, 64, %s340, [#allocation15]
        $region40: #{tpu_custom_call.1} parent=11 // pred_fallthru
          _
        // Predicated region
        $region41: #{tpu_custom_call.1} parent=11 // pred_check
          %p343 = pneg %p219
        $region42: #{tpu_custom_call.1} parent=11 // pred_check_branch
          %345 = sbr.rel (%p343) target = $region44
        $region43: #{tpu_custom_call.1} parent=11 // pred_region
          %s347 = ssub.s32 64, 64
          %348 = vsyncadd [#allocation15], %s347
          %s350 = sshll.u32 [#allocation16], 4
          %s351 = int_to_ptr.vmem [resolvable:$true] %s350
          %353 = dma.hbm_to_vmem [thread:$0]  %s8, 64, %s351, [#allocation15]
        $region44: #{tpu_custom_call.1} parent=11 // pred_fallthru
          _
      $region12: #{tpu_custom_call.1} parent=5 // pred_fallthru
        _
      %p354 = scmp.lt.s32.totalorder %s25, 2
      // Predicated region
      $region45: #{tpu_custom_call.1} parent=5 // pred_check
        %p355 = pneg %p354
      $region46: #{tpu_custom_call.1} parent=5 // pred_check_branch
        %357 = sbr.rel (%p355) target = $region48
      $region47: #{tpu_custom_call.1} parent=5 // pred_region
        // Predicated region
        $region49: #{tpu_custom_call.1} parent=47 // pred_check
          %p358 = pneg %p45
        $region50: #{tpu_custom_call.1} parent=47 // pred_check_branch
          %360 = sbr.rel (%p358) target = $region52
        $region51: #{tpu_custom_call.1} parent=47 // pred_region
          %s361 = sand.u32 %s35, 1
          %s362 = scalar_lea.sflag [#allocation3], %s361
          %s363 = sand.u32 %s35, 1
          %s364 = smul.addr %s363, 16
          %s365 = scalar_lea.vmem [#allocation2], %s364
          %s367 = ssub.s32 256, 256
          %368 = vsyncadd %s362, %s367
          %s369 = smul.addr %s25, 2
          %s370 = smul.addr %s369, 128
          %s371 = scalar_lea.hbm %s0, %s370
          %s372 = sshll.u32 %s365, 4
          %s373 = int_to_ptr.vmem [resolvable:$true] %s372
          %378 = dma.hbm_to_vmem [thread:$0]  %s371, 256, %s373, %s362, 128, 128, 8
        $region52: #{tpu_custom_call.1} parent=47 // pred_fallthru
          _
      $region48: #{tpu_custom_call.1} parent=5 // pred_fallthru
        _
      %p379 = scmp.le.s32.totalorder 1, %s25
      %p380 = scmp.lt.s32.totalorder %s25, 3
      %p381 = pnand %p379, %p380
      %p382 = pneg %p381
      // Predicated region
      $region53: #{tpu_custom_call.1} parent=5 // pred_check
        _
      $region54: #{tpu_custom_call.1} parent=5 // pred_check_branch
        %384 = sbr.rel (%p381) target = $region56
      $region55: #{tpu_custom_call.1} parent=5 // pred_region
        %s385 = ssub.s32 %s25, 1
        %s386 = sand.u32 %s38, 1
        %s387 = scalar_lea.sflag [#allocation3], %s386
        %s388 = sand.u32 %s38, 1
        %s389 = smul.addr %s388, 16
        %s390 = scalar_lea.vmem [#allocation2], %s389
        // Predicated region
        $region57: #{tpu_custom_call.1} parent=55 // pred_check
          %p391 = pneg %p51
        $region58: #{tpu_custom_call.1} parent=55 // pred_check_branch
          %393 = sbr.rel (%p391) target = $region60
        $region59: #{tpu_custom_call.1} parent=55 // pred_region
          %394 = dma.done %s387, 256
        $region60: #{tpu_custom_call.1} parent=55 // pred_fallthru
          _
        // Predicated region
        $region61: #{tpu_custom_call.1} parent=55 // pred_check
          %p395 = pneg %p72
        $region62: #{tpu_custom_call.1} parent=55 // pred_check_branch
          %397 = sbr.rel (%p395) target = $region64
        $region63: #{tpu_custom_call.1} parent=55 // pred_region
          %398 = dma.done [#allocation6], 2048
        $region64: #{tpu_custom_call.1} parent=55 // pred_fallthru
          _
        // Predicated region
        $region65: #{tpu_custom_call.1} parent=55 // pred_check
          %p399 = pneg %p93
        $region66: #{tpu_custom_call.1} parent=55 // pred_check_branch
          %401 = sbr.rel (%p399) target = $region68
        $region67: #{tpu_custom_call.1} parent=55 // pred_region
          %402 = dma.done [#allocation6], 64
        $region68: #{tpu_custom_call.1} parent=55 // pred_fallthru
          _
        // Predicated region
        $region69: #{tpu_custom_call.1} parent=55 // pred_check
          %p403 = pneg %p114
        $region70: #{tpu_custom_call.1} parent=55 // pred_check_branch
          %405 = sbr.rel (%p403) target = $region72
        $region71: #{tpu_custom_call.1} parent=55 // pred_region
          %406 = dma.done [#allocation9], 6144
        $region72: #{tpu_custom_call.1} parent=55 // pred_fallthru
          _
        // Predicated region
        $region73: #{tpu_custom_call.1} parent=55 // pred_check
          %p407 = pneg %p135
        $region74: #{tpu_custom_call.1} parent=55 // pred_check_branch
          %409 = sbr.rel (%p407) target = $region76
        $region75: #{tpu_custom_call.1} parent=55 // pred_region
          %410 = dma.done [#allocation9], 64
        $region76: #{tpu_custom_call.1} parent=55 // pred_fallthru
          _
        // Predicated region
        $region77: #{tpu_custom_call.1} parent=55 // pred_check
          %p411 = pneg %p156
        $region78: #{tpu_custom_call.1} parent=55 // pred_check_branch
          %413 = sbr.rel (%p411) target = $region80
        $region79: #{tpu_custom_call.1} parent=55 // pred_region
          %414 = dma.done [#allocation12], 64
        $region80: #{tpu_custom_call.1} parent=55 // pred_fallthru
          _
        // Predicated region
        $region81: #{tpu_custom_call.1} parent=55 // pred_check
          %p415 = pneg %p177
        $region82: #{tpu_custom_call.1} parent=55 // pred_check_branch
          %417 = sbr.rel (%p415) target = $region84
        $region83: #{tpu_custom_call.1} parent=55 // pred_region
          %418 = dma.done [#allocation12], 49152
        $region84: #{tpu_custom_call.1} parent=55 // pred_fallthru
          _
        // Predicated region
        $region85: #{tpu_custom_call.1} parent=55 // pred_check
          %p419 = pneg %p198
        $region86: #{tpu_custom_call.1} parent=55 // pred_check_branch
          %421 = sbr.rel (%p419) target = $region88
        $region87: #{tpu_custom_call.1} parent=55 // pred_region
          %422 = dma.done [#allocation15], 64
        $region88: #{tpu_custom_call.1} parent=55 // pred_fallthru
          _
        // Predicated region
        $region89: #{tpu_custom_call.1} parent=55 // pred_check
          %p423 = pneg %p219
        $region90: #{tpu_custom_call.1} parent=55 // pred_check_branch
          %425 = sbr.rel (%p423) target = $region92
        $region91: #{tpu_custom_call.1} parent=55 // pred_region
          %426 = dma.done [#allocation15], 64
        $region92: #{tpu_custom_call.1} parent=55 // pred_fallthru
          _
        %s427 = sand.u32 %s38, 1
        %s428 = scalar_lea.sflag [#allocation3], %s427
        %s429 = sand.u32 %s38, 1
        %s430 = smul.addr %s429, 16
        %s431 = scalar_lea.vmem [#allocation2], %s430
        %p432 = pneg %p51
        %p433 = pneg %p48
        %p434 = pneg %p72
        %p435 = pneg %p69
        %p436 = pneg %p93
        %p437 = pneg %p90
        %p438 = pneg %p114
        %p439 = pneg %p111
        %p440 = pneg %p135
        %p441 = pneg %p132
        %p442 = pneg %p156
        %p443 = pneg %p153
        %p444 = pneg %p177
        %p445 = pneg %p174
        %p446 = pneg %p198
        %p447 = pneg %p195
        %p448 = pneg %p219
        %p449 = pneg %p216
        %p450 = pneg %p245
        %p451 = pneg %p242
        %s452 = sand.u32 %s232, 1
        %s453 = scalar_lea.sflag [#allocation4], %s452
        %s454 = sand.u32 %s232, 1
        %s455 = smul.addr %s454, 64
        %s456 = scalar_lea.vmem [#allocation17], %s455
        %v458 = vlaneseq
        %v459 = vshrl.u32 %v458, 7
        %v460 = vadd.s32 %v459, 8
        %v461 = vlaneseq
        %v462 = vand.u32 %v461, 127
        %v463 = vsub.s32 %v459, 1
        %v464 = vsub.s32 %v460, 1
        %vm465 = vcmp.eq.s32.totalorder %v462, %v463
        %vm466 = vcmp.eq.s32.totalorder %v462, %v464
        %v467 = vsel %vm465, 1.0, 0.0
        %v468 = vsel %vm466, 1.0, 0.0
        %v469 = vpack.c.bf16 %v468, %v467
        %v470 = vadd.s32 %v459, 1
        %v471 = vadd.s32 %v460, 1
        %vm472 = vcmp.eq.s32.totalorder %v462, %v470
        %vm473 = vcmp.eq.s32.totalorder %v462, %v471
        %v474 = vsel %vm472, 1.0, 0.0
        %v475 = vsel %vm473, 1.0, 0.0
        %v476 = vpack.c.bf16 %v475, %v474
        %v477 = vld [vmem:[%s390] sm:$0xff]
        %v478 = vld [vmem:[%s390 + $0x8] sm:$0xff]
        %v479 = vpack.c.bf16 %v478, %v477
        %vm480 = vcmask 130048
        %v482 = vsel %vm480, %v469, 0
        %484 = vmatprep.subr.bf16.mxu0 0
        %485 = vmatpush1.bf16.msra.mxu0 %v479
        %486 = vmatprep.subr.bf16.mxu0 0
        %487 = vmatpush1.bf16.msra.mxu0 0
        %488 = vmatprep.subr.bf16.mxu0 0
        %489 = vmatpush1.bf16.msra.mxu0 0
        %490 = vmatprep.subr.bf16.mxu0 0
        %491 = vmatpush1.bf16.msra.mxu0 0
        %492 = vmatprep.subr.bf16.mxu0 0
        %493 = vmatpush1.bf16.msra.mxu0 0
        %494 = vmatprep.subr.bf16.mxu0 0
        %495 = vmatpush1.bf16.msra.mxu0 0
        %496 = vmatprep.subr.bf16.mxu0 0
        %497 = vmatpush1.bf16.msra.mxu0 0
        %498 = vmatprep.subr.bf16.mxu0 0
        %499 = vmatpush1.bf16.msra.mxu0 0
        %500 = vmatprep.subr.bf16.mxu0 0
        %501 = vmatpush1.bf16.msra.mxu0 0
        %502 = vmatprep.subr.bf16.mxu0 0
        %503 = vmatpush1.bf16.msra.mxu0 0
        %504 = vmatprep.subr.bf16.mxu0 0
        %505 = vmatpush1.bf16.msra.mxu0 0
        %506 = vmatprep.subr.bf16.mxu0 0
        %507 = vmatpush1.bf16.msra.mxu0 0
        %508 = vmatprep.subr.bf16.mxu0 0
        %509 = vmatpush1.bf16.msra.mxu0 0
        %510 = vmatprep.subr.bf16.mxu0 0
        %511 = vmatpush1.bf16.msra.mxu0 0
        %512 = vmatprep.subr.bf16.mxu0 0
        %513 = vmatpush1.bf16.msra.mxu0 0
        %514 = vmatprep.subr.bf16.mxu0 0
        %515 = vmatpush1.bf16.msra.mxu0 0
        %516 = vmatprep.mubr.bf16.mxu0 0
        %517 = vmatmul.mubr.bf16.gmra.mrb[0].mxu0 %v482
        %v518 = vpop.f32.mrb[0].mxu0
        %v519 = vadd.f32 0.0, %v518
        %v520 = vpop.f32.mrb[0].mxu0
        %v521 = vpop.f32.mrb[0].mxu0
        %v522 = vadd.f32 0.0, %v521
        %v523 = vpop.f32.mrb[0].mxu0
        %524 = vdwg.mxu0
        %v525 = vpack.c.bf16 %v522, %v519
        %v527 = vsel %vm480, %v476, 0
        %529 = vmatprep.subr.bf16.mxu0 0
        %530 = vmatpush1.bf16.msra.mxu0 %v479
        %531 = vmatprep.subr.bf16.mxu0 0
        %532 = vmatpush1.bf16.msra.mxu0 0
        %533 = vmatprep.subr.bf16.mxu0 0
        %534 = vmatpush1.bf16.msra.mxu0 0
        %535 = vmatprep.subr.bf16.mxu0 0
        %536 = vmatpush1.bf16.msra.mxu0 0
        %537 = vmatprep.subr.bf16.mxu0 0
        %538 = vmatpush1.bf16.msra.mxu0 0
        %539 = vmatprep.subr.bf16.mxu0 0
        %540 = vmatpush1.bf16.msra.mxu0 0
        %541 = vmatprep.subr.bf16.mxu0 0
        %542 = vmatpush1.bf16.msra.mxu0 0
        %543 = vmatprep.subr.bf16.mxu0 0
        %544 = vmatpush1.bf16.msra.mxu0 0
        %545 = vmatprep.subr.bf16.mxu0 0
        %546 = vmatpush1.bf16.msra.mxu0 0
        %547 = vmatprep.subr.bf16.mxu0 0
        %548 = vmatpush1.bf16.msra.mxu0 0
        %549 = vmatprep.subr.bf16.mxu0 0
        %550 = vmatpush1.bf16.msra.mxu0 0
        %551 = vmatprep.subr.bf16.mxu0 0
        %552 = vmatpush1.bf16.msra.mxu0 0
        %553 = vmatprep.subr.bf16.mxu0 0
        %554 = vmatpush1.bf16.msra.mxu0 0
        %555 = vmatprep.subr.bf16.mxu0 0
        %556 = vmatpush1.bf16.msra.mxu0 0
        %557 = vmatprep.subr.bf16.mxu0 0
        %558 = vmatpush1.bf16.msra.mxu0 0
        %559 = vmatprep.subr.bf16.mxu0 0
        %560 = vmatpush1.bf16.msra.mxu0 0
        %561 = vmatprep.mubr.bf16.mxu0 0
        %562 = vmatmul.mubr.bf16.gmra.mrb[0].mxu0 %v527
        %v563 = vpop.f32.mrb[0].mxu0
        %v564 = vadd.f32 0.0, %v563
        %v565 = vpop.f32.mrb[0].mxu0
        %v566 = vpop.f32.mrb[0].mxu0
        %v567 = vadd.f32 0.0, %v566
        %v568 = vpop.f32.mrb[0].mxu0
        %569 = vdwg.mxu0
        %v570 = vpack.c.bf16 %v567, %v564
        %v571 = vld [vmem:[#allocation8] sm:$0xff]
        %v572 = vld [vmem:[#allocation8 + $0x8] sm:$0xff]
        %v573 = vld [vmem:[#allocation8 + $0x10] sm:$0xff]
        %v574 = vld [vmem:[#allocation8 + $0x18] sm:$0xff]
        %v575 = vld [vmem:[#allocation8 + $0x20] sm:$0xff]
        %v576 = vld [vmem:[#allocation8 + $0x28] sm:$0xff]
        %v577 = vld [vmem:[#allocation8 + $0x30] sm:$0xff]
        %v578 = vld [vmem:[#allocation8 + $0x38] sm:$0xff]
        %v579 = vld [vmem:[#allocation8 + $0x40] sm:$0xff]
        %v580 = vld [vmem:[#allocation8 + $0x48] sm:$0xff]
        %v581 = vld [vmem:[#allocation8 + $0x50] sm:$0xff]
        %v582 = vld [vmem:[#allocation8 + $0x58] sm:$0xff]
        %v583 = vld [vmem:[#allocation8 + $0x60] sm:$0xff]
        %v584 = vld [vmem:[#allocation8 + $0x68] sm:$0xff]
        %v585 = vld [vmem:[#allocation8 + $0x70] sm:$0xff]
        %v586 = vld [vmem:[#allocation8 + $0x78] sm:$0xff]
        %s587 = scalar_lea.vmem [#allocation8], 128
        %v588 = vld [vmem:[%s587] sm:$0xff]
        %v589 = vld [vmem:[%s587 + $0x8] sm:$0xff]
        %v590 = vld [vmem:[%s587 + $0x10] sm:$0xff]
        %v591 = vld [vmem:[%s587 + $0x18] sm:$0xff]
        %v592 = vld [vmem:[%s587 + $0x20] sm:$0xff]
        %v593 = vld [vmem:[%s587 + $0x28] sm:$0xff]
        %v594 = vld [vmem:[%s587 + $0x30] sm:$0xff]
        %v595 = vld [vmem:[%s587 + $0x38] sm:$0xff]
        %v596 = vld [vmem:[%s587 + $0x40] sm:$0xff]
        %v597 = vld [vmem:[%s587 + $0x48] sm:$0xff]
        %v598 = vld [vmem:[%s587 + $0x50] sm:$0xff]
        %v599 = vld [vmem:[%s587 + $0x58] sm:$0xff]
        %v600 = vld [vmem:[%s587 + $0x60] sm:$0xff]
        %v601 = vld [vmem:[%s587 + $0x68] sm:$0xff]
        %v602 = vld [vmem:[%s587 + $0x70] sm:$0xff]
        %v603 = vld [vmem:[%s587 + $0x78] sm:$0xff]
        %v620 = vunpack.c.l.b16 %v588
        %v621 = vunpack.c.h.b16 %v588
        %v622 = vunpack.c.l.b16 %v589
        %v623 = vunpack.c.h.b16 %v589
        %v624 = vunpack.c.l.b16 %v590
        %v625 = vunpack.c.h.b16 %v590
        %v626 = vunpack.c.l.b16 %v591
        %v627 = vunpack.c.h.b16 %v591
        %v628 = vunpack.c.l.b16 %v592
        %v629 = vunpack.c.h.b16 %v592
        %v630 = vunpack.c.l.b16 %v593
        %v631 = vunpack.c.h.b16 %v593
        %v632 = vunpack.c.l.b16 %v594
        %v633 = vunpack.c.h.b16 %v594
        %v634 = vunpack.c.l.b16 %v595
        %v635 = vunpack.c.h.b16 %v595
        %v636 = vunpack.c.l.b16 %v596
        %v637 = vunpack.c.h.b16 %v596
        %v638 = vunpack.c.l.b16 %v597
        %v639 = vunpack.c.h.b16 %v597
        %v640 = vunpack.c.l.b16 %v598
        %v641 = vunpack.c.h.b16 %v598
        %v642 = vunpack.c.l.b16 %v599
        %v643 = vunpack.c.h.b16 %v599
        %v644 = vunpack.c.l.b16 %v600
        %v645 = vunpack.c.h.b16 %v600
        %v646 = vunpack.c.l.b16 %v601
        %v647 = vunpack.c.h.b16 %v601
        %v648 = vunpack.c.l.b16 %v602
        %v649 = vunpack.c.h.b16 %v602
        %v650 = vunpack.c.l.b16 %v603
        %v651 = vunpack.c.h.b16 %v603
        %v652 = vpack.c.b16 %v624, %v620
        %v653 = vpack.c.b16 %v625, %v621
        %v654 = vpack.c.b16 %v626, %v622
        %v655 = vpack.c.b16 %v627, %v623
        %v656 = vpack.c.b16 %v632, %v628
        %v657 = vpack.c.b16 %v633, %v629
        %v658 = vpack.c.b16 %v634, %v630
        %v659 = vpack.c.b16 %v635, %v631
        %v660 = vpack.c.b16 %v640, %v636
        %v661 = vpack.c.b16 %v641, %v637
        %v662 = vpack.c.b16 %v642, %v638
        %v663 = vpack.c.b16 %v643, %v639
        %v664 = vpack.c.b16 %v648, %v644
        %v665 = vpack.c.b16 %v649, %v645
        %v666 = vpack.c.b16 %v650, %v646
        %v667 = vpack.c.b16 %v651, %v647
        %vm684 = vcmask 523264
        %v686 = vsel %vm684, %v479, 0
        %688 = vmatprep.subr.bf16.mxu0 %v653
        %689 = vmatpush1.bf16.msra.mxu0 %v652
        %690 = vmatprep.subr.bf16.mxu0 %v657
        %691 = vmatpush1.bf16.msra.mxu0 %v656
        %692 = vmatprep.subr.bf16.mxu0 %v661
        %693 = vmatpush1.bf16.msra.mxu0 %v660
        %694 = vmatprep.subr.bf16.mxu0 %v665
        %695 = vmatpush1.bf16.msra.mxu0 %v664
        %696 = vmatprep.subr.bf16.mxu0 0
        %697 = vmatpush1.bf16.msra.mxu0 0
        %698 = vmatprep.subr.bf16.mxu0 0
        %699 = vmatpush1.bf16.msra.mxu0 0
        %700 = vmatprep.subr.bf16.mxu0 0
        %701 = vmatpush1.bf16.msra.mxu0 0
        %702 = vmatprep.subr.bf16.mxu0 0
        %703 = vmatpush1.bf16.msra.mxu0 0
        %704 = vmatprep.subr.bf16.mxu0 0
        %705 = vmatpush1.bf16.msra.mxu0 0
        %706 = vmatprep.subr.bf16.mxu0 0
        %707 = vmatpush1.bf16.msra.mxu0 0
        %708 = vmatprep.subr.bf16.mxu0 0
        %709 = vmatpush1.bf16.msra.mxu0 0
        %710 = vmatprep.subr.bf16.mxu0 0
        %711 = vmatpush1.bf16.msra.mxu0 0
        %712 = vmatprep.subr.bf16.mxu0 0
        %713 = vmatpush1.bf16.msra.mxu0 0
        %714 = vmatprep.subr.bf16.mxu0 0
        %715 = vmatpush1.bf16.msra.mxu0 0
        %716 = vmatprep.subr.bf16.mxu0 0
        %717 = vmatpush1.bf16.msra.mxu0 0
        %718 = vmatprep.subr.bf16.mxu0 0
        %719 = vmatpush1.bf16.msra.mxu0 0
        %720 = vmatprep.mubr.bf16.mxu0 0
        %721 = vmatmul.mubr.bf16.gmra.mrb[0].mxu0 %v686
        %v722 = vpop.f32.mrb[0].mxu0
        %v723 = vadd.f32 0.0, %v722
        %v724 = vpop.f32.mrb[0].mxu0
        %v725 = vadd.f32 0.0, %v724
        %v726 = vpop.f32.mrb[0].mxu0
        %v727 = vadd.f32 0.0, %v726
        %v728 = vpop.f32.mrb[0].mxu0
        %v729 = vadd.f32 0.0, %v728
        %730 = vdwg.mxu0
        %731 = vmatprep.subr.bf16.mxu0 %v655
        %732 = vmatpush1.bf16.msra.mxu0 %v654
        %733 = vmatprep.subr.bf16.mxu0 %v659
        %734 = vmatpush1.bf16.msra.mxu0 %v658
        %735 = vmatprep.subr.bf16.mxu0 %v663
        %736 = vmatpush1.bf16.msra.mxu0 %v662
        %737 = vmatprep.subr.bf16.mxu0 %v667
        %738 = vmatpush1.bf16.msra.mxu0 %v666
        %739 = vmatprep.subr.bf16.mxu0 0
        %740 = vmatpush1.bf16.msra.mxu0 0
        %741 = vmatprep.subr.bf16.mxu0 0
        %742 = vmatpush1.bf16.msra.mxu0 0
        %743 = vmatprep.subr.bf16.mxu0 0
        %744 = vmatpush1.bf16.msra.mxu0 0
        %745 = vmatprep.subr.bf16.mxu0 0
        %746 = vmatpush1.bf16.msra.mxu0 0
        %747 = vmatprep.subr.bf16.mxu0 0
        %748 = vmatpush1.bf16.msra.mxu0 0
        %749 = vmatprep.subr.bf16.mxu0 0
        %750 = vmatpush1.bf16.msra.mxu0 0
        %751 = vmatprep.subr.bf16.mxu0 0
        %752 = vmatpush1.bf16.msra.mxu0 0
        %753 = vmatprep.subr.bf16.mxu0 0
        %754 = vmatpush1.bf16.msra.mxu0 0
        %755 = vmatprep.subr.bf16.mxu0 0
        %756 = vmatpush1.bf16.msra.mxu0 0
        %757 = vmatprep.subr.bf16.mxu0 0
        %758 = vmatpush1.bf16.msra.mxu0 0
        %759 = vmatprep.subr.bf16.mxu0 0
        %760 = vmatpush1.bf16.msra.mxu0 0
        %761 = vmatprep.subr.bf16.mxu0 0
        %762 = vmatpush1.bf16.msra.mxu0 0
        %763 = vmatprep.mubr.bf16.mxu0 0
        %764 = vmatmul.mubr.bf16.gmra.mrb[0].mxu0 %v686
        %v765 = vpop.f32.mrb[0].mxu0
        %v766 = vadd.f32 0.0, %v765
        %v767 = vpop.f32.mrb[0].mxu0
        %v768 = vadd.f32 0.0, %v767
        %v769 = vpop.f32.mrb[0].mxu0
        %v770 = vadd.f32 0.0, %v769
        %v771 = vpop.f32.mrb[0].mxu0
        %v772 = vadd.f32 0.0, %v771
        %773 = vdwg.mxu0
        %v790 = vunpack.c.l.b16 %v571
        %v791 = vunpack.c.h.b16 %v571
        %v792 = vunpack.c.l.b16 %v572
        %v793 = vunpack.c.h.b16 %v572
        %v794 = vunpack.c.l.b16 %v573
        %v795 = vunpack.c.h.b16 %v573
        %v796 = vunpack.c.l.b16 %v574
        %v797 = vunpack.c.h.b16 %v574
        %v798 = vunpack.c.l.b16 %v575
        %v799 = vunpack.c.h.b16 %v575
        %v800 = vunpack.c.l.b16 %v576
        %v801 = vunpack.c.h.b16 %v576
        %v802 = vunpack.c.l.b16 %v577
        %v803 = vunpack.c.h.b16 %v577
        %v804 = vunpack.c.l.b16 %v578
        %v805 = vunpack.c.h.b16 %v578
        %v806 = vunpack.c.l.b16 %v579
        %v807 = vunpack.c.h.b16 %v579
        %v808 = vunpack.c.l.b16 %v580
        %v809 = vunpack.c.h.b16 %v580
        %v810 = vunpack.c.l.b16 %v581
        %v811 = vunpack.c.h.b16 %v581
        %v812 = vunpack.c.l.b16 %v582
        %v813 = vunpack.c.h.b16 %v582
        %v814 = vunpack.c.l.b16 %v583
        %v815 = vunpack.c.h.b16 %v583
        %v816 = vunpack.c.l.b16 %v584
        %v817 = vunpack.c.h.b16 %v584
        %v818 = vunpack.c.l.b16 %v585
        %v819 = vunpack.c.h.b16 %v585
        %v820 = vunpack.c.l.b16 %v586
        %v821 = vunpack.c.h.b16 %v586
        %v822 = vpack.c.b16 %v794, %v790
        %v823 = vpack.c.b16 %v795, %v791
        %v824 = vpack.c.b16 %v796, %v792
        %v825 = vpack.c.b16 %v797, %v793
        %v826 = vpack.c.b16 %v802, %v798
        %v827 = vpack.c.b16 %v803, %v799
        %v828 = vpack.c.b16 %v804, %v800
        %v829 = vpack.c.b16 %v805, %v801
        %v830 = vpack.c.b16 %v810, %v806
        %v831 = vpack.c.b16 %v811, %v807
        %v832 = vpack.c.b16 %v812, %v808
        %v833 = vpack.c.b16 %v813, %v809
        %v834 = vpack.c.b16 %v818, %v814
        %v835 = vpack.c.b16 %v819, %v815
        %v836 = vpack.c.b16 %v820, %v816
        %v837 = vpack.c.b16 %v821, %v817
        %v855 = vsel %vm684, %v525, 0
        %857 = vmatprep.subr.bf16.mxu0 %v823
        %858 = vmatpush1.bf16.msra.mxu0 %v822
        %859 = vmatprep.subr.bf16.mxu0 %v827
        %860 = vmatpush1.bf16.msra.mxu0 %v826
        %861 = vmatprep.subr.bf16.mxu0 %v831
        %862 = vmatpush1.bf16.msra.mxu0 %v830
        %863 = vmatprep.subr.bf16.mxu0 %v835
        %864 = vmatpush1.bf16.msra.mxu0 %v834
        %865 = vmatprep.subr.bf16.mxu0 0
        %866 = vmatpush1.bf16.msra.mxu0 0
        %867 = vmatprep.subr.bf16.mxu0 0
        %868 = vmatpush1.bf16.msra.mxu0 0
        %869 = vmatprep.subr.bf16.mxu0 0
        %870 = vmatpush1.bf16.msra.mxu0 0
        %871 = vmatprep.subr.bf16.mxu0 0
        %872 = vmatpush1.bf16.msra.mxu0 0
        %873 = vmatprep.subr.bf16.mxu0 0
        %874 = vmatpush1.bf16.msra.mxu0 0
        %875 = vmatprep.subr.bf16.mxu0 0
        %876 = vmatpush1.bf16.msra.mxu0 0
        %877 = vmatprep.subr.bf16.mxu0 0
        %878 = vmatpush1.bf16.msra.mxu0 0
        %879 = vmatprep.subr.bf16.mxu0 0
        %880 = vmatpush1.bf16.msra.mxu0 0
        %881 = vmatprep.subr.bf16.mxu0 0
        %882 = vmatpush1.bf16.msra.mxu0 0
        %883 = vmatprep.subr.bf16.mxu0 0
        %884 = vmatpush1.bf16.msra.mxu0 0
        %885 = vmatprep.subr.bf16.mxu0 0
        %886 = vmatpush1.bf16.msra.mxu0 0
        %887 = vmatprep.subr.bf16.mxu0 0
        %888 = vmatpush1.bf16.msra.mxu0 0
        %889 = vmatprep.mubr.bf16.mxu0 0
        %890 = vmatmul.mubr.bf16.gmra.mrb[0].mxu0 %v855
        %v891 = vpop.f32.mrb[0].mxu0
        %v892 = vadd.f32 %v723, %v891
        %v893 = vpop.f32.mrb[0].mxu0
        %v894 = vadd.f32 %v725, %v893
        %v895 = vpop.f32.mrb[0].mxu0
        %v896 = vadd.f32 %v727, %v895
        %v897 = vpop.f32.mrb[0].mxu0
        %v898 = vadd.f32 %v729, %v897
        %899 = vdwg.mxu0
        %900 = vmatprep.subr.bf16.mxu0 %v825
        %901 = vmatpush1.bf16.msra.mxu0 %v824
        %902 = vmatprep.subr.bf16.mxu0 %v829
        %903 = vmatpush1.bf16.msra.mxu0 %v828
        %904 = vmatprep.subr.bf16.mxu0 %v833
        %905 = vmatpush1.bf16.msra.mxu0 %v832
        %906 = vmatprep.subr.bf16.mxu0 %v837
        %907 = vmatpush1.bf16.msra.mxu0 %v836
        %908 = vmatprep.subr.bf16.mxu0 0
        %909 = vmatpush1.bf16.msra.mxu0 0
        %910 = vmatprep.subr.bf16.mxu0 0
        %911 = vmatpush1.bf16.msra.mxu0 0
        %912 = vmatprep.subr.bf16.mxu0 0
        %913 = vmatpush1.bf16.msra.mxu0 0
        %914 = vmatprep.subr.bf16.mxu0 0
        %915 = vmatpush1.bf16.msra.mxu0 0
        %916 = vmatprep.subr.bf16.mxu0 0
        %917 = vmatpush1.bf16.msra.mxu0 0
        %918 = vmatprep.subr.bf16.mxu0 0
        %919 = vmatpush1.bf16.msra.mxu0 0
        %920 = vmatprep.subr.bf16.mxu0 0
        %921 = vmatpush1.bf16.msra.mxu0 0
        %922 = vmatprep.subr.bf16.mxu0 0
        %923 = vmatpush1.bf16.msra.mxu0 0
        %924 = vmatprep.subr.bf16.mxu0 0
        %925 = vmatpush1.bf16.msra.mxu0 0
        %926 = vmatprep.subr.bf16.mxu0 0
        %927 = vmatpush1.bf16.msra.mxu0 0
        %928 = vmatprep.subr.bf16.mxu0 0
        %929 = vmatpush1.bf16.msra.mxu0 0
        %930 = vmatprep.subr.bf16.mxu0 0
        %931 = vmatpush1.bf16.msra.mxu0 0
        %932 = vmatprep.mubr.bf16.mxu0 0
        %933 = vmatmul.mubr.bf16.gmra.mrb[0].mxu0 %v855
        %v934 = vpop.f32.mrb[0].mxu0
        %v935 = vadd.f32 %v766, %v934
        %v936 = vpop.f32.mrb[0].mxu0
        %v937 = vadd.f32 %v768, %v936
        %v938 = vpop.f32.mrb[0].mxu0
        %v939 = vadd.f32 %v770, %v938
        %v940 = vpop.f32.mrb[0].mxu0
        %v941 = vadd.f32 %v772, %v940
        %942 = vdwg.mxu0
        %s943 = scalar_lea.vmem [#allocation8], 256
        %v944 = vld [vmem:[%s943] sm:$0xff]
        %v945 = vld [vmem:[%s943 + $0x8] sm:$0xff]
        %v946 = vld [vmem:[%s943 + $0x10] sm:$0xff]
        %v947 = vld [vmem:[%s943 + $0x18] sm:$0xff]
        %v948 = vld [vmem:[%s943 + $0x20] sm:$0xff]
        %v949 = vld [vmem:[%s943 + $0x28] sm:$0xff]
        %v950 = vld [vmem:[%s943 + $0x30] sm:$0xff]
        %v951 = vld [vmem:[%s943 + $0x38] sm:$0xff]
        %v952 = vld [vmem:[%s943 + $0x40] sm:$0xff]
        %v953 = vld [vmem:[%s943 + $0x48] sm:$0xff]
        %v954 = vld [vmem:[%s943 + $0x50] sm:$0xff]
        %v955 = vld [vmem:[%s943 + $0x58] sm:$0xff]
        %v956 = vld [vmem:[%s943 + $0x60] sm:$0xff]
        %v957 = vld [vmem:[%s943 + $0x68] sm:$0xff]
        %v958 = vld [vmem:[%s943 + $0x70] sm:$0xff]
        %v959 = vld [vmem:[%s943 + $0x78] sm:$0xff]
        %v976 = vunpack.c.l.b16 %v944
        %v977 = vunpack.c.h.b16 %v944
        %v978 = vunpack.c.l.b16 %v945
        %v979 = vunpack.c.h.b16 %v945
        %v980 = vunpack.c.l.b16 %v946
        %v981 = vunpack.c.h.b16 %v946
        %v982 = vunpack.c.l.b16 %v947
        %v983 = vunpack.c.h.b16 %v947
        %v984 = vunpack.c.l.b16 %v948
        %v985 = vunpack.c.h.b16 %v948
        %v986 = vunpack.c.l.b16 %v949
        %v987 = vunpack.c.h.b16 %v949
        %v988 = vunpack.c.l.b16 %v950
        %v989 = vunpack.c.h.b16 %v950
        %v990 = vunpack.c.l.b16 %v951
        %v991 = vunpack.c.h.b16 %v951
        %v992 = vunpack.c.l.b16 %v952
        %v993 = vunpack.c.h.b16 %v952
        %v994 = vunpack.c.l.b16 %v953
        %v995 = vunpack.c.h.b16 %v953
        %v996 = vunpack.c.l.b16 %v954
        %v997 = vunpack.c.h.b16 %v954
        %v998 = vunpack.c.l.b16 %v955
        %v999 = vunpack.c.h.b16 %v955
        %v1000 = vunpack.c.l.b16 %v956
        %v1001 = vunpack.c.h.b16 %v956
        %v1002 = vunpack.c.l.b16 %v957
        %v1003 = vunpack.c.h.b16 %v957
        %v1004 = vunpack.c.l.b16 %v958
        %v1005 = vunpack.c.h.b16 %v958
        %v1006 = vunpack.c.l.b16 %v959
        %v1007 = vunpack.c.h.b16 %v959
        %v1008 = vpack.c.b16 %v980, %v976
        %v1009 = vpack.c.b16 %v981, %v977
        %v1010 = vpack.c.b16 %v982, %v978
        %v1011 = vpack.c.b16 %v983, %v979
        %v1012 = vpack.c.b16 %v988, %v984
        %v1013 = vpack.c.b16 %v989, %v985
        %v1014 = vpack.c.b16 %v990, %v986
        %v1015 = vpack.c.b16 %v991, %v987
        %v1016 = vpack.c.b16 %v996, %v992
        %v1017 = vpack.c.b16 %v997, %v993
        %v1018 = vpack.c.b16 %v998, %v994
        %v1019 = vpack.c.b16 %v999, %v995
        %v1020 = vpack.c.b16 %v1004, %v1000
        %v1021 = vpack.c.b16 %v1005, %v1001
        %v1022 = vpack.c.b16 %v1006, %v1002
        %v1023 = vpack.c.b16 %v1007, %v1003
        %v1041 = vsel %vm684, %v570, 0
        %1043 = vmatprep.subr.bf16.mxu0 %v1009
        %1044 = vmatpush1.bf16.msra.mxu0 %v1008
        %1045 = vmatprep.subr.bf16.mxu0 %v1013
        %1046 = vmatpush1.bf16.msra.mxu0 %v1012
        %1047 = vmatprep.subr.bf16.mxu0 %v1017
        %1048 = vmatpush1.bf16.msra.mxu0 %v1016
        %1049 = vmatprep.subr.bf16.mxu0 %v1021
        %1050 = vmatpush1.bf16.msra.mxu0 %v1020
        %1051 = vmatprep.subr.bf16.mxu0 0
        %1052 = vmatpush1.bf16.msra.mxu0 0
        %1053 = vmatprep.subr.bf16.mxu0 0
        %1054 = vmatpush1.bf16.msra.mxu0 0
        %1055 = vmatprep.subr.bf16.mxu0 0
        %1056 = vmatpush1.bf16.msra.mxu0 0
        %1057 = vmatprep.subr.bf16.mxu0 0
        %1058 = vmatpush1.bf16.msra.mxu0 0
        %1059 = vmatprep.subr.bf16.mxu0 0
        %1060 = vmatpush1.bf16.msra.mxu0 0
        %1061 = vmatprep.subr.bf16.mxu0 0
        %1062 = vmatpush1.bf16.msra.mxu0 0
        %1063 = vmatprep.subr.bf16.mxu0 0
        %1064 = vmatpush1.bf16.msra.mxu0 0
        %1065 = vmatprep.subr.bf16.mxu0 0
        %1066 = vmatpush1.bf16.msra.mxu0 0
        %1067 = vmatprep.subr.bf16.mxu0 0
        %1068 = vmatpush1.bf16.msra.mxu0 0
        %1069 = vmatprep.subr.bf16.mxu0 0
        %1070 = vmatpush1.bf16.msra.mxu0 0
        %1071 = vmatprep.subr.bf16.mxu0 0
        %1072 = vmatpush1.bf16.msra.mxu0 0
        %1073 = vmatprep.subr.bf16.mxu0 0
        %1074 = vmatpush1.bf16.msra.mxu0 0
        %1075 = vmatprep.mubr.bf16.mxu0 0
        %1076 = vmatmul.mubr.bf16.gmra.mrb[0].mxu0 %v1041
        %v1077 = vpop.f32.mrb[0].mxu0
        %v1078 = vadd.f32 0.0, %v1077
        %v1079 = vpop.f32.mrb[0].mxu0
        %v1080 = vadd.f32 0.0, %v1079
        %v1081 = vpop.f32.mrb[0].mxu0
        %v1082 = vadd.f32 0.0, %v1081
        %v1083 = vpop.f32.mrb[0].mxu0
        %v1084 = vadd.f32 0.0, %v1083
        %1085 = vdwg.mxu0
        %1086 = vmatprep.subr.bf16.mxu0 %v1011
        %1087 = vmatpush1.bf16.msra.mxu0 %v1010
        %1088 = vmatprep.subr.bf16.mxu0 %v1015
        %1089 = vmatpush1.bf16.msra.mxu0 %v1014
        %1090 = vmatprep.subr.bf16.mxu0 %v1019
        %1091 = vmatpush1.bf16.msra.mxu0 %v1018
        %1092 = vmatprep.subr.bf16.mxu0 %v1023
        %1093 = vmatpush1.bf16.msra.mxu0 %v1022
        %1094 = vmatprep.subr.bf16.mxu0 0
        %1095 = vmatpush1.bf16.msra.mxu0 0
        %1096 = vmatprep.subr.bf16.mxu0 0
        %1097 = vmatpush1.bf16.msra.mxu0 0
        %1098 = vmatprep.subr.bf16.mxu0 0
        %1099 = vmatpush1.bf16.msra.mxu0 0
        %1100 = vmatprep.subr.bf16.mxu0 0
        %1101 = vmatpush1.bf16.msra.mxu0 0
        %1102 = vmatprep.subr.bf16.mxu0 0
        %1103 = vmatpush1.bf16.msra.mxu0 0
        %1104 = vmatprep.subr.bf16.mxu0 0
        %1105 = vmatpush1.bf16.msra.mxu0 0
        %1106 = vmatprep.subr.bf16.mxu0 0
        %1107 = vmatpush1.bf16.msra.mxu0 0
        %1108 = vmatprep.subr.bf16.mxu0 0
        %1109 = vmatpush1.bf16.msra.mxu0 0
        %1110 = vmatprep.subr.bf16.mxu0 0
        %1111 = vmatpush1.bf16.msra.mxu0 0
        %1112 = vmatprep.subr.bf16.mxu0 0
        %1113 = vmatpush1.bf16.msra.mxu0 0
        %1114 = vmatprep.subr.bf16.mxu0 0
        %1115 = vmatpush1.bf16.msra.mxu0 0
        %1116 = vmatprep.subr.bf16.mxu0 0
        %1117 = vmatpush1.bf16.msra.mxu0 0
        %1118 = vmatprep.mubr.bf16.mxu0 0
        %1119 = vmatmul.mubr.bf16.gmra.mrb[0].mxu0 %v1041
        %v1120 = vpop.f32.mrb[0].mxu0
        %v1121 = vadd.f32 0.0, %v1120
        %v1122 = vpop.f32.mrb[0].mxu0
        %v1123 = vadd.f32 0.0, %v1122
        %v1124 = vpop.f32.mrb[0].mxu0
        %v1125 = vadd.f32 0.0, %v1124
        %v1126 = vpop.f32.mrb[0].mxu0
        %v1127 = vadd.f32 0.0, %v1126
        %1128 = vdwg.mxu0
        %v1129 = vadd.f32 %v892, %v1078
        %v1130 = vadd.f32 %v894, %v1080
        %v1131 = vadd.f32 %v935, %v1121
        %v1132 = vadd.f32 %v937, %v1123
        %v1133 = vadd.f32 %v896, %v1082
        %v1134 = vadd.f32 %v898, %v1084
        %v1135 = vadd.f32 %v939, %v1125
        %v1136 = vadd.f32 %v941, %v1127
        %v1137 = vld [vmem:[#allocation10] sm:$0xf]
        %v1139 = vlaneseq
        %v1140 = vshrl.u32 %v1139, 7
        %v1141 = vsub.s32 0, %v1140
        %v1142 = vrot.slane %v1137, %v1141
        %v1143 = vlaneseq
        %v1144 = vshrl.u32 %v1143, 7
        %v1145 = vsub.s32 1, %v1144
        %v1146 = vrot.slane %v1137, %v1145
        %v1147 = vlaneseq
        %v1148 = vshrl.u32 %v1147, 7
        %v1149 = vsub.s32 2, %v1148
        %v1150 = vrot.slane %v1137, %v1149
        %v1151 = vlaneseq
        %v1152 = vshrl.u32 %v1151, 7
        %v1153 = vsub.s32 3, %v1152
        %v1154 = vrot.slane %v1137, %v1153
        %v1159 = vmul.f32 %v1129, %v1142
        %v1160 = vmul.f32 %v1130, %v1146
        %v1161 = vmul.f32 %v1131, %v1150
        %v1162 = vmul.f32 %v1132, %v1154
        %v1163 = vmul.f32 %v1133, %v1142
        %v1164 = vmul.f32 %v1134, %v1146
        %v1165 = vmul.f32 %v1135, %v1150
        %v1166 = vmul.f32 %v1136, %v1154
        %v1167 = vld [vmem:[#allocation11] sm:$0xf]
        %v1169 = vlaneseq
        %v1170 = vshrl.u32 %v1169, 7
        %v1171 = vsub.s32 0, %v1170
        %v1172 = vrot.slane %v1167, %v1171
        %v1173 = vlaneseq
        %v1174 = vshrl.u32 %v1173, 7
        %v1175 = vsub.s32 1, %v1174
        %v1176 = vrot.slane %v1167, %v1175
        %v1177 = vlaneseq
        %v1178 = vshrl.u32 %v1177, 7
        %v1179 = vsub.s32 2, %v1178
        %v1180 = vrot.slane %v1167, %v1179
        %v1181 = vlaneseq
        %v1182 = vshrl.u32 %v1181, 7
        %v1183 = vsub.s32 3, %v1182
        %v1184 = vrot.slane %v1167, %v1183
        %v1189 = vadd.f32 %v1159, %v1172
        %v1190 = vadd.f32 %v1160, %v1176
        %v1191 = vadd.f32 %v1161, %v1180
        %v1192 = vadd.f32 %v1162, %v1184
        %v1193 = vadd.f32 %v1163, %v1172
        %v1194 = vadd.f32 %v1164, %v1176
        %v1195 = vadd.f32 %v1165, %v1180
        %v1196 = vadd.f32 %v1166, %v1184
        %v1197 = vsub.f32 0.0, %v1189
        %v1198 = vsub.f32 0.0, %v1190
        %v1199 = vsub.f32 0.0, %v1191
        %v1200 = vsub.f32 0.0, %v1192
        %v1201 = vsub.f32 0.0, %v1193
        %v1202 = vsub.f32 0.0, %v1194
        %v1203 = vsub.f32 0.0, %v1195
        %v1204 = vsub.f32 0.0, %v1196
        %v1205 = vmul.f32 %v1197, 1.442695
        %v1206 = vpow.pop %v1205
        %v1207 = vmul.f32 %v1198, 1.442695
        %v1208 = vpow.pop %v1207
        %v1209 = vmul.f32 %v1199, 1.442695
        %v1210 = vpow.pop %v1209
        %v1211 = vmul.f32 %v1200, 1.442695
        %v1212 = vpow.pop %v1211
        %v1213 = vmul.f32 %v1201, 1.442695
        %v1214 = vpow.pop %v1213
        %v1215 = vmul.f32 %v1202, 1.442695
        %v1216 = vpow.pop %v1215
        %v1217 = vmul.f32 %v1203, 1.442695
        %v1218 = vpow.pop %v1217
        %v1219 = vmul.f32 %v1204, 1.442695
        %v1220 = vpow.pop %v1219
        %v1221 = vadd.f32 %v1206, 1.0
        %v1222 = vadd.f32 %v1208, 1.0
        %v1223 = vadd.f32 %v1210, 1.0
        %v1224 = vadd.f32 %v1212, 1.0
        %v1225 = vadd.f32 %v1214, 1.0
        %v1226 = vadd.f32 %v1216, 1.0
        %v1227 = vadd.f32 %v1218, 1.0
        %v1228 = vadd.f32 %v1220, 1.0
        %v1229 = vrcp.pop %v1221
        %v1230 = vmul.f32 1.0, %v1229
        %v1231 = vrcp.pop %v1222
        %v1232 = vmul.f32 1.0, %v1231
        %v1233 = vrcp.pop %v1223
        %v1234 = vmul.f32 1.0, %v1233
        %v1235 = vrcp.pop %v1224
        %v1236 = vmul.f32 1.0, %v1235
        %v1237 = vrcp.pop %v1225
        %v1238 = vmul.f32 1.0, %v1237
        %v1239 = vrcp.pop %v1226
        %v1240 = vmul.f32 1.0, %v1239
        %v1241 = vrcp.pop %v1227
        %v1242 = vmul.f32 1.0, %v1241
        %v1243 = vrcp.pop %v1228
        %v1244 = vmul.f32 1.0, %v1243
        %v1245 = vmul.f32 %v1189, %v1230
        %v1246 = vmul.f32 %v1190, %v1232
        %v1247 = vmul.f32 %v1191, %v1234
        %v1248 = vmul.f32 %v1192, %v1236
        %v1249 = vmul.f32 %v1193, %v1238
        %v1250 = vmul.f32 %v1194, %v1240
        %v1251 = vmul.f32 %v1195, %v1242
        %v1252 = vmul.f32 %v1196, %v1244
        %v1253 = vpack.c.bf16 %v1249, %v1245
        %v1254 = vpack.c.bf16 %v1250, %v1246
        %v1255 = vpack.c.bf16 %v1251, %v1247
        %v1256 = vpack.c.bf16 %v1252, %v1248
        %1257 = vmatprep.subr.bf16.mxu0 %v1254
        %1258 = vmatpush1.bf16.msra.mxu0 %v1253
        %1259 = vmatprep.subr.bf16.mxu0 0
        %1260 = vmatpush1.bf16.msra.mxu0 0
        %1261 = vmatprep.subr.bf16.mxu0 0
        %1262 = vmatpush1.bf16.msra.mxu0 0
        %1263 = vmatprep.subr.bf16.mxu0 0
        %1264 = vmatpush1.bf16.msra.mxu0 0
        %1265 = vmatprep.subr.bf16.mxu0 0
        %1266 = vmatpush1.bf16.msra.mxu0 0
        %1267 = vmatprep.subr.bf16.mxu0 0
        %1268 = vmatpush1.bf16.msra.mxu0 0
        %1269 = vmatprep.subr.bf16.mxu0 0
        %1270 = vmatpush1.bf16.msra.mxu0 0
        %1271 = vmatprep.subr.bf16.mxu0 0
        %1272 = vmatpush1.bf16.msra.mxu0 0
        %1273 = vmatprep.subr.bf16.mxu0 0
        %1274 = vmatpush1.bf16.msra.mxu0 0
        %1275 = vmatprep.subr.bf16.mxu0 0
        %1276 = vmatpush1.bf16.msra.mxu0 0
        %1277 = vmatprep.subr.bf16.mxu0 0
        %1278 = vmatpush1.bf16.msra.mxu0 0
        %1279 = vmatprep.subr.bf16.mxu0 0
        %1280 = vmatpush1.bf16.msra.mxu0 0
        %1281 = vmatprep.subr.bf16.mxu0 0
        %1282 = vmatpush1.bf16.msra.mxu0 0
        %1283 = vmatprep.subr.bf16.mxu0 0
        %1284 = vmatpush1.bf16.msra.mxu0 0
        %1285 = vmatprep.subr.bf16.mxu0 0
        %1286 = vmatpush1.bf16.msra.mxu0 0
        %1287 = vmatprep.subr.bf16.mxu0 0
        %1288 = vmatpush1.bf16.msra.mxu0 0
        %1289 = vmatprep.mubr.bf16.mxu0 0
        %1290 = vmatmul.mubr.bf16.gmra.mrb[0].mxu0 %v482
        %v1291 = vpop.f32.mrb[0].mxu0
        %v1292 = vadd.f32 0.0, %v1291
        %v1293 = vpop.f32.mrb[0].mxu0
        %v1294 = vadd.f32 0.0, %v1293
        %v1295 = vpop.f32.mrb[0].mxu0
        %v1296 = vadd.f32 0.0, %v1295
        %v1297 = vpop.f32.mrb[0].mxu0
        %v1298 = vadd.f32 0.0, %v1297
        %1299 = vdwg.mxu0
        %1300 = vmatprep.subr.bf16.mxu0 %v1256
        %1301 = vmatpush1.bf16.msra.mxu0 %v1255
        %1302 = vmatprep.subr.bf16.mxu0 0
        %1303 = vmatpush1.bf16.msra.mxu0 0
        %1304 = vmatprep.subr.bf16.mxu0 0
        %1305 = vmatpush1.bf16.msra.mxu0 0
        %1306 = vmatprep.subr.bf16.mxu0 0
        %1307 = vmatpush1.bf16.msra.mxu0 0
        %1308 = vmatprep.subr.bf16.mxu0 0
        %1309 = vmatpush1.bf16.msra.mxu0 0
        %1310 = vmatprep.subr.bf16.mxu0 0
        %1311 = vmatpush1.bf16.msra.mxu0 0
        %1312 = vmatprep.subr.bf16.mxu0 0
        %1313 = vmatpush1.bf16.msra.mxu0 0
        %1314 = vmatprep.subr.bf16.mxu0 0
        %1315 = vmatpush1.bf16.msra.mxu0 0
        %1316 = vmatprep.subr.bf16.mxu0 0
        %1317 = vmatpush1.bf16.msra.mxu0 0
        %1318 = vmatprep.subr.bf16.mxu0 0
        %1319 = vmatpush1.bf16.msra.mxu0 0
        %1320 = vmatprep.subr.bf16.mxu0 0
        %1321 = vmatpush1.bf16.msra.mxu0 0
        %1322 = vmatprep.subr.bf16.mxu0 0
        %1323 = vmatpush1.bf16.msra.mxu0 0
        %1324 = vmatprep.subr.bf16.mxu0 0
        %1325 = vmatpush1.bf16.msra.mxu0 0
        %1326 = vmatprep.subr.bf16.mxu0 0
        %1327 = vmatpush1.bf16.msra.mxu0 0
        %1328 = vmatprep.subr.bf16.mxu0 0
        %1329 = vmatpush1.bf16.msra.mxu0 0
        %1330 = vmatprep.subr.bf16.mxu0 0
        %1331 = vmatpush1.bf16.msra.mxu0 0
        %1332 = vmatprep.mubr.bf16.mxu0 0
        %1333 = vmatmul.mubr.bf16.gmra.mrb[0].mxu0 %v482
        %v1334 = vpop.f32.mrb[0].mxu0
        %v1335 = vadd.f32 0.0, %v1334
        %v1336 = vpop.f32.mrb[0].mxu0
        %v1337 = vadd.f32 0.0, %v1336
        %v1338 = vpop.f32.mrb[0].mxu0
        %v1339 = vadd.f32 0.0, %v1338
        %v1340 = vpop.f32.mrb[0].mxu0
        %v1341 = vadd.f32 0.0, %v1340
        %1342 = vdwg.mxu0
        %v1343 = vpack.c.bf16 %v1296, %v1292
        %v1344 = vpack.c.bf16 %v1298, %v1294
        %v1345 = vpack.c.bf16 %v1339, %v1335
        %v1346 = vpack.c.bf16 %v1341, %v1337
        %1347 = vmatprep.subr.bf16.mxu0 %v1254
        %1348 = vmatpush1.bf16.msra.mxu0 %v1253
        %1349 = vmatprep.subr.bf16.mxu0 0
        %1350 = vmatpush1.bf16.msra.mxu0 0
        %1351 = vmatprep.subr.bf16.mxu0 0
        %1352 = vmatpush1.bf16.msra.mxu0 0
        %1353 = vmatprep.subr.bf16.mxu0 0
        %1354 = vmatpush1.bf16.msra.mxu0 0
        %1355 = vmatprep.subr.bf16.mxu0 0
        %1356 = vmatpush1.bf16.msra.mxu0 0
        %1357 = vmatprep.subr.bf16.mxu0 0
        %1358 = vmatpush1.bf16.msra.mxu0 0
        %1359 = vmatprep.subr.bf16.mxu0 0
        %1360 = vmatpush1.bf16.msra.mxu0 0
        %1361 = vmatprep.subr.bf16.mxu0 0
        %1362 = vmatpush1.bf16.msra.mxu0 0
        %1363 = vmatprep.subr.bf16.mxu0 0
        %1364 = vmatpush1.bf16.msra.mxu0 0
        %1365 = vmatprep.subr.bf16.mxu0 0
        %1366 = vmatpush1.bf16.msra.mxu0 0
        %1367 = vmatprep.subr.bf16.mxu0 0
        %1368 = vmatpush1.bf16.msra.mxu0 0
        %1369 = vmatprep.subr.bf16.mxu0 0
        %1370 = vmatpush1.bf16.msra.mxu0 0
        %1371 = vmatprep.subr.bf16.mxu0 0
        %1372 = vmatpush1.bf16.msra.mxu0 0
        %1373 = vmatprep.subr.bf16.mxu0 0
        %1374 = vmatpush1.bf16.msra.mxu0 0
        %1375 = vmatprep.subr.bf16.mxu0 0
        %1376 = vmatpush1.bf16.msra.mxu0 0
        %1377 = vmatprep.subr.bf16.mxu0 0
        %1378 = vmatpush1.bf16.msra.mxu0 0
        %1379 = vmatprep.mubr.bf16.mxu0 0
        %1380 = vmatmul.mubr.bf16.gmra.mrb[0].mxu0 %v527
        %v1381 = vpop.f32.mrb[0].mxu0
        %v1382 = vadd.f32 0.0, %v1381
        %v1383 = vpop.f32.mrb[0].mxu0
        %v1384 = vadd.f32 0.0, %v1383
        %v1385 = vpop.f32.mrb[0].mxu0
        %v1386 = vadd.f32 0.0, %v1385
        %v1387 = vpop.f32.mrb[0].mxu0
        %v1388 = vadd.f32 0.0, %v1387
        %1389 = vdwg.mxu0
        %1390 = vmatprep.subr.bf16.mxu0 %v1256
        %1391 = vmatpush1.bf16.msra.mxu0 %v1255
        %1392 = vmatprep.subr.bf16.mxu0 0
        %1393 = vmatpush1.bf16.msra.mxu0 0
        %1394 = vmatprep.subr.bf16.mxu0 0
        %1395 = vmatpush1.bf16.msra.mxu0 0
        %1396 = vmatprep.subr.bf16.mxu0 0
        %1397 = vmatpush1.bf16.msra.mxu0 0
        %1398 = vmatprep.subr.bf16.mxu0 0
        %1399 = vmatpush1.bf16.msra.mxu0 0
        %1400 = vmatprep.subr.bf16.mxu0 0
        %1401 = vmatpush1.bf16.msra.mxu0 0
        %1402 = vmatprep.subr.bf16.mxu0 0
        %1403 = vmatpush1.bf16.msra.mxu0 0
        %1404 = vmatprep.subr.bf16.mxu0 0
        %1405 = vmatpush1.bf16.msra.mxu0 0
        %1406 = vmatprep.subr.bf16.mxu0 0
        %1407 = vmatpush1.bf16.msra.mxu0 0
        %1408 = vmatprep.subr.bf16.mxu0 0
        %1409 = vmatpush1.bf16.msra.mxu0 0
        %1410 = vmatprep.subr.bf16.mxu0 0
        %1411 = vmatpush1.bf16.msra.mxu0 0
        %1412 = vmatprep.subr.bf16.mxu0 0
        %1413 = vmatpush1.bf16.msra.mxu0 0
        %1414 = vmatprep.subr.bf16.mxu0 0
        %1415 = vmatpush1.bf16.msra.mxu0 0
        %1416 = vmatprep.subr.bf16.mxu0 0
        %1417 = vmatpush1.bf16.msra.mxu0 0
        %1418 = vmatprep.subr.bf16.mxu0 0
        %1419 = vmatpush1.bf16.msra.mxu0 0
        %1420 = vmatprep.subr.bf16.mxu0 0
        %1421 = vmatpush1.bf16.msra.mxu0 0
        %1422 = vmatprep.mubr.bf16.mxu0 0
        %1423 = vmatmul.mubr.bf16.gmra.mrb[0].mxu0 %v527
        %v1424 = vpop.f32.mrb[0].mxu0
        %v1425 = vadd.f32 0.0, %v1424
        %v1426 = vpop.f32.mrb[0].mxu0
        %v1427 = vadd.f32 0.0, %v1426
        %v1428 = vpop.f32.mrb[0].mxu0
        %v1429 = vadd.f32 0.0, %v1428
        %v1430 = vpop.f32.mrb[0].mxu0
        %v1431 = vadd.f32 0.0, %v1430
        %1432 = vdwg.mxu0
        %v1433 = vpack.c.bf16 %v1386, %v1382
        %v1434 = vpack.c.bf16 %v1388, %v1384
        %v1435 = vpack.c.bf16 %v1429, %v1425
        %v1436 = vpack.c.bf16 %v1431, %v1427
        %v1437 = vld [vmem:[#allocation13] sm:$0xff]
        %v1438 = vld [vmem:[#allocation13 + $0x8] sm:$0xff]
        %v1439 = vld [vmem:[#allocation13 + $0x10] sm:$0xff]
        %v1440 = vld [vmem:[#allocation13 + $0x18] sm:$0xff]
        %v1441 = vld [vmem:[#allocation13 + $0x20] sm:$0xff]
        %v1442 = vld [vmem:[#allocation13 + $0x28] sm:$0xff]
        %v1443 = vld [vmem:[#allocation13 + $0x30] sm:$0xff]
        %v1444 = vld [vmem:[#allocation13 + $0x38] sm:$0xff]
        %v1445 = vld [vmem:[#allocation13 + $0x40] sm:$0xff]
        %v1446 = vld [vmem:[#allocation13 + $0x48] sm:$0xff]
        %v1447 = vld [vmem:[#allocation13 + $0x50] sm:$0xff]
        %v1448 = vld [vmem:[#allocation13 + $0x58] sm:$0xff]
        %v1449 = vld [vmem:[#allocation13 + $0x60] sm:$0xff]
        %v1450 = vld [vmem:[#allocation13 + $0x68] sm:$0xff]
        %v1451 = vld [vmem:[#allocation13 + $0x70] sm:$0xff]
        %v1452 = vld [vmem:[#allocation13 + $0x78] sm:$0xff]
        %v1453 = vld [vmem:[#allocation13 + $0x80] sm:$0xff]
        %v1454 = vld [vmem:[#allocation13 + $0x88] sm:$0xff]
        %v1455 = vld [vmem:[#allocation13 + $0x90] sm:$0xff]
        %v1456 = vld [vmem:[#allocation13 + $0x98] sm:$0xff]
        %v1457 = vld [vmem:[#allocation13 + $0xa0] sm:$0xff]
        %v1458 = vld [vmem:[#allocation13 + $0xa8] sm:$0xff]
        %v1459 = vld [vmem:[#allocation13 + $0xb0] sm:$0xff]
        %v1460 = vld [vmem:[#allocation13 + $0xb8] sm:$0xff]
        %v1461 = vld [vmem:[#allocation13 + $0xc0] sm:$0xff]
        %v1462 = vld [vmem:[#allocation13 + $0xc8] sm:$0xff]
        %v1463 = vld [vmem:[#allocation13 + $0xd0] sm:$0xff]
        %v1464 = vld [vmem:[#allocation13 + $0xd8] sm:$0xff]
        %v1465 = vld [vmem:[#allocation13 + $0xe0] sm:$0xff]
        %v1466 = vld [vmem:[#allocation13 + $0xe8] sm:$0xff]
        %v1467 = vld [vmem:[#allocation13 + $0xf0] sm:$0xff]
        %v1468 = vld [vmem:[#allocation13 + $0xf8] sm:$0xff]
        %v1469 = vld [vmem:[#allocation13 + $0x100] sm:$0xff]
        %v1470 = vld [vmem:[#allocation13 + $0x108] sm:$0xff]
        %v1471 = vld [vmem:[#allocation13 + $0x110] sm:$0xff]
        %v1472 = vld [vmem:[#allocation13 + $0x118] sm:$0xff]
        %v1473 = vld [vmem:[#allocation13 + $0x120] sm:$0xff]
        %v1474 = vld [vmem:[#allocation13 + $0x128] sm:$0xff]
        %v1475 = vld [vmem:[#allocation13 + $0x130] sm:$0xff]
        %v1476 = vld [vmem:[#allocation13 + $0x138] sm:$0xff]
        %v1477 = vld [vmem:[#allocation13 + $0x140] sm:$0xff]
        %v1478 = vld [vmem:[#allocation13 + $0x148] sm:$0xff]
        %v1479 = vld [vmem:[#allocation13 + $0x150] sm:$0xff]
        %v1480 = vld [vmem:[#allocation13 + $0x158] sm:$0xff]
        %v1481 = vld [vmem:[#allocation13 + $0x160] sm:$0xff]
        %v1482 = vld [vmem:[#allocation13 + $0x168] sm:$0xff]
        %v1483 = vld [vmem:[#allocation13 + $0x170] sm:$0xff]
        %v1484 = vld [vmem:[#allocation13 + $0x178] sm:$0xff]
        %v1485 = vld [vmem:[#allocation13 + $0x180] sm:$0xff]
        %v1486 = vld [vmem:[#allocation13 + $0x188] sm:$0xff]
        %v1487 = vld [vmem:[#allocation13 + $0x190] sm:$0xff]
        %v1488 = vld [vmem:[#allocation13 + $0x198] sm:$0xff]
        %v1489 = vld [vmem:[#allocation13 + $0x1a0] sm:$0xff]
        %v1490 = vld [vmem:[#allocation13 + $0x1a8] sm:$0xff]
        %v1491 = vld [vmem:[#allocation13 + $0x1b0] sm:$0xff]
        %v1492 = vld [vmem:[#allocation13 + $0x1b8] sm:$0xff]
        %v1493 = vld [vmem:[#allocation13 + $0x1c0] sm:$0xff]
        %v1494 = vld [vmem:[#allocation13 + $0x1c8] sm:$0xff]
        %v1495 = vld [vmem:[#allocation13 + $0x1d0] sm:$0xff]
        %v1496 = vld [vmem:[#allocation13 + $0x1d8] sm:$0xff]
        %v1497 = vld [vmem:[#allocation13 + $0x1e0] sm:$0xff]
        %v1498 = vld [vmem:[#allocation13 + $0x1e8] sm:$0xff]
        %v1499 = vld [vmem:[#allocation13 + $0x1f0] sm:$0xff]
        %v1500 = vld [vmem:[#allocation13 + $0x1f8] sm:$0xff]
        %v1501 = vld [vmem:[#allocation13 + $0x200] sm:$0xff]
        %v1502 = vld [vmem:[#allocation13 + $0x208] sm:$0xff]
        %v1503 = vld [vmem:[#allocation13 + $0x210] sm:$0xff]
        %v1504 = vld [vmem:[#allocation13 + $0x218] sm:$0xff]
        %v1505 = vld [vmem:[#allocation13 + $0x220] sm:$0xff]
        %v1506 = vld [vmem:[#allocation13 + $0x228] sm:$0xff]
        %v1507 = vld [vmem:[#allocation13 + $0x230] sm:$0xff]
        %v1508 = vld [vmem:[#allocation13 + $0x238] sm:$0xff]
        %v1509 = vld [vmem:[#allocation13 + $0x240] sm:$0xff]
        %v1510 = vld [vmem:[#allocation13 + $0x248] sm:$0xff]
        %v1511 = vld [vmem:[#allocation13 + $0x250] sm:$0xff]
        %v1512 = vld [vmem:[#allocation13 + $0x258] sm:$0xff]
        %v1513 = vld [vmem:[#allocation13 + $0x260] sm:$0xff]
        %v1514 = vld [vmem:[#allocation13 + $0x268] sm:$0xff]
        %v1515 = vld [vmem:[#allocation13 + $0x270] sm:$0xff]
        %v1516 = vld [vmem:[#allocation13 + $0x278] sm:$0xff]
        %v1517 = vld [vmem:[#allocation13 + $0x280] sm:$0xff]
        %v1518 = vld [vmem:[#allocation13 + $0x288] sm:$0xff]
        %v1519 = vld [vmem:[#allocation13 + $0x290] sm:$0xff]
        %v1520 = vld [vmem:[#allocation13 + $0x298] sm:$0xff]
        %v1521 = vld [vmem:[#allocation13 + $0x2a0] sm:$0xff]
        %v1522 = vld [vmem:[#allocation13 + $0x2a8] sm:$0xff]
        %v1523 = vld [vmem:[#allocation13 + $0x2b0] sm:$0xff]
        %v1524 = vld [vmem:[#allocation13 + $0x2b8] sm:$0xff]
        %v1525 = vld [vmem:[#allocation13 + $0x2c0] sm:$0xff]
        %v1526 = vld [vmem:[#allocation13 + $0x2c8] sm:$0xff]
        %v1527 = vld [vmem:[#allocation13 + $0x2d0] sm:$0xff]
        %v1528 = vld [vmem:[#allocation13 + $0x2d8] sm:$0xff]
        %v1529 = vld [vmem:[#allocation13 + $0x2e0] sm:$0xff]
        %v1530 = vld [vmem:[#allocation13 + $0x2e8] sm:$0xff]
        %v1531 = vld [vmem:[#allocation13 + $0x2f0] sm:$0xff]
        %v1532 = vld [vmem:[#allocation13 + $0x2f8] sm:$0xff]
        %v1533 = vld [vmem:[#allocation13 + $0x300] sm:$0xff]
        %v1534 = vld [vmem:[#allocation13 + $0x308] sm:$0xff]
        %v1535 = vld [vmem:[#allocation13 + $0x310] sm:$0xff]
        %v1536 = vld [vmem:[#allocation13 + $0x318] sm:$0xff]
        %v1537 = vld [vmem:[#allocation13 + $0x320] sm:$0xff]
        %v1538 = vld [vmem:[#allocation13 + $0x328] sm:$0xff]
        %v1539 = vld [vmem:[#allocation13 + $0x330] sm:$0xff]
        %v1540 = vld [vmem:[#allocation13 + $0x338] sm:$0xff]
        %v1541 = vld [vmem:[#allocation13 + $0x340] sm:$0xff]
        %v1542 = vld [vmem:[#allocation13 + $0x348] sm:$0xff]
        %v1543 = vld [vmem:[#allocation13 + $0x350] sm:$0xff]
        %v1544 = vld [vmem:[#allocation13 + $0x358] sm:$0xff]
        %v1545 = vld [vmem:[#allocation13 + $0x360] sm:$0xff]
        %v1546 = vld [vmem:[#allocation13 + $0x368] sm:$0xff]
        %v1547 = vld [vmem:[#allocation13 + $0x370] sm:$0xff]
        %v1548 = vld [vmem:[#allocation13 + $0x378] sm:$0xff]
        %v1549 = vld [vmem:[#allocation13 + $0x380] sm:$0xff]
        %v1550 = vld [vmem:[#allocation13 + $0x388] sm:$0xff]
        %v1551 = vld [vmem:[#allocation13 + $0x390] sm:$0xff]
        %v1552 = vld [vmem:[#allocation13 + $0x398] sm:$0xff]
        %v1553 = vld [vmem:[#allocation13 + $0x3a0] sm:$0xff]
        %v1554 = vld [vmem:[#allocation13 + $0x3a8] sm:$0xff]
        %v1555 = vld [vmem:[#allocation13 + $0x3b0] sm:$0xff]
        %v1556 = vld [vmem:[#allocation13 + $0x3b8] sm:$0xff]
        %v1557 = vld [vmem:[#allocation13 + $0x3c0] sm:$0xff]
        %v1558 = vld [vmem:[#allocation13 + $0x3c8] sm:$0xff]
        %v1559 = vld [vmem:[#allocation13 + $0x3d0] sm:$0xff]
        %v1560 = vld [vmem:[#allocation13 + $0x3d8] sm:$0xff]
        %v1561 = vld [vmem:[#allocation13 + $0x3e0] sm:$0xff]
        %v1562 = vld [vmem:[#allocation13 + $0x3e8] sm:$0xff]
        %v1563 = vld [vmem:[#allocation13 + $0x3f0] sm:$0xff]
        %v1564 = vld [vmem:[#allocation13 + $0x3f8] sm:$0xff]
        %s1565 = scalar_lea.vmem [#allocation13], 1024
        %v1566 = vld [vmem:[%s1565] sm:$0xff]
        %v1567 = vld [vmem:[%s1565 + $0x8] sm:$0xff]
        %v1568 = vld [vmem:[%s1565 + $0x10] sm:$0xff]
        %v1569 = vld [vmem:[%s1565 + $0x18] sm:$0xff]
        %v1570 = vld [vmem:[%s1565 + $0x20] sm:$0xff]
        %v1571 = vld [vmem:[%s1565 + $0x28] sm:$0xff]
        %v1572 = vld [vmem:[%s1565 + $0x30] sm:$0xff]
        %v1573 = vld [vmem:[%s1565 + $0x38] sm:$0xff]
        %v1574 = vld [vmem:[%s1565 + $0x40] sm:$0xff]
        %v1575 = vld [vmem:[%s1565 + $0x48] sm:$0xff]
        %v1576 = vld [vmem:[%s1565 + $0x50] sm:$0xff]
        %v1577 = vld [vmem:[%s1565 + $0x58] sm:$0xff]
        %v1578 = vld [vmem:[%s1565 + $0x60] sm:$0xff]
        %v1579 = vld [vmem:[%s1565 + $0x68] sm:$0xff]
        %v1580 = vld [vmem:[%s1565 + $0x70] sm:$0xff]
        %v1581 = vld [vmem:[%s1565 + $0x78] sm:$0xff]
        %v1582 = vld [vmem:[%s1565 + $0x80] sm:$0xff]
        %v1583 = vld [vmem:[%s1565 + $0x88] sm:$0xff]
        %v1584 = vld [vmem:[%s1565 + $0x90] sm:$0xff]
        %v1585 = vld [vmem:[%s1565 + $0x98] sm:$0xff]
        %v1586 = vld [vmem:[%s1565 + $0xa0] sm:$0xff]
        %v1587 = vld [vmem:[%s1565 + $0xa8] sm:$0xff]
        %v1588 = vld [vmem:[%s1565 + $0xb0] sm:$0xff]
        %v1589 = vld [vmem:[%s1565 + $0xb8] sm:$0xff]
        %v1590 = vld [vmem:[%s1565 + $0xc0] sm:$0xff]
        %v1591 = vld [vmem:[%s1565 + $0xc8] sm:$0xff]
        %v1592 = vld [vmem:[%s1565 + $0xd0] sm:$0xff]
        %v1593 = vld [vmem:[%s1565 + $0xd8] sm:$0xff]
        %v1594 = vld [vmem:[%s1565 + $0xe0] sm:$0xff]
        %v1595 = vld [vmem:[%s1565 + $0xe8] sm:$0xff]
        %v1596 = vld [vmem:[%s1565 + $0xf0] sm:$0xff]
        %v1597 = vld [vmem:[%s1565 + $0xf8] sm:$0xff]
        %v1598 = vld [vmem:[%s1565 + $0x100] sm:$0xff]
        %v1599 = vld [vmem:[%s1565 + $0x108] sm:$0xff]
        %v1600 = vld [vmem:[%s1565 + $0x110] sm:$0xff]
        %v1601 = vld [vmem:[%s1565 + $0x118] sm:$0xff]
        %v1602 = vld [vmem:[%s1565 + $0x120] sm:$0xff]
        %v1603 = vld [vmem:[%s1565 + $0x128] sm:$0xff]
        %v1604 = vld [vmem:[%s1565 + $0x130] sm:$0xff]
        %v1605 = vld [vmem:[%s1565 + $0x138] sm:$0xff]
        %v1606 = vld [vmem:[%s1565 + $0x140] sm:$0xff]
        %v1607 = vld [vmem:[%s1565 + $0x148] sm:$0xff]
        %v1608 = vld [vmem:[%s1565 + $0x150] sm:$0xff]
        %v1609 = vld [vmem:[%s1565 + $0x158] sm:$0xff]
        %v1610 = vld [vmem:[%s1565 + $0x160] sm:$0xff]
        %v1611 = vld [vmem:[%s1565 + $0x168] sm:$0xff]
        %v1612 = vld [vmem:[%s1565 + $0x170] sm:$0xff]
        %v1613 = vld [vmem:[%s1565 + $0x178] sm:$0xff]
        %v1614 = vld [vmem:[%s1565 + $0x180] sm:$0xff]
        %v1615 = vld [vmem:[%s1565 + $0x188] sm:$0xff]
        %v1616 = vld [vmem:[%s1565 + $0x190] sm:$0xff]
        %v1617 = vld [vmem:[%s1565 + $0x198] sm:$0xff]
        %v1618 = vld [vmem:[%s1565 + $0x1a0] sm:$0xff]
        %v1619 = vld [vmem:[%s1565 + $0x1a8] sm:$0xff]
        %v1620 = vld [vmem:[%s1565 + $0x1b0] sm:$0xff]
        %v1621 = vld [vmem:[%s1565 + $0x1b8] sm:$0xff]
        %v1622 = vld [vmem:[%s1565 + $0x1c0] sm:$0xff]
        %v1623 = vld [vmem:[%s1565 + $0x1c8] sm:$0xff]
        %v1624 = vld [vmem:[%s1565 + $0x1d0] sm:$0xff]
        %v1625 = vld [vmem:[%s1565 + $0x1d8] sm:$0xff]
        %v1626 = vld [vmem:[%s1565 + $0x1e0] sm:$0xff]
        %v1627 = vld [vmem:[%s1565 + $0x1e8] sm:$0xff]
        %v1628 = vld [vmem:[%s1565 + $0x1f0] sm:$0xff]
        %v1629 = vld [vmem:[%s1565 + $0x1f8] sm:$0xff]
        %v1630 = vld [vmem:[%s1565 + $0x200] sm:$0xff]
        %v1631 = vld [vmem:[%s1565 + $0x208] sm:$0xff]
        %v1632 = vld [vmem:[%s1565 + $0x210] sm:$0xff]
        %v1633 = vld [vmem:[%s1565 + $0x218] sm:$0xff]
        %v1634 = vld [vmem:[%s1565 + $0x220] sm:$0xff]
        %v1635 = vld [vmem:[%s1565 + $0x228] sm:$0xff]
        %v1636 = vld [vmem:[%s1565 + $0x230] sm:$0xff]
        %v1637 = vld [vmem:[%s1565 + $0x238] sm:$0xff]
        %v1638 = vld [vmem:[%s1565 + $0x240] sm:$0xff]
        %v1639 = vld [vmem:[%s1565 + $0x248] sm:$0xff]
        %v1640 = vld [vmem:[%s1565 + $0x250] sm:$0xff]
        %v1641 = vld [vmem:[%s1565 + $0x258] sm:$0xff]
        %v1642 = vld [vmem:[%s1565 + $0x260] sm:$0xff]
        %v1643 = vld [vmem:[%s1565 + $0x268] sm:$0xff]
        %v1644 = vld [vmem:[%s1565 + $0x270] sm:$0xff]
        %v1645 = vld [vmem:[%s1565 + $0x278] sm:$0xff]
        %v1646 = vld [vmem:[%s1565 + $0x280] sm:$0xff]
        %v1647 = vld [vmem:[%s1565 + $0x288] sm:$0xff]
        %v1648 = vld [vmem:[%s1565 + $0x290] sm:$0xff]
        %v1649 = vld [vmem:[%s1565 + $0x298] sm:$0xff]
        %v1650 = vld [vmem:[%s1565 + $0x2a0] sm:$0xff]
        %v1651 = vld [vmem:[%s1565 + $0x2a8] sm:$0xff]
        %v1652 = vld [vmem:[%s1565 + $0x2b0] sm:$0xff]
        %v1653 = vld [vmem:[%s1565 + $0x2b8] sm:$0xff]
        %v1654 = vld [vmem:[%s1565 + $0x2c0] sm:$0xff]
        %v1655 = vld [vmem:[%s1565 + $0x2c8] sm:$0xff]
        %v1656 = vld [vmem:[%s1565 + $0x2d0] sm:$0xff]
        %v1657 = vld [vmem:[%s1565 + $0x2d8] sm:$0xff]
        %v1658 = vld [vmem:[%s1565 + $0x2e0] sm:$0xff]
        %v1659 = vld [vmem:[%s1565 + $0x2e8] sm:$0xff]
        %v1660 = vld [vmem:[%s1565 + $0x2f0] sm:$0xff]
        %v1661 = vld [vmem:[%s1565 + $0x2f8] sm:$0xff]
        %v1662 = vld [vmem:[%s1565 + $0x300] sm:$0xff]
        %v1663 = vld [vmem:[%s1565 + $0x308] sm:$0xff]
        %v1664 = vld [vmem:[%s1565 + $0x310] sm:$0xff]
        %v1665 = vld [vmem:[%s1565 + $0x318] sm:$0xff]
        %v1666 = vld [vmem:[%s1565 + $0x320] sm:$0xff]
        %v1667 = vld [vmem:[%s1565 + $0x328] sm:$0xff]
        %v1668 = vld [vmem:[%s1565 + $0x330] sm:$0xff]
        %v1669 = vld [vmem:[%s1565 + $0x338] sm:$0xff]
        %v1670 = vld [vmem:[%s1565 + $0x340] sm:$0xff]
        %v1671 = vld [vmem:[%s1565 + $0x348] sm:$0xff]
        %v1672 = vld [vmem:[%s1565 + $0x350] sm:$0xff]
        %v1673 = vld [vmem:[%s1565 + $0x358] sm:$0xff]
        %v1674 = vld [vmem:[%s1565 + $0x360] sm:$0xff]
        %v1675 = vld [vmem:[%s1565 + $0x368] sm:$0xff]
        %v1676 = vld [vmem:[%s1565 + $0x370] sm:$0xff]
        %v1677 = vld [vmem:[%s1565 + $0x378] sm:$0xff]
        %v1678 = vld [vmem:[%s1565 + $0x380] sm:$0xff]
        %v1679 = vld [vmem:[%s1565 + $0x388] sm:$0xff]
        %v1680 = vld [vmem:[%s1565 + $0x390] sm:$0xff]
        %v1681 = vld [vmem:[%s1565 + $0x398] sm:$0xff]
        %v1682 = vld [vmem:[%s1565 + $0x3a0] sm:$0xff]
        %v1683 = vld [vmem:[%s1565 + $0x3a8] sm:$0xff]
        %v1684 = vld [vmem:[%s1565 + $0x3b0] sm:$0xff]
        %v1685 = vld [vmem:[%s1565 + $0x3b8] sm:$0xff]
        %v1686 = vld [vmem:[%s1565 + $0x3c0] sm:$0xff]
        %v1687 = vld [vmem:[%s1565 + $0x3c8] sm:$0xff]
        %v1688 = vld [vmem:[%s1565 + $0x3d0] sm:$0xff]
        %v1689 = vld [vmem:[%s1565 + $0x3d8] sm:$0xff]
        %v1690 = vld [vmem:[%s1565 + $0x3e0] sm:$0xff]
        %v1691 = vld [vmem:[%s1565 + $0x3e8] sm:$0xff]
        %v1692 = vld [vmem:[%s1565 + $0x3f0] sm:$0xff]
        %v1693 = vld [vmem:[%s1565 + $0x3f8] sm:$0xff]
        %v1822 = vunpack.c.l.b16 %v1566
        %v1823 = vunpack.c.h.b16 %v1566
        %v1824 = vunpack.c.l.b16 %v1567
        %v1825 = vunpack.c.h.b16 %v1567
        %v1826 = vunpack.c.l.b16 %v1568
        %v1827 = vunpack.c.h.b16 %v1568
        %v1828 = vunpack.c.l.b16 %v1569
        %v1829 = vunpack.c.h.b16 %v1569
        %v1830 = vunpack.c.l.b16 %v1570
        %v1831 = vunpack.c.h.b16 %v1570
        %v1832 = vunpack.c.l.b16 %v1571
        %v1833 = vunpack.c.h.b16 %v1571
        %v1834 = vunpack.c.l.b16 %v1572
        %v1835 = vunpack.c.h.b16 %v1572
        %v1836 = vunpack.c.l.b16 %v1573
        %v1837 = vunpack.c.h.b16 %v1573
        %v1838 = vunpack.c.l.b16 %v1574
        %v1839 = vunpack.c.h.b16 %v1574
        %v1840 = vunpack.c.l.b16 %v1575
        %v1841 = vunpack.c.h.b16 %v1575
        %v1842 = vunpack.c.l.b16 %v1576
        %v1843 = vunpack.c.h.b16 %v1576
        %v1844 = vunpack.c.l.b16 %v1577
        %v1845 = vunpack.c.h.b16 %v1577
        %v1846 = vunpack.c.l.b16 %v1578
        %v1847 = vunpack.c.h.b16 %v1578
        %v1848 = vunpack.c.l.b16 %v1579
        %v1849 = vunpack.c.h.b16 %v1579
        %v1850 = vunpack.c.l.b16 %v1580
        %v1851 = vunpack.c.h.b16 %v1580
        %v1852 = vunpack.c.l.b16 %v1581
        %v1853 = vunpack.c.h.b16 %v1581
        %v1854 = vunpack.c.l.b16 %v1582
        %v1855 = vunpack.c.h.b16 %v1582
        %v1856 = vunpack.c.l.b16 %v1583
        %v1857 = vunpack.c.h.b16 %v1583
        %v1858 = vunpack.c.l.b16 %v1584
        %v1859 = vunpack.c.h.b16 %v1584
        %v1860 = vunpack.c.l.b16 %v1585
        %v1861 = vunpack.c.h.b16 %v1585
        %v1862 = vunpack.c.l.b16 %v1586
        %v1863 = vunpack.c.h.b16 %v1586
        %v1864 = vunpack.c.l.b16 %v1587
        %v1865 = vunpack.c.h.b16 %v1587
        %v1866 = vunpack.c.l.b16 %v1588
        %v1867 = vunpack.c.h.b16 %v1588
        %v1868 = vunpack.c.l.b16 %v1589
        %v1869 = vunpack.c.h.b16 %v1589
        %v1870 = vunpack.c.l.b16 %v1590
        %v1871 = vunpack.c.h.b16 %v1590
        %v1872 = vunpack.c.l.b16 %v1591
        %v1873 = vunpack.c.h.b16 %v1591
        %v1874 = vunpack.c.l.b16 %v1592
        %v1875 = vunpack.c.h.b16 %v1592
        %v1876 = vunpack.c.l.b16 %v1593
        %v1877 = vunpack.c.h.b16 %v1593
        %v1878 = vunpack.c.l.b16 %v1594
        %v1879 = vunpack.c.h.b16 %v1594
        %v1880 = vunpack.c.l.b16 %v1595
        %v1881 = vunpack.c.h.b16 %v1595
        %v1882 = vunpack.c.l.b16 %v1596
        %v1883 = vunpack.c.h.b16 %v1596
        %v1884 = vunpack.c.l.b16 %v1597
        %v1885 = vunpack.c.h.b16 %v1597
        %v1886 = vunpack.c.l.b16 %v1598
        %v1887 = vunpack.c.h.b16 %v1598
        %v1888 = vunpack.c.l.b16 %v1599
        %v1889 = vunpack.c.h.b16 %v1599
        %v1890 = vunpack.c.l.b16 %v1600
        %v1891 = vunpack.c.h.b16 %v1600
        %v1892 = vunpack.c.l.b16 %v1601
        %v1893 = vunpack.c.h.b16 %v1601
        %v1894 = vunpack.c.l.b16 %v1602
        %v1895 = vunpack.c.h.b16 %v1602
        %v1896 = vunpack.c.l.b16 %v1603
        %v1897 = vunpack.c.h.b16 %v1603
        %v1898 = vunpack.c.l.b16 %v1604
        %v1899 = vunpack.c.h.b16 %v1604
        %v1900 = vunpack.c.l.b16 %v1605
        %v1901 = vunpack.c.h.b16 %v1605
        %v1902 = vunpack.c.l.b16 %v1606
        %v1903 = vunpack.c.h.b16 %v1606
        %v1904 = vunpack.c.l.b16 %v1607
        %v1905 = vunpack.c.h.b16 %v1607
        %v1906 = vunpack.c.l.b16 %v1608
        %v1907 = vunpack.c.h.b16 %v1608
        %v1908 = vunpack.c.l.b16 %v1609
        %v1909 = vunpack.c.h.b16 %v1609
        %v1910 = vunpack.c.l.b16 %v1610
        %v1911 = vunpack.c.h.b16 %v1610
        %v1912 = vunpack.c.l.b16 %v1611
        %v1913 = vunpack.c.h.b16 %v1611
        %v1914 = vunpack.c.l.b16 %v1612
        %v1915 = vunpack.c.h.b16 %v1612
        %v1916 = vunpack.c.l.b16 %v1613
        %v1917 = vunpack.c.h.b16 %v1613
        %v1918 = vunpack.c.l.b16 %v1614
        %v1919 = vunpack.c.h.b16 %v1614
        %v1920 = vunpack.c.l.b16 %v1615
        %v1921 = vunpack.c.h.b16 %v1615
        %v1922 = vunpack.c.l.b16 %v1616
        %v1923 = vunpack.c.h.b16 %v1616
        %v1924 = vunpack.c.l.b16 %v1617
        %v1925 = vunpack.c.h.b16 %v1617
        %v1926 = vunpack.c.l.b16 %v1618
        %v1927 = vunpack.c.h.b16 %v1618
        %v1928 = vunpack.c.l.b16 %v1619
        %v1929 = vunpack.c.h.b16 %v1619
        %v1930 = vunpack.c.l.b16 %v1620
        %v1931 = vunpack.c.h.b16 %v1620
        %v1932 = vunpack.c.l.b16 %v1621
        %v1933 = vunpack.c.h.b16 %v1621
        %v1934 = vunpack.c.l.b16 %v1622
        %v1935 = vunpack.c.h.b16 %v1622
        %v1936 = vunpack.c.l.b16 %v1623
        %v1937 = vunpack.c.h.b16 %v1623
        %v1938 = vunpack.c.l.b16 %v1624
        %v1939 = vunpack.c.h.b16 %v1624
        %v1940 = vunpack.c.l.b16 %v1625
        %v1941 = vunpack.c.h.b16 %v1625
        %v1942 = vunpack.c.l.b16 %v1626
        %v1943 = vunpack.c.h.b16 %v1626
        %v1944 = vunpack.c.l.b16 %v1627
        %v1945 = vunpack.c.h.b16 %v1627
        %v1946 = vunpack.c.l.b16 %v1628
        %v1947 = vunpack.c.h.b16 %v1628
        %v1948 = vunpack.c.l.b16 %v1629
        %v1949 = vunpack.c.h.b16 %v1629
        %v1950 = vunpack.c.l.b16 %v1630
        %v1951 = vunpack.c.h.b16 %v1630
        %v1952 = vunpack.c.l.b16 %v1631
        %v1953 = vunpack.c.h.b16 %v1631
        %v1954 = vunpack.c.l.b16 %v1632
        %v1955 = vunpack.c.h.b16 %v1632
        %v1956 = vunpack.c.l.b16 %v1633
        %v1957 = vunpack.c.h.b16 %v1633
        %v1958 = vunpack.c.l.b16 %v1634
        %v1959 = vunpack.c.h.b16 %v1634
        %v1960 = vunpack.c.l.b16 %v1635
        %v1961 = vunpack.c.h.b16 %v1635
        %v1962 = vunpack.c.l.b16 %v1636
        %v1963 = vunpack.c.h.b16 %v1636
        %v1964 = vunpack.c.l.b16 %v1637
        %v1965 = vunpack.c.h.b16 %v1637
        %v1966 = vunpack.c.l.b16 %v1638
        %v1967 = vunpack.c.h.b16 %v1638
        %v1968 = vunpack.c.l.b16 %v1639
        %v1969 = vunpack.c.h.b16 %v1639
        %v1970 = vunpack.c.l.b16 %v1640
        %v1971 = vunpack.c.h.b16 %v1640
        %v1972 = vunpack.c.l.b16 %v1641
        %v1973 = vunpack.c.h.b16 %v1641
        %v1974 = vunpack.c.l.b16 %v1642
        %v1975 = vunpack.c.h.b16 %v1642
        %v1976 = vunpack.c.l.b16 %v1643
        %v1977 = vunpack.c.h.b16 %v1643
        %v1978 = vunpack.c.l.b16 %v1644
        %v1979 = vunpack.c.h.b16 %v1644
        %v1980 = vunpack.c.l.b16 %v1645
        %v1981 = vunpack.c.h.b16 %v1645
        %v1982 = vunpack.c.l.b16 %v1646
        %v1983 = vunpack.c.h.b16 %v1646
        %v1984 = vunpack.c.l.b16 %v1647
        %v1985 = vunpack.c.h.b16 %v1647
        %v1986 = vunpack.c.l.b16 %v1648
        %v1987 = vunpack.c.h.b16 %v1648
        %v1988 = vunpack.c.l.b16 %v1649
        %v1989 = vunpack.c.h.b16 %v1649
        %v1990 = vunpack.c.l.b16 %v1650
        %v1991 = vunpack.c.h.b16 %v1650
        %v1992 = vunpack.c.l.b16 %v1651
        %v1993 = vunpack.c.h.b16 %v1651
        %v1994 = vunpack.c.l.b16 %v1652
        %v1995 = vunpack.c.h.b16 %v1652
        %v1996 = vunpack.c.l.b16 %v1653
        %v1997 = vunpack.c.h.b16 %v1653
        %v1998 = vunpack.c.l.b16 %v1654
        %v1999 = vunpack.c.h.b16 %v1654
        %v2000 = vunpack.c.l.b16 %v1655
        %v2001 = vunpack.c.h.b16 %v1655
        %v2002 = vunpack.c.l.b16 %v1656
        %v2003 = vunpack.c.h.b16 %v1656
        %v2004 = vunpack.c.l.b16 %v1657
        %v2005 = vunpack.c.h.b16 %v1657
        %v2006 = vunpack.c.l.b16 %v1658
        %v2007 = vunpack.c.h.b16 %v1658
        %v2008 = vunpack.c.l.b16 %v1659
        %v2009 = vunpack.c.h.b16 %v1659
        %v2010 = vunpack.c.l.b16 %v1660
        %v2011 = vunpack.c.h.b16 %v1660
        %v2012 = vunpack.c.l.b16 %v1661
        %v2013 = vunpack.c.h.b16 %v1661
        %v2014 = vunpack.c.l.b16 %v1662
        %v2015 = vunpack.c.h.b16 %v1662
        %v2016 = vunpack.c.l.b16 %v1663
        %v2017 = vunpack.c.h.b16 %v1663
        %v2018 = vunpack.c.l.b16 %v1664
        %v2019 = vunpack.c.h.b16 %v1664
        %v2020 = vunpack.c.l.b16 %v1665
        %v2021 = vunpack.c.h.b16 %v1665
        %v2022 = vunpack.c.l.b16 %v1666
        %v2023 = vunpack.c.h.b16 %v1666
        %v2024 = vunpack.c.l.b16 %v1667
        %v2025 = vunpack.c.h.b16 %v1667
        %v2026 = vunpack.c.l.b16 %v1668
        %v2027 = vunpack.c.h.b16 %v1668
        %v2028 = vunpack.c.l.b16 %v1669
        %v2029 = vunpack.c.h.b16 %v1669
        %v2030 = vunpack.c.l.b16 %v1670
        %v2031 = vunpack.c.h.b16 %v1670
        %v2032 = vunpack.c.l.b16 %v1671
        %v2033 = vunpack.c.h.b16 %v1671
        %v2034 = vunpack.c.l.b16 %v1672
        %v2035 = vunpack.c.h.b16 %v1672
        %v2036 = vunpack.c.l.b16 %v1673
        %v2037 = vunpack.c.h.b16 %v1673
        %v2038 = vunpack.c.l.b16 %v1674
        %v2039 = vunpack.c.h.b16 %v1674
        %v2040 = vunpack.c.l.b16 %v1675
        %v2041 = vunpack.c.h.b16 %v1675
        %v2042 = vunpack.c.l.b16 %v1676
        %v2043 = vunpack.c.h.b16 %v1676
        %v2044 = vunpack.c.l.b16 %v1677
        %v2045 = vunpack.c.h.b16 %v1677
        %v2046 = vunpack.c.l.b16 %v1678
        %v2047 = vunpack.c.h.b16 %v1678
        %v2048 = vunpack.c.l.b16 %v1679
        %v2049 = vunpack.c.h.b16 %v1679
        %v2050 = vunpack.c.l.b16 %v1680
        %v2051 = vunpack.c.h.b16 %v1680
        %v2052 = vunpack.c.l.b16 %v1681
        %v2053 = vunpack.c.h.b16 %v1681
        %v2054 = vunpack.c.l.b16 %v1682
        %v2055 = vunpack.c.h.b16 %v1682
        %v2056 = vunpack.c.l.b16 %v1683
        %v2057 = vunpack.c.h.b16 %v1683
        %v2058 = vunpack.c.l.b16 %v1684
        %v2059 = vunpack.c.h.b16 %v1684
        %v2060 = vunpack.c.l.b16 %v1685
        %v2061 = vunpack.c.h.b16 %v1685
        %v2062 = vunpack.c.l.b16 %v1686
        %v2063 = vunpack.c.h.b16 %v1686
        %v2064 = vunpack.c.l.b16 %v1687
        %v2065 = vunpack.c.h.b16 %v1687
        %v2066 = vunpack.c.l.b16 %v1688
        %v2067 = vunpack.c.h.b16 %v1688
        %v2068 = vunpack.c.l.b16 %v1689
        %v2069 = vunpack.c.h.b16 %v1689
        %v2070 = vunpack.c.l.b16 %v1690
        %v2071 = vunpack.c.h.b16 %v1690
        %v2072 = vunpack.c.l.b16 %v1691
        %v2073 = vunpack.c.h.b16 %v1691
        %v2074 = vunpack.c.l.b16 %v1692
        %v2075 = vunpack.c.h.b16 %v1692
        %v2076 = vunpack.c.l.b16 %v1693
        %v2077 = vunpack.c.h.b16 %v1693
        %v2078 = vpack.c.b16 %v1826, %v1822
        %v2079 = vpack.c.b16 %v1827, %v1823
        %v2080 = vpack.c.b16 %v1828, %v1824
        %v2081 = vpack.c.b16 %v1829, %v1825
        %v2082 = vpack.c.b16 %v1834, %v1830
        %v2083 = vpack.c.b16 %v1835, %v1831
        %v2084 = vpack.c.b16 %v1836, %v1832
        %v2085 = vpack.c.b16 %v1837, %v1833
        %v2086 = vpack.c.b16 %v1842, %v1838
        %v2087 = vpack.c.b16 %v1843, %v1839
        %v2088 = vpack.c.b16 %v1844, %v1840
        %v2089 = vpack.c.b16 %v1845, %v1841
        %v2090 = vpack.c.b16 %v1850, %v1846
        %v2091 = vpack.c.b16 %v1851, %v1847
        %v2092 = vpack.c.b16 %v1852, %v1848
        %v2093 = vpack.c.b16 %v1853, %v1849
        %v2094 = vpack.c.b16 %v1858, %v1854
        %v2095 = vpack.c.b16 %v1859, %v1855
        %v2096 = vpack.c.b16 %v1860, %v1856
        %v2097 = vpack.c.b16 %v1861, %v1857
        %v2098 = vpack.c.b16 %v1866, %v1862
        %v2099 = vpack.c.b16 %v1867, %v1863
        %v2100 = vpack.c.b16 %v1868, %v1864
        %v2101 = vpack.c.b16 %v1869, %v1865
        %v2102 = vpack.c.b16 %v1874, %v1870
        %v2103 = vpack.c.b16 %v1875, %v1871
        %v2104 = vpack.c.b16 %v1876, %v1872
        %v2105 = vpack.c.b16 %v1877, %v1873
        %v2106 = vpack.c.b16 %v1882, %v1878
        %v2107 = vpack.c.b16 %v1883, %v1879
        %v2108 = vpack.c.b16 %v1884, %v1880
        %v2109 = vpack.c.b16 %v1885, %v1881
        %v2110 = vpack.c.b16 %v1890, %v1886
        %v2111 = vpack.c.b16 %v1891, %v1887
        %v2112 = vpack.c.b16 %v1892, %v1888
        %v2113 = vpack.c.b16 %v1893, %v1889
        %v2114 = vpack.c.b16 %v1898, %v1894
        %v2115 = vpack.c.b16 %v1899, %v1895
        %v2116 = vpack.c.b16 %v1900, %v1896
        %v2117 = vpack.c.b16 %v1901, %v1897
        %v2118 = vpack.c.b16 %v1906, %v1902
        %v2119 = vpack.c.b16 %v1907, %v1903
        %v2120 = vpack.c.b16 %v1908, %v1904
        %v2121 = vpack.c.b16 %v1909, %v1905
        %v2122 = vpack.c.b16 %v1914, %v1910
        %v2123 = vpack.c.b16 %v1915, %v1911
        %v2124 = vpack.c.b16 %v1916, %v1912
        %v2125 = vpack.c.b16 %v1917, %v1913
        %v2126 = vpack.c.b16 %v1922, %v1918
        %v2127 = vpack.c.b16 %v1923, %v1919
        %v2128 = vpack.c.b16 %v1924, %v1920
        %v2129 = vpack.c.b16 %v1925, %v1921
        %v2130 = vpack.c.b16 %v1930, %v1926
        %v2131 = vpack.c.b16 %v1931, %v1927
        %v2132 = vpack.c.b16 %v1932, %v1928
        %v2133 = vpack.c.b16 %v1933, %v1929
        %v2134 = vpack.c.b16 %v1938, %v1934
        %v2135 = vpack.c.b16 %v1939, %v1935
        %v2136 = vpack.c.b16 %v1940, %v1936
        %v2137 = vpack.c.b16 %v1941, %v1937
        %v2138 = vpack.c.b16 %v1946, %v1942
        %v2139 = vpack.c.b16 %v1947, %v1943
        %v2140 = vpack.c.b16 %v1948, %v1944
        %v2141 = vpack.c.b16 %v1949, %v1945
        %v2142 = vpack.c.b16 %v1954, %v1950
        %v2143 = vpack.c.b16 %v1955, %v1951
        %v2144 = vpack.c.b16 %v1956, %v1952
        %v2145 = vpack.c.b16 %v1957, %v1953
        %v2146 = vpack.c.b16 %v1962, %v1958
        %v2147 = vpack.c.b16 %v1963, %v1959
        %v2148 = vpack.c.b16 %v1964, %v1960
        %v2149 = vpack.c.b16 %v1965, %v1961
        %v2150 = vpack.c.b16 %v1970, %v1966
        %v2151 = vpack.c.b16 %v1971, %v1967
        %v2152 = vpack.c.b16 %v1972, %v1968
        %v2153 = vpack.c.b16 %v1973, %v1969
        %v2154 = vpack.c.b16 %v1978, %v1974
        %v2155 = vpack.c.b16 %v1979, %v1975
        %v2156 = vpack.c.b16 %v1980, %v1976
        %v2157 = vpack.c.b16 %v1981, %v1977
        %v2158 = vpack.c.b16 %v1986, %v1982
        %v2159 = vpack.c.b16 %v1987, %v1983
        %v2160 = vpack.c.b16 %v1988, %v1984
        %v2161 = vpack.c.b16 %v1989, %v1985
        %v2162 = vpack.c.b16 %v1994, %v1990
        %v2163 = vpack.c.b16 %v1995, %v1991
        %v2164 = vpack.c.b16 %v1996, %v1992
        %v2165 = vpack.c.b16 %v1997, %v1993
        %v2166 = vpack.c.b16 %v2002, %v1998
        %v2167 = vpack.c.b16 %v2003, %v1999
        %v2168 = vpack.c.b16 %v2004, %v2000
        %v2169 = vpack.c.b16 %v2005, %v2001
        %v2170 = vpack.c.b16 %v2010, %v2006
        %v2171 = vpack.c.b16 %v2011, %v2007
        %v2172 = vpack.c.b16 %v2012, %v2008
        %v2173 = vpack.c.b16 %v2013, %v2009
        %v2174 = vpack.c.b16 %v2018, %v2014
        %v2175 = vpack.c.b16 %v2019, %v2015
        %v2176 = vpack.c.b16 %v2020, %v2016
        %v2177 = vpack.c.b16 %v2021, %v2017
        %v2178 = vpack.c.b16 %v2026, %v2022
        %v2179 = vpack.c.b16 %v2027, %v2023
        %v2180 = vpack.c.b16 %v2028, %v2024
        %v2181 = vpack.c.b16 %v2029, %v2025
        %v2182 = vpack.c.b16 %v2034, %v2030
        %v2183 = vpack.c.b16 %v2035, %v2031
        %v2184 = vpack.c.b16 %v2036, %v2032
        %v2185 = vpack.c.b16 %v2037, %v2033
        %v2186 = vpack.c.b16 %v2042, %v2038
        %v2187 = vpack.c.b16 %v2043, %v2039
        %v2188 = vpack.c.b16 %v2044, %v2040
        %v2189 = vpack.c.b16 %v2045, %v2041
        %v2190 = vpack.c.b16 %v2050, %v2046
        %v2191 = vpack.c.b16 %v2051, %v2047
        %v2192 = vpack.c.b16 %v2052, %v2048
        %v2193 = vpack.c.b16 %v2053, %v2049
        %v2194 = vpack.c.b16 %v2058, %v2054
        %v2195 = vpack.c.b16 %v2059, %v2055
        %v2196 = vpack.c.b16 %v2060, %v2056
        %v2197 = vpack.c.b16 %v2061, %v2057
        %v2198 = vpack.c.b16 %v2066, %v2062
        %v2199 = vpack.c.b16 %v2067, %v2063
        %v2200 = vpack.c.b16 %v2068, %v2064
        %v2201 = vpack.c.b16 %v2069, %v2065
        %v2202 = vpack.c.b16 %v2074, %v2070
        %v2203 = vpack.c.b16 %v2075, %v2071
        %v2204 = vpack.c.b16 %v2076, %v2072
        %v2205 = vpack.c.b16 %v2077, %v2073
        %2334 = vmatprep.subr.bf16.mxu0 %v2079
        %2335 = vmatpush1.bf16.msra.mxu0 %v2078
        %2336 = vmatprep.subr.bf16.mxu0 %v2083
        %2337 = vmatpush1.bf16.msra.mxu0 %v2082
        %2338 = vmatprep.subr.bf16.mxu0 %v2087
        %2339 = vmatpush1.bf16.msra.mxu0 %v2086
        %2340 = vmatprep.subr.bf16.mxu0 %v2091
        %2341 = vmatpush1.bf16.msra.mxu0 %v2090
        %2342 = vmatprep.subr.bf16.mxu0 %v2095
        %2343 = vmatpush1.bf16.msra.mxu0 %v2094
        %2344 = vmatprep.subr.bf16.mxu0 %v2099
        %2345 = vmatpush1.bf16.msra.mxu0 %v2098
        %2346 = vmatprep.subr.bf16.mxu0 %v2103
        %2347 = vmatpush1.bf16.msra.mxu0 %v2102
        %2348 = vmatprep.subr.bf16.mxu0 %v2107
        %2349 = vmatpush1.bf16.msra.mxu0 %v2106
        %2350 = vmatprep.subr.bf16.mxu0 %v2111
        %2351 = vmatpush1.bf16.msra.mxu0 %v2110
        %2352 = vmatprep.subr.bf16.mxu0 %v2115
        %2353 = vmatpush1.bf16.msra.mxu0 %v2114
        %2354 = vmatprep.subr.bf16.mxu0 %v2119
        %2355 = vmatpush1.bf16.msra.mxu0 %v2118
        %2356 = vmatprep.subr.bf16.mxu0 %v2123
        %2357 = vmatpush1.bf16.msra.mxu0 %v2122
        %2358 = vmatprep.subr.bf16.mxu0 %v2127
        %2359 = vmatpush1.bf16.msra.mxu0 %v2126
        %2360 = vmatprep.subr.bf16.mxu0 %v2131
        %2361 = vmatpush1.bf16.msra.mxu0 %v2130
        %2362 = vmatprep.subr.bf16.mxu0 %v2135
        %2363 = vmatpush1.bf16.msra.mxu0 %v2134
        %2364 = vmatprep.subr.bf16.mxu0 %v2139
        %2365 = vmatpush1.bf16.msra.mxu0 %v2138
        %2366 = vmatprep.mubr.bf16.mxu0 %v1254
        %2367 = vmatmul.mubr.bf16.gmra.mrb[0].mxu0 %v1253
        %v2368 = vpop.f32.mrb[0].mxu0
        %v2369 = vadd.f32 0.0, %v2368
        %v2370 = vpop.f32.mrb[0].mxu0
        %v2371 = vadd.f32 0.0, %v2370
        %v2372 = vpop.f32.mrb[0].mxu0
        %v2373 = vadd.f32 0.0, %v2372
        %v2374 = vpop.f32.mrb[0].mxu0
        %v2375 = vadd.f32 0.0, %v2374
        %2376 = vdwg.mxu0
        %2377 = vmatprep.subr.bf16.mxu0 %v2143
        %2378 = vmatpush1.bf16.msra.mxu0 %v2142
        %2379 = vmatprep.subr.bf16.mxu0 %v2147
        %2380 = vmatpush1.bf16.msra.mxu0 %v2146
        %2381 = vmatprep.subr.bf16.mxu0 %v2151
        %2382 = vmatpush1.bf16.msra.mxu0 %v2150
        %2383 = vmatprep.subr.bf16.mxu0 %v2155
        %2384 = vmatpush1.bf16.msra.mxu0 %v2154
        %2385 = vmatprep.subr.bf16.mxu0 %v2159
        %2386 = vmatpush1.bf16.msra.mxu0 %v2158
        %2387 = vmatprep.subr.bf16.mxu0 %v2163
        %2388 = vmatpush1.bf16.msra.mxu0 %v2162
        %2389 = vmatprep.subr.bf16.mxu0 %v2167
        %2390 = vmatpush1.bf16.msra.mxu0 %v2166
        %2391 = vmatprep.subr.bf16.mxu0 %v2171
        %2392 = vmatpush1.bf16.msra.mxu0 %v2170
        %2393 = vmatprep.subr.bf16.mxu0 %v2175
        %2394 = vmatpush1.bf16.msra.mxu0 %v2174
        %2395 = vmatprep.subr.bf16.mxu0 %v2179
        %2396 = vmatpush1.bf16.msra.mxu0 %v2178
        %2397 = vmatprep.subr.bf16.mxu0 %v2183
        %2398 = vmatpush1.bf16.msra.mxu0 %v2182
        %2399 = vmatprep.subr.bf16.mxu0 %v2187
        %2400 = vmatpush1.bf16.msra.mxu0 %v2186
        %2401 = vmatprep.subr.bf16.mxu0 %v2191
        %2402 = vmatpush1.bf16.msra.mxu0 %v2190
        %2403 = vmatprep.subr.bf16.mxu0 %v2195
        %2404 = vmatpush1.bf16.msra.mxu0 %v2194
        %2405 = vmatprep.subr.bf16.mxu0 %v2199
        %2406 = vmatpush1.bf16.msra.mxu0 %v2198
        %2407 = vmatprep.subr.bf16.mxu0 %v2203
        %2408 = vmatpush1.bf16.msra.mxu0 %v2202
        %2409 = vmatprep.mubr.bf16.mxu0 %v1256
        %2410 = vmatmul.mubr.bf16.gmra.mrb[0].mxu0 %v1255
        %v2411 = vpop.f32.mrb[0].mxu0
        %v2412 = vadd.f32 %v2369, %v2411
        %v2413 = vpop.f32.mrb[0].mxu0
        %v2414 = vadd.f32 %v2371, %v2413
        %v2415 = vpop.f32.mrb[0].mxu0
        %v2416 = vadd.f32 %v2373, %v2415
        %v2417 = vpop.f32.mrb[0].mxu0
        %v2418 = vadd.f32 %v2375, %v2417
        %2419 = vdwg.mxu0
        %2420 = vmatprep.subr.bf16.mxu0 %v2081
        %2421 = vmatpush1.bf16.msra.mxu0 %v2080
        %2422 = vmatprep.subr.bf16.mxu0 %v2085
        %2423 = vmatpush1.bf16.msra.mxu0 %v2084
        %2424 = vmatprep.subr.bf16.mxu0 %v2089
        %2425 = vmatpush1.bf16.msra.mxu0 %v2088
        %2426 = vmatprep.subr.bf16.mxu0 %v2093
        %2427 = vmatpush1.bf16.msra.mxu0 %v2092
        %2428 = vmatprep.subr.bf16.mxu0 %v2097
        %2429 = vmatpush1.bf16.msra.mxu0 %v2096
        %2430 = vmatprep.subr.bf16.mxu0 %v2101
        %2431 = vmatpush1.bf16.msra.mxu0 %v2100
        %2432 = vmatprep.subr.bf16.mxu0 %v2105
        %2433 = vmatpush1.bf16.msra.mxu0 %v2104
        %2434 = vmatprep.subr.bf16.mxu0 %v2109
        %2435 = vmatpush1.bf16.msra.mxu0 %v2108
        %2436 = vmatprep.subr.bf16.mxu0 %v2113
        %2437 = vmatpush1.bf16.msra.mxu0 %v2112
        %2438 = vmatprep.subr.bf16.mxu0 %v2117
        %2439 = vmatpush1.bf16.msra.mxu0 %v2116
        %2440 = vmatprep.subr.bf16.mxu0 %v2121
        %2441 = vmatpush1.bf16.msra.mxu0 %v2120
        %2442 = vmatprep.subr.bf16.mxu0 %v2125
        %2443 = vmatpush1.bf16.msra.mxu0 %v2124
        %2444 = vmatprep.subr.bf16.mxu0 %v2129
        %2445 = vmatpush1.bf16.msra.mxu0 %v2128
        %2446 = vmatprep.subr.bf16.mxu0 %v2133
        %2447 = vmatpush1.bf16.msra.mxu0 %v2132
        %2448 = vmatprep.subr.bf16.mxu0 %v2137
        %2449 = vmatpush1.bf16.msra.mxu0 %v2136
        %2450 = vmatprep.subr.bf16.mxu0 %v2141
        %2451 = vmatpush1.bf16.msra.mxu0 %v2140
        %2452 = vmatprep.mubr.bf16.mxu0 %v1254
        %2453 = vmatmul.mubr.bf16.gmra.mrb[0].mxu0 %v1253
        %v2454 = vpop.f32.mrb[0].mxu0
        %v2455 = vadd.f32 0.0, %v2454
        %v2456 = vpop.f32.mrb[0].mxu0
        %v2457 = vadd.f32 0.0, %v2456
        %v2458 = vpop.f32.mrb[0].mxu0
        %v2459 = vadd.f32 0.0, %v2458
        %v2460 = vpop.f32.mrb[0].mxu0
        %v2461 = vadd.f32 0.0, %v2460
        %2462 = vdwg.mxu0
        %2463 = vmatprep.subr.bf16.mxu0 %v2145
        %2464 = vmatpush1.bf16.msra.mxu0 %v2144
        %2465 = vmatprep.subr.bf16.mxu0 %v2149
        %2466 = vmatpush1.bf16.msra.mxu0 %v2148
        %2467 = vmatprep.subr.bf16.mxu0 %v2153
        %2468 = vmatpush1.bf16.msra.mxu0 %v2152
        %2469 = vmatprep.subr.bf16.mxu0 %v2157
        %2470 = vmatpush1.bf16.msra.mxu0 %v2156
        %2471 = vmatprep.subr.bf16.mxu0 %v2161
        %2472 = vmatpush1.bf16.msra.mxu0 %v2160
        %2473 = vmatprep.subr.bf16.mxu0 %v2165
        %2474 = vmatpush1.bf16.msra.mxu0 %v2164
        %2475 = vmatprep.subr.bf16.mxu0 %v2169
        %2476 = vmatpush1.bf16.msra.mxu0 %v2168
        %2477 = vmatprep.subr.bf16.mxu0 %v2173
        %2478 = vmatpush1.bf16.msra.mxu0 %v2172
        %2479 = vmatprep.subr.bf16.mxu0 %v2177
        %2480 = vmatpush1.bf16.msra.mxu0 %v2176
        %2481 = vmatprep.subr.bf16.mxu0 %v2181
        %2482 = vmatpush1.bf16.msra.mxu0 %v2180
        %2483 = vmatprep.subr.bf16.mxu0 %v2185
        %2484 = vmatpush1.bf16.msra.mxu0 %v2184
        %2485 = vmatprep.subr.bf16.mxu0 %v2189
        %2486 = vmatpush1.bf16.msra.mxu0 %v2188
        %2487 = vmatprep.subr.bf16.mxu0 %v2193
        %2488 = vmatpush1.bf16.msra.mxu0 %v2192
        %2489 = vmatprep.subr.bf16.mxu0 %v2197
        %2490 = vmatpush1.bf16.msra.mxu0 %v2196
        %2491 = vmatprep.subr.bf16.mxu0 %v2201
        %2492 = vmatpush1.bf16.msra.mxu0 %v2200
        %2493 = vmatprep.subr.bf16.mxu0 %v2205
        %2494 = vmatpush1.bf16.msra.mxu0 %v2204
        %2495 = vmatprep.mubr.bf16.mxu0 %v1256
        %2496 = vmatmul.mubr.bf16.gmra.mrb[0].mxu0 %v1255
        %v2497 = vpop.f32.mrb[0].mxu0
        %v2498 = vadd.f32 %v2455, %v2497
        %v2499 = vpop.f32.mrb[0].mxu0
        %v2500 = vadd.f32 %v2457, %v2499
        %v2501 = vpop.f32.mrb[0].mxu0
        %v2502 = vadd.f32 %v2459, %v2501
        %v2503 = vpop.f32.mrb[0].mxu0
        %v2504 = vadd.f32 %v2461, %v2503
        %2505 = vdwg.mxu0
        %v2634 = vunpack.c.l.b16 %v1437
        %v2635 = vunpack.c.h.b16 %v1437
        %v2636 = vunpack.c.l.b16 %v1438
        %v2637 = vunpack.c.h.b16 %v1438
        %v2638 = vunpack.c.l.b16 %v1439
        %v2639 = vunpack.c.h.b16 %v1439
        %v2640 = vunpack.c.l.b16 %v1440
        %v2641 = vunpack.c.h.b16 %v1440
        %v2642 = vunpack.c.l.b16 %v1441
        %v2643 = vunpack.c.h.b16 %v1441
        %v2644 = vunpack.c.l.b16 %v1442
        %v2645 = vunpack.c.h.b16 %v1442
        %v2646 = vunpack.c.l.b16 %v1443
        %v2647 = vunpack.c.h.b16 %v1443
        %v2648 = vunpack.c.l.b16 %v1444
        %v2649 = vunpack.c.h.b16 %v1444
        %v2650 = vunpack.c.l.b16 %v1445
        %v2651 = vunpack.c.h.b16 %v1445
        %v2652 = vunpack.c.l.b16 %v1446
        %v2653 = vunpack.c.h.b16 %v1446
        %v2654 = vunpack.c.l.b16 %v1447
        %v2655 = vunpack.c.h.b16 %v1447
        %v2656 = vunpack.c.l.b16 %v1448
        %v2657 = vunpack.c.h.b16 %v1448
        %v2658 = vunpack.c.l.b16 %v1449
        %v2659 = vunpack.c.h.b16 %v1449
        %v2660 = vunpack.c.l.b16 %v1450
        %v2661 = vunpack.c.h.b16 %v1450
        %v2662 = vunpack.c.l.b16 %v1451
        %v2663 = vunpack.c.h.b16 %v1451
        %v2664 = vunpack.c.l.b16 %v1452
        %v2665 = vunpack.c.h.b16 %v1452
        %v2666 = vunpack.c.l.b16 %v1453
        %v2667 = vunpack.c.h.b16 %v1453
        %v2668 = vunpack.c.l.b16 %v1454
        %v2669 = vunpack.c.h.b16 %v1454
        %v2670 = vunpack.c.l.b16 %v1455
        %v2671 = vunpack.c.h.b16 %v1455
        %v2672 = vunpack.c.l.b16 %v1456
        %v2673 = vunpack.c.h.b16 %v1456
        %v2674 = vunpack.c.l.b16 %v1457
        %v2675 = vunpack.c.h.b16 %v1457
        %v2676 = vunpack.c.l.b16 %v1458
        %v2677 = vunpack.c.h.b16 %v1458
        %v2678 = vunpack.c.l.b16 %v1459
        %v2679 = vunpack.c.h.b16 %v1459
        %v2680 = vunpack.c.l.b16 %v1460
        %v2681 = vunpack.c.h.b16 %v1460
        %v2682 = vunpack.c.l.b16 %v1461
        %v2683 = vunpack.c.h.b16 %v1461
        %v2684 = vunpack.c.l.b16 %v1462
        %v2685 = vunpack.c.h.b16 %v1462
        %v2686 = vunpack.c.l.b16 %v1463
        %v2687 = vunpack.c.h.b16 %v1463
        %v2688 = vunpack.c.l.b16 %v1464
        %v2689 = vunpack.c.h.b16 %v1464
        %v2690 = vunpack.c.l.b16 %v1465
        %v2691 = vunpack.c.h.b16 %v1465
        %v2692 = vunpack.c.l.b16 %v1466
        %v2693 = vunpack.c.h.b16 %v1466
        %v2694 = vunpack.c.l.b16 %v1467
        %v2695 = vunpack.c.h.b16 %v1467
        %v2696 = vunpack.c.l.b16 %v1468
        %v2697 = vunpack.c.h.b16 %v1468
        %v2698 = vunpack.c.l.b16 %v1469
        %v2699 = vunpack.c.h.b16 %v1469
        %v2700 = vunpack.c.l.b16 %v1470
        %v2701 = vunpack.c.h.b16 %v1470
        %v2702 = vunpack.c.l.b16 %v1471
        %v2703 = vunpack.c.h.b16 %v1471
        %v2704 = vunpack.c.l.b16 %v1472
        %v2705 = vunpack.c.h.b16 %v1472
        %v2706 = vunpack.c.l.b16 %v1473
        %v2707 = vunpack.c.h.b16 %v1473
        %v2708 = vunpack.c.l.b16 %v1474
        %v2709 = vunpack.c.h.b16 %v1474
        %v2710 = vunpack.c.l.b16 %v1475
        %v2711 = vunpack.c.h.b16 %v1475
        %v2712 = vunpack.c.l.b16 %v1476
        %v2713 = vunpack.c.h.b16 %v1476
        %v2714 = vunpack.c.l.b16 %v1477
        %v2715 = vunpack.c.h.b16 %v1477
        %v2716 = vunpack.c.l.b16 %v1478
        %v2717 = vunpack.c.h.b16 %v1478
        %v2718 = vunpack.c.l.b16 %v1479
        %v2719 = vunpack.c.h.b16 %v1479
        %v2720 = vunpack.c.l.b16 %v1480
        %v2721 = vunpack.c.h.b16 %v1480
        %v2722 = vunpack.c.l.b16 %v1481
        %v2723 = vunpack.c.h.b16 %v1481
        %v2724 = vunpack.c.l.b16 %v1482
        %v2725 = vunpack.c.h.b16 %v1482
        %v2726 = vunpack.c.l.b16 %v1483
        %v2727 = vunpack.c.h.b16 %v1483
        %v2728 = vunpack.c.l.b16 %v1484
        %v2729 = vunpack.c.h.b16 %v1484
        %v2730 = vunpack.c.l.b16 %v1485
        %v2731 = vunpack.c.h.b16 %v1485
        %v2732 = vunpack.c.l.b16 %v1486
        %v2733 = vunpack.c.h.b16 %v1486
        %v2734 = vunpack.c.l.b16 %v1487
        %v2735 = vunpack.c.h.b16 %v1487
        %v2736 = vunpack.c.l.b16 %v1488
        %v2737 = vunpack.c.h.b16 %v1488
        %v2738 = vunpack.c.l.b16 %v1489
        %v2739 = vunpack.c.h.b16 %v1489
        %v2740 = vunpack.c.l.b16 %v1490
        %v2741 = vunpack.c.h.b16 %v1490
        %v2742 = vunpack.c.l.b16 %v1491
        %v2743 = vunpack.c.h.b16 %v1491
        %v2744 = vunpack.c.l.b16 %v1492
        %v2745 = vunpack.c.h.b16 %v1492
        %v2746 = vunpack.c.l.b16 %v1493
        %v2747 = vunpack.c.h.b16 %v1493
        %v2748 = vunpack.c.l.b16 %v1494
        %v2749 = vunpack.c.h.b16 %v1494
        %v2750 = vunpack.c.l.b16 %v1495
        %v2751 = vunpack.c.h.b16 %v1495
        %v2752 = vunpack.c.l.b16 %v1496
        %v2753 = vunpack.c.h.b16 %v1496
        %v2754 = vunpack.c.l.b16 %v1497
        %v2755 = vunpack.c.h.b16 %v1497
        %v2756 = vunpack.c.l.b16 %v1498
        %v2757 = vunpack.c.h.b16 %v1498
        %v2758 = vunpack.c.l.b16 %v1499
        %v2759 = vunpack.c.h.b16 %v1499
        %v2760 = vunpack.c.l.b16 %v1500
        %v2761 = vunpack.c.h.b16 %v1500
        %v2762 = vunpack.c.l.b16 %v1501
        %v2763 = vunpack.c.h.b16 %v1501
        %v2764 = vunpack.c.l.b16 %v1502
        %v2765 = vunpack.c.h.b16 %v1502
        %v2766 = vunpack.c.l.b16 %v1503
        %v2767 = vunpack.c.h.b16 %v1503
        %v2768 = vunpack.c.l.b16 %v1504
        %v2769 = vunpack.c.h.b16 %v1504
        %v2770 = vunpack.c.l.b16 %v1505
        %v2771 = vunpack.c.h.b16 %v1505
        %v2772 = vunpack.c.l.b16 %v1506
        %v2773 = vunpack.c.h.b16 %v1506
        %v2774 = vunpack.c.l.b16 %v1507
        %v2775 = vunpack.c.h.b16 %v1507
        %v2776 = vunpack.c.l.b16 %v1508
        %v2777 = vunpack.c.h.b16 %v1508
        %v2778 = vunpack.c.l.b16 %v1509
        %v2779 = vunpack.c.h.b16 %v1509
        %v2780 = vunpack.c.l.b16 %v1510
        %v2781 = vunpack.c.h.b16 %v1510
        %v2782 = vunpack.c.l.b16 %v1511
        %v2783 = vunpack.c.h.b16 %v1511
        %v2784 = vunpack.c.l.b16 %v1512
        %v2785 = vunpack.c.h.b16 %v1512
        %v2786 = vunpack.c.l.b16 %v1513
        %v2787 = vunpack.c.h.b16 %v1513
        %v2788 = vunpack.c.l.b16 %v1514
        %v2789 = vunpack.c.h.b16 %v1514
        %v2790 = vunpack.c.l.b16 %v1515
        %v2791 = vunpack.c.h.b16 %v1515
        %v2792 = vunpack.c.l.b16 %v1516
        %v2793 = vunpack.c.h.b16 %v1516
        %v2794 = vunpack.c.l.b16 %v1517
        %v2795 = vunpack.c.h.b16 %v1517
        %v2796 = vunpack.c.l.b16 %v1518
        %v2797 = vunpack.c.h.b16 %v1518
        %v2798 = vunpack.c.l.b16 %v1519
        %v2799 = vunpack.c.h.b16 %v1519
        %v2800 = vunpack.c.l.b16 %v1520
        %v2801 = vunpack.c.h.b16 %v1520
        %v2802 = vunpack.c.l.b16 %v1521
        %v2803 = vunpack.c.h.b16 %v1521
        %v2804 = vunpack.c.l.b16 %v1522
        %v2805 = vunpack.c.h.b16 %v1522
        %v2806 = vunpack.c.l.b16 %v1523
        %v2807 = vunpack.c.h.b16 %v1523
        %v2808 = vunpack.c.l.b16 %v1524
        %v2809 = vunpack.c.h.b16 %v1524
        %v2810 = vunpack.c.l.b16 %v1525
        %v2811 = vunpack.c.h.b16 %v1525
        %v2812 = vunpack.c.l.b16 %v1526
        %v2813 = vunpack.c.h.b16 %v1526
        %v2814 = vunpack.c.l.b16 %v1527
        %v2815 = vunpack.c.h.b16 %v1527
        %v2816 = vunpack.c.l.b16 %v1528
        %v2817 = vunpack.c.h.b16 %v1528
        %v2818 = vunpack.c.l.b16 %v1529
        %v2819 = vunpack.c.h.b16 %v1529
        %v2820 = vunpack.c.l.b16 %v1530
        %v2821 = vunpack.c.h.b16 %v1530
        %v2822 = vunpack.c.l.b16 %v1531
        %v2823 = vunpack.c.h.b16 %v1531
        %v2824 = vunpack.c.l.b16 %v1532
        %v2825 = vunpack.c.h.b16 %v1532
        %v2826 = vunpack.c.l.b16 %v1533
        %v2827 = vunpack.c.h.b16 %v1533
        %v2828 = vunpack.c.l.b16 %v1534
        %v2829 = vunpack.c.h.b16 %v1534
        %v2830 = vunpack.c.l.b16 %v1535
        %v2831 = vunpack.c.h.b16 %v1535
        %v2832 = vunpack.c.l.b16 %v1536
        %v2833 = vunpack.c.h.b16 %v1536
        %v2834 = vunpack.c.l.b16 %v1537
        %v2835 = vunpack.c.h.b16 %v1537
        %v2836 = vunpack.c.l.b16 %v1538
        %v2837 = vunpack.c.h.b16 %v1538
        %v2838 = vunpack.c.l.b16 %v1539
        %v2839 = vunpack.c.h.b16 %v1539
        %v2840 = vunpack.c.l.b16 %v1540
        %v2841 = vunpack.c.h.b16 %v1540
        %v2842 = vunpack.c.l.b16 %v1541
        %v2843 = vunpack.c.h.b16 %v1541
        %v2844 = vunpack.c.l.b16 %v1542
        %v2845 = vunpack.c.h.b16 %v1542
        %v2846 = vunpack.c.l.b16 %v1543
        %v2847 = vunpack.c.h.b16 %v1543
        %v2848 = vunpack.c.l.b16 %v1544
        %v2849 = vunpack.c.h.b16 %v1544
        %v2850 = vunpack.c.l.b16 %v1545
        %v2851 = vunpack.c.h.b16 %v1545
        %v2852 = vunpack.c.l.b16 %v1546
        %v2853 = vunpack.c.h.b16 %v1546
        %v2854 = vunpack.c.l.b16 %v1547
        %v2855 = vunpack.c.h.b16 %v1547
        %v2856 = vunpack.c.l.b16 %v1548
        %v2857 = vunpack.c.h.b16 %v1548
        %v2858 = vunpack.c.l.b16 %v1549
        %v2859 = vunpack.c.h.b16 %v1549
        %v2860 = vunpack.c.l.b16 %v1550
        %v2861 = vunpack.c.h.b16 %v1550
        %v2862 = vunpack.c.l.b16 %v1551
        %v2863 = vunpack.c.h.b16 %v1551
        %v2864 = vunpack.c.l.b16 %v1552
        %v2865 = vunpack.c.h.b16 %v1552
        %v2866 = vunpack.c.l.b16 %v1553
        %v2867 = vunpack.c.h.b16 %v1553
        %v2868 = vunpack.c.l.b16 %v1554
        %v2869 = vunpack.c.h.b16 %v1554
        %v2870 = vunpack.c.l.b16 %v1555
        %v2871 = vunpack.c.h.b16 %v1555
        %v2872 = vunpack.c.l.b16 %v1556
        %v2873 = vunpack.c.h.b16 %v1556
        %v2874 = vunpack.c.l.b16 %v1557
        %v2875 = vunpack.c.h.b16 %v1557
        %v2876 = vunpack.c.l.b16 %v1558
        %v2877 = vunpack.c.h.b16 %v1558
        %v2878 = vunpack.c.l.b16 %v1559
        %v2879 = vunpack.c.h.b16 %v1559
        %v2880 = vunpack.c.l.b16 %v1560
        %v2881 = vunpack.c.h.b16 %v1560
        %v2882 = vunpack.c.l.b16 %v1561
        %v2883 = vunpack.c.h.b16 %v1561
        %v2884 = vunpack.c.l.b16 %v1562
        %v2885 = vunpack.c.h.b16 %v1562
        %v2886 = vunpack.c.l.b16 %v1563
        %v2887 = vunpack.c.h.b16 %v1563
        %v2888 = vunpack.c.l.b16 %v1564
        %v2889 = vunpack.c.h.b16 %v1564
        %v2890 = vpack.c.b16 %v2638, %v2634
        %v2891 = vpack.c.b16 %v2639, %v2635
        %v2892 = vpack.c.b16 %v2640, %v2636
        %v2893 = vpack.c.b16 %v2641, %v2637
        %v2894 = vpack.c.b16 %v2646, %v2642
        %v2895 = vpack.c.b16 %v2647, %v2643
        %v2896 = vpack.c.b16 %v2648, %v2644
        %v2897 = vpack.c.b16 %v2649, %v2645
        %v2898 = vpack.c.b16 %v2654, %v2650
        %v2899 = vpack.c.b16 %v2655, %v2651
        %v2900 = vpack.c.b16 %v2656, %v2652
        %v2901 = vpack.c.b16 %v2657, %v2653
        %v2902 = vpack.c.b16 %v2662, %v2658
        %v2903 = vpack.c.b16 %v2663, %v2659
        %v2904 = vpack.c.b16 %v2664, %v2660
        %v2905 = vpack.c.b16 %v2665, %v2661
        %v2906 = vpack.c.b16 %v2670, %v2666
        %v2907 = vpack.c.b16 %v2671, %v2667
        %v2908 = vpack.c.b16 %v2672, %v2668
        %v2909 = vpack.c.b16 %v2673, %v2669
        %v2910 = vpack.c.b16 %v2678, %v2674
        %v2911 = vpack.c.b16 %v2679, %v2675
        %v2912 = vpack.c.b16 %v2680, %v2676
        %v2913 = vpack.c.b16 %v2681, %v2677
        %v2914 = vpack.c.b16 %v2686, %v2682
        %v2915 = vpack.c.b16 %v2687, %v2683
        %v2916 = vpack.c.b16 %v2688, %v2684
        %v2917 = vpack.c.b16 %v2689, %v2685
        %v2918 = vpack.c.b16 %v2694, %v2690
        %v2919 = vpack.c.b16 %v2695, %v2691
        %v2920 = vpack.c.b16 %v2696, %v2692
        %v2921 = vpack.c.b16 %v2697, %v2693
        %v2922 = vpack.c.b16 %v2702, %v2698
        %v2923 = vpack.c.b16 %v2703, %v2699
        %v2924 = vpack.c.b16 %v2704, %v2700
        %v2925 = vpack.c.b16 %v2705, %v2701
        %v2926 = vpack.c.b16 %v2710, %v2706
        %v2927 = vpack.c.b16 %v2711, %v2707
        %v2928 = vpack.c.b16 %v2712, %v2708
        %v2929 = vpack.c.b16 %v2713, %v2709
        %v2930 = vpack.c.b16 %v2718, %v2714
        %v2931 = vpack.c.b16 %v2719, %v2715
        %v2932 = vpack.c.b16 %v2720, %v2716
        %v2933 = vpack.c.b16 %v2721, %v2717
        %v2934 = vpack.c.b16 %v2726, %v2722
        %v2935 = vpack.c.b16 %v2727, %v2723
        %v2936 = vpack.c.b16 %v2728, %v2724
        %v2937 = vpack.c.b16 %v2729, %v2725
        %v2938 = vpack.c.b16 %v2734, %v2730
        %v2939 = vpack.c.b16 %v2735, %v2731
        %v2940 = vpack.c.b16 %v2736, %v2732
        %v2941 = vpack.c.b16 %v2737, %v2733
        %v2942 = vpack.c.b16 %v2742, %v2738
        %v2943 = vpack.c.b16 %v2743, %v2739
        %v2944 = vpack.c.b16 %v2744, %v2740
        %v2945 = vpack.c.b16 %v2745, %v2741
        %v2946 = vpack.c.b16 %v2750, %v2746
        %v2947 = vpack.c.b16 %v2751, %v2747
        %v2948 = vpack.c.b16 %v2752, %v2748
        %v2949 = vpack.c.b16 %v2753, %v2749
        %v2950 = vpack.c.b16 %v2758, %v2754
        %v2951 = vpack.c.b16 %v2759, %v2755
        %v2952 = vpack.c.b16 %v2760, %v2756
        %v2953 = vpack.c.b16 %v2761, %v2757
        %v2954 = vpack.c.b16 %v2766, %v2762
        %v2955 = vpack.c.b16 %v2767, %v2763
        %v2956 = vpack.c.b16 %v2768, %v2764
        %v2957 = vpack.c.b16 %v2769, %v2765
        %v2958 = vpack.c.b16 %v2774, %v2770
        %v2959 = vpack.c.b16 %v2775, %v2771
        %v2960 = vpack.c.b16 %v2776, %v2772
        %v2961 = vpack.c.b16 %v2777, %v2773
        %v2962 = vpack.c.b16 %v2782, %v2778
        %v2963 = vpack.c.b16 %v2783, %v2779
        %v2964 = vpack.c.b16 %v2784, %v2780
        %v2965 = vpack.c.b16 %v2785, %v2781
        %v2966 = vpack.c.b16 %v2790, %v2786
        %v2967 = vpack.c.b16 %v2791, %v2787
        %v2968 = vpack.c.b16 %v2792, %v2788
        %v2969 = vpack.c.b16 %v2793, %v2789
        %v2970 = vpack.c.b16 %v2798, %v2794
        %v2971 = vpack.c.b16 %v2799, %v2795
        %v2972 = vpack.c.b16 %v2800, %v2796
        %v2973 = vpack.c.b16 %v2801, %v2797
        %v2974 = vpack.c.b16 %v2806, %v2802
        %v2975 = vpack.c.b16 %v2807, %v2803
        %v2976 = vpack.c.b16 %v2808, %v2804
        %v2977 = vpack.c.b16 %v2809, %v2805
        %v2978 = vpack.c.b16 %v2814, %v2810
        %v2979 = vpack.c.b16 %v2815, %v2811
        %v2980 = vpack.c.b16 %v2816, %v2812
        %v2981 = vpack.c.b16 %v2817, %v2813
        %v2982 = vpack.c.b16 %v2822, %v2818
        %v2983 = vpack.c.b16 %v2823, %v2819
        %v2984 = vpack.c.b16 %v2824, %v2820
        %v2985 = vpack.c.b16 %v2825, %v2821
        %v2986 = vpack.c.b16 %v2830, %v2826
        %v2987 = vpack.c.b16 %v2831, %v2827
        %v2988 = vpack.c.b16 %v2832, %v2828
        %v2989 = vpack.c.b16 %v2833, %v2829
        %v2990 = vpack.c.b16 %v2838, %v2834
        %v2991 = vpack.c.b16 %v2839, %v2835
        %v2992 = vpack.c.b16 %v2840, %v2836
        %v2993 = vpack.c.b16 %v2841, %v2837
        %v2994 = vpack.c.b16 %v2846, %v2842
        %v2995 = vpack.c.b16 %v2847, %v2843
        %v2996 = vpack.c.b16 %v2848, %v2844
        %v2997 = vpack.c.b16 %v2849, %v2845
        %v2998 = vpack.c.b16 %v2854, %v2850
        %v2999 = vpack.c.b16 %v2855, %v2851
        %v3000 = vpack.c.b16 %v2856, %v2852
        %v3001 = vpack.c.b16 %v2857, %v2853
        %v3002 = vpack.c.b16 %v2862, %v2858
        %v3003 = vpack.c.b16 %v2863, %v2859
        %v3004 = vpack.c.b16 %v2864, %v2860
        %v3005 = vpack.c.b16 %v2865, %v2861
        %v3006 = vpack.c.b16 %v2870, %v2866
        %v3007 = vpack.c.b16 %v2871, %v2867
        %v3008 = vpack.c.b16 %v2872, %v2868
        %v3009 = vpack.c.b16 %v2873, %v2869
        %v3010 = vpack.c.b16 %v2878, %v2874
        %v3011 = vpack.c.b16 %v2879, %v2875
        %v3012 = vpack.c.b16 %v2880, %v2876
        %v3013 = vpack.c.b16 %v2881, %v2877
        %v3014 = vpack.c.b16 %v2886, %v2882
        %v3015 = vpack.c.b16 %v2887, %v2883
        %v3016 = vpack.c.b16 %v2888, %v2884
        %v3017 = vpack.c.b16 %v2889, %v2885
        %3146 = vmatprep.subr.bf16.mxu0 %v2891
        %3147 = vmatpush1.bf16.msra.mxu0 %v2890
        %3148 = vmatprep.subr.bf16.mxu0 %v2895
        %3149 = vmatpush1.bf16.msra.mxu0 %v2894
        %3150 = vmatprep.subr.bf16.mxu0 %v2899
        %3151 = vmatpush1.bf16.msra.mxu0 %v2898
        %3152 = vmatprep.subr.bf16.mxu0 %v2903
        %3153 = vmatpush1.bf16.msra.mxu0 %v2902
        %3154 = vmatprep.subr.bf16.mxu0 %v2907
        %3155 = vmatpush1.bf16.msra.mxu0 %v2906
        %3156 = vmatprep.subr.bf16.mxu0 %v2911
        %3157 = vmatpush1.bf16.msra.mxu0 %v2910
        %3158 = vmatprep.subr.bf16.mxu0 %v2915
        %3159 = vmatpush1.bf16.msra.mxu0 %v2914
        %3160 = vmatprep.subr.bf16.mxu0 %v2919
        %3161 = vmatpush1.bf16.msra.mxu0 %v2918
        %3162 = vmatprep.subr.bf16.mxu0 %v2923
        %3163 = vmatpush1.bf16.msra.mxu0 %v2922
        %3164 = vmatprep.subr.bf16.mxu0 %v2927
        %3165 = vmatpush1.bf16.msra.mxu0 %v2926
        %3166 = vmatprep.subr.bf16.mxu0 %v2931
        %3167 = vmatpush1.bf16.msra.mxu0 %v2930
        %3168 = vmatprep.subr.bf16.mxu0 %v2935
        %3169 = vmatpush1.bf16.msra.mxu0 %v2934
        %3170 = vmatprep.subr.bf16.mxu0 %v2939
        %3171 = vmatpush1.bf16.msra.mxu0 %v2938
        %3172 = vmatprep.subr.bf16.mxu0 %v2943
        %3173 = vmatpush1.bf16.msra.mxu0 %v2942
        %3174 = vmatprep.subr.bf16.mxu0 %v2947
        %3175 = vmatpush1.bf16.msra.mxu0 %v2946
        %3176 = vmatprep.subr.bf16.mxu0 %v2951
        %3177 = vmatpush1.bf16.msra.mxu0 %v2950
        %3178 = vmatprep.mubr.bf16.mxu0 %v1344
        %3179 = vmatmul.mubr.bf16.gmra.mrb[0].mxu0 %v1343
        %v3180 = vpop.f32.mrb[0].mxu0
        %v3181 = vadd.f32 %v2412, %v3180
        %v3182 = vpop.f32.mrb[0].mxu0
        %v3183 = vadd.f32 %v2414, %v3182
        %v3184 = vpop.f32.mrb[0].mxu0
        %v3185 = vadd.f32 %v2416, %v3184
        %v3186 = vpop.f32.mrb[0].mxu0
        %v3187 = vadd.f32 %v2418, %v3186
        %3188 = vdwg.mxu0
        %3189 = vmatprep.subr.bf16.mxu0 %v2955
        %3190 = vmatpush1.bf16.msra.mxu0 %v2954
        %3191 = vmatprep.subr.bf16.mxu0 %v2959
        %3192 = vmatpush1.bf16.msra.mxu0 %v2958
        %3193 = vmatprep.subr.bf16.mxu0 %v2963
        %3194 = vmatpush1.bf16.msra.mxu0 %v2962
        %3195 = vmatprep.subr.bf16.mxu0 %v2967
        %3196 = vmatpush1.bf16.msra.mxu0 %v2966
        %3197 = vmatprep.subr.bf16.mxu0 %v2971
        %3198 = vmatpush1.bf16.msra.mxu0 %v2970
        %3199 = vmatprep.subr.bf16.mxu0 %v2975
        %3200 = vmatpush1.bf16.msra.mxu0 %v2974
        %3201 = vmatprep.subr.bf16.mxu0 %v2979
        %3202 = vmatpush1.bf16.msra.mxu0 %v2978
        %3203 = vmatprep.subr.bf16.mxu0 %v2983
        %3204 = vmatpush1.bf16.msra.mxu0 %v2982
        %3205 = vmatprep.subr.bf16.mxu0 %v2987
        %3206 = vmatpush1.bf16.msra.mxu0 %v2986
        %3207 = vmatprep.subr.bf16.mxu0 %v2991
        %3208 = vmatpush1.bf16.msra.mxu0 %v2990
        %3209 = vmatprep.subr.bf16.mxu0 %v2995
        %3210 = vmatpush1.bf16.msra.mxu0 %v2994
        %3211 = vmatprep.subr.bf16.mxu0 %v2999
        %3212 = vmatpush1.bf16.msra.mxu0 %v2998
        %3213 = vmatprep.subr.bf16.mxu0 %v3003
        %3214 = vmatpush1.bf16.msra.mxu0 %v3002
        %3215 = vmatprep.subr.bf16.mxu0 %v3007
        %3216 = vmatpush1.bf16.msra.mxu0 %v3006
        %3217 = vmatprep.subr.bf16.mxu0 %v3011
        %3218 = vmatpush1.bf16.msra.mxu0 %v3010
        %3219 = vmatprep.subr.bf16.mxu0 %v3015
        %3220 = vmatpush1.bf16.msra.mxu0 %v3014
        %3221 = vmatprep.mubr.bf16.mxu0 %v1346
        %3222 = vmatmul.mubr.bf16.gmra.mrb[0].mxu0 %v1345
        %v3223 = vpop.f32.mrb[0].mxu0
        %v3224 = vadd.f32 %v3181, %v3223
        %v3225 = vpop.f32.mrb[0].mxu0
        %v3226 = vadd.f32 %v3183, %v3225
        %v3227 = vpop.f32.mrb[0].mxu0
        %v3228 = vadd.f32 %v3185, %v3227
        %v3229 = vpop.f32.mrb[0].mxu0
        %v3230 = vadd.f32 %v3187, %v3229
        %3231 = vdwg.mxu0
        %3232 = vmatprep.subr.bf16.mxu0 %v2893
        %3233 = vmatpush1.bf16.msra.mxu0 %v2892
        %3234 = vmatprep.subr.bf16.mxu0 %v2897
        %3235 = vmatpush1.bf16.msra.mxu0 %v2896
        %3236 = vmatprep.subr.bf16.mxu0 %v2901
        %3237 = vmatpush1.bf16.msra.mxu0 %v2900
        %3238 = vmatprep.subr.bf16.mxu0 %v2905
        %3239 = vmatpush1.bf16.msra.mxu0 %v2904
        %3240 = vmatprep.subr.bf16.mxu0 %v2909
        %3241 = vmatpush1.bf16.msra.mxu0 %v2908
        %3242 = vmatprep.subr.bf16.mxu0 %v2913
        %3243 = vmatpush1.bf16.msra.mxu0 %v2912
        %3244 = vmatprep.subr.bf16.mxu0 %v2917
        %3245 = vmatpush1.bf16.msra.mxu0 %v2916
        %3246 = vmatprep.subr.bf16.mxu0 %v2921
        %3247 = vmatpush1.bf16.msra.mxu0 %v2920
        %3248 = vmatprep.subr.bf16.mxu0 %v2925
        %3249 = vmatpush1.bf16.msra.mxu0 %v2924
        %3250 = vmatprep.subr.bf16.mxu0 %v2929
        %3251 = vmatpush1.bf16.msra.mxu0 %v2928
        %3252 = vmatprep.subr.bf16.mxu0 %v2933
        %3253 = vmatpush1.bf16.msra.mxu0 %v2932
        %3254 = vmatprep.subr.bf16.mxu0 %v2937
        %3255 = vmatpush1.bf16.msra.mxu0 %v2936
        %3256 = vmatprep.subr.bf16.mxu0 %v2941
        %3257 = vmatpush1.bf16.msra.mxu0 %v2940
        %3258 = vmatprep.subr.bf16.mxu0 %v2945
        %3259 = vmatpush1.bf16.msra.mxu0 %v2944
        %3260 = vmatprep.subr.bf16.mxu0 %v2949
        %3261 = vmatpush1.bf16.msra.mxu0 %v2948
        %3262 = vmatprep.subr.bf16.mxu0 %v2953
        %3263 = vmatpush1.bf16.msra.mxu0 %v2952
        %3264 = vmatprep.mubr.bf16.mxu0 %v1344
        %3265 = vmatmul.mubr.bf16.gmra.mrb[0].mxu0 %v1343
        %v3266 = vpop.f32.mrb[0].mxu0
        %v3267 = vadd.f32 %v2498, %v3266
        %v3268 = vpop.f32.mrb[0].mxu0
        %v3269 = vadd.f32 %v2500, %v3268
        %v3270 = vpop.f32.mrb[0].mxu0
        %v3271 = vadd.f32 %v2502, %v3270
        %v3272 = vpop.f32.mrb[0].mxu0
        %v3273 = vadd.f32 %v2504, %v3272
        %3274 = vdwg.mxu0
        %3275 = vmatprep.subr.bf16.mxu0 %v2957
        %3276 = vmatpush1.bf16.msra.mxu0 %v2956
        %3277 = vmatprep.subr.bf16.mxu0 %v2961
        %3278 = vmatpush1.bf16.msra.mxu0 %v2960
        %3279 = vmatprep.subr.bf16.mxu0 %v2965
        %3280 = vmatpush1.bf16.msra.mxu0 %v2964
        %3281 = vmatprep.subr.bf16.mxu0 %v2969
        %3282 = vmatpush1.bf16.msra.mxu0 %v2968
        %3283 = vmatprep.subr.bf16.mxu0 %v2973
        %3284 = vmatpush1.bf16.msra.mxu0 %v2972
        %3285 = vmatprep.subr.bf16.mxu0 %v2977
        %3286 = vmatpush1.bf16.msra.mxu0 %v2976
        %3287 = vmatprep.subr.bf16.mxu0 %v2981
        %3288 = vmatpush1.bf16.msra.mxu0 %v2980
        %3289 = vmatprep.subr.bf16.mxu0 %v2985
        %3290 = vmatpush1.bf16.msra.mxu0 %v2984
        %3291 = vmatprep.subr.bf16.mxu0 %v2989
        %3292 = vmatpush1.bf16.msra.mxu0 %v2988
        %3293 = vmatprep.subr.bf16.mxu0 %v2993
        %3294 = vmatpush1.bf16.msra.mxu0 %v2992
        %3295 = vmatprep.subr.bf16.mxu0 %v2997
        %3296 = vmatpush1.bf16.msra.mxu0 %v2996
        %3297 = vmatprep.subr.bf16.mxu0 %v3001
        %3298 = vmatpush1.bf16.msra.mxu0 %v3000
        %3299 = vmatprep.subr.bf16.mxu0 %v3005
        %3300 = vmatpush1.bf16.msra.mxu0 %v3004
        %3301 = vmatprep.subr.bf16.mxu0 %v3009
        %3302 = vmatpush1.bf16.msra.mxu0 %v3008
        %3303 = vmatprep.subr.bf16.mxu0 %v3013
        %3304 = vmatpush1.bf16.msra.mxu0 %v3012
        %3305 = vmatprep.subr.bf16.mxu0 %v3017
        %3306 = vmatpush1.bf16.msra.mxu0 %v3016
        %3307 = vmatprep.mubr.bf16.mxu0 %v1346
        %3308 = vmatmul.mubr.bf16.gmra.mrb[0].mxu0 %v1345
        %v3309 = vpop.f32.mrb[0].mxu0
        %v3310 = vadd.f32 %v3267, %v3309
        %v3311 = vpop.f32.mrb[0].mxu0
        %v3312 = vadd.f32 %v3269, %v3311
        %v3313 = vpop.f32.mrb[0].mxu0
        %v3314 = vadd.f32 %v3271, %v3313
        %v3315 = vpop.f32.mrb[0].mxu0
        %v3316 = vadd.f32 %v3273, %v3315
        %3317 = vdwg.mxu0
        %s3318 = scalar_lea.vmem [#allocation13], 2048
        %v3319 = vld [vmem:[%s3318] sm:$0xff]
        %v3320 = vld [vmem:[%s3318 + $0x8] sm:$0xff]
        %v3321 = vld [vmem:[%s3318 + $0x10] sm:$0xff]
        %v3322 = vld [vmem:[%s3318 + $0x18] sm:$0xff]
        %v3323 = vld [vmem:[%s3318 + $0x20] sm:$0xff]
        %v3324 = vld [vmem:[%s3318 + $0x28] sm:$0xff]
        %v3325 = vld [vmem:[%s3318 + $0x30] sm:$0xff]
        %v3326 = vld [vmem:[%s3318 + $0x38] sm:$0xff]
        %v3327 = vld [vmem:[%s3318 + $0x40] sm:$0xff]
        %v3328 = vld [vmem:[%s3318 + $0x48] sm:$0xff]
        %v3329 = vld [vmem:[%s3318 + $0x50] sm:$0xff]
        %v3330 = vld [vmem:[%s3318 + $0x58] sm:$0xff]
        %v3331 = vld [vmem:[%s3318 + $0x60] sm:$0xff]
        %v3332 = vld [vmem:[%s3318 + $0x68] sm:$0xff]
        %v3333 = vld [vmem:[%s3318 + $0x70] sm:$0xff]
        %v3334 = vld [vmem:[%s3318 + $0x78] sm:$0xff]
        %v3335 = vld [vmem:[%s3318 + $0x80] sm:$0xff]
        %v3336 = vld [vmem:[%s3318 + $0x88] sm:$0xff]
        %v3337 = vld [vmem:[%s3318 + $0x90] sm:$0xff]
        %v3338 = vld [vmem:[%s3318 + $0x98] sm:$0xff]
        %v3339 = vld [vmem:[%s3318 + $0xa0] sm:$0xff]
        %v3340 = vld [vmem:[%s3318 + $0xa8] sm:$0xff]
        %v3341 = vld [vmem:[%s3318 + $0xb0] sm:$0xff]
        %v3342 = vld [vmem:[%s3318 + $0xb8] sm:$0xff]
        %v3343 = vld [vmem:[%s3318 + $0xc0] sm:$0xff]
        %v3344 = vld [vmem:[%s3318 + $0xc8] sm:$0xff]
        %v3345 = vld [vmem:[%s3318 + $0xd0] sm:$0xff]
        %v3346 = vld [vmem:[%s3318 + $0xd8] sm:$0xff]
        %v3347 = vld [vmem:[%s3318 + $0xe0] sm:$0xff]
        %v3348 = vld [vmem:[%s3318 + $0xe8] sm:$0xff]
        %v3349 = vld [vmem:[%s3318 + $0xf0] sm:$0xff]
        %v3350 = vld [vmem:[%s3318 + $0xf8] sm:$0xff]
        %v3351 = vld [vmem:[%s3318 + $0x100] sm:$0xff]
        %v3352 = vld [vmem:[%s3318 + $0x108] sm:$0xff]
        %v3353 = vld [vmem:[%s3318 + $0x110] sm:$0xff]
        %v3354 = vld [vmem:[%s3318 + $0x118] sm:$0xff]
        %v3355 = vld [vmem:[%s3318 + $0x120] sm:$0xff]
        %v3356 = vld [vmem:[%s3318 + $0x128] sm:$0xff]
        %v3357 = vld [vmem:[%s3318 + $0x130] sm:$0xff]
        %v3358 = vld [vmem:[%s3318 + $0x138] sm:$0xff]
        %v3359 = vld [vmem:[%s3318 + $0x140] sm:$0xff]
        %v3360 = vld [vmem:[%s3318 + $0x148] sm:$0xff]
        %v3361 = vld [vmem:[%s3318 + $0x150] sm:$0xff]
        %v3362 = vld [vmem:[%s3318 + $0x158] sm:$0xff]
        %v3363 = vld [vmem:[%s3318 + $0x160] sm:$0xff]
        %v3364 = vld [vmem:[%s3318 + $0x168] sm:$0xff]
        %v3365 = vld [vmem:[%s3318 + $0x170] sm:$0xff]
        %v3366 = vld [vmem:[%s3318 + $0x178] sm:$0xff]
        %v3367 = vld [vmem:[%s3318 + $0x180] sm:$0xff]
        %v3368 = vld [vmem:[%s3318 + $0x188] sm:$0xff]
        %v3369 = vld [vmem:[%s3318 + $0x190] sm:$0xff]
        %v3370 = vld [vmem:[%s3318 + $0x198] sm:$0xff]
        %v3371 = vld [vmem:[%s3318 + $0x1a0] sm:$0xff]
        %v3372 = vld [vmem:[%s3318 + $0x1a8] sm:$0xff]
        %v3373 = vld [vmem:[%s3318 + $0x1b0] sm:$0xff]
        %v3374 = vld [vmem:[%s3318 + $0x1b8] sm:$0xff]
        %v3375 = vld [vmem:[%s3318 + $0x1c0] sm:$0xff]
        %v3376 = vld [vmem:[%s3318 + $0x1c8] sm:$0xff]
        %v3377 = vld [vmem:[%s3318 + $0x1d0] sm:$0xff]
        %v3378 = vld [vmem:[%s3318 + $0x1d8] sm:$0xff]
        %v3379 = vld [vmem:[%s3318 + $0x1e0] sm:$0xff]
        %v3380 = vld [vmem:[%s3318 + $0x1e8] sm:$0xff]
        %v3381 = vld [vmem:[%s3318 + $0x1f0] sm:$0xff]
        %v3382 = vld [vmem:[%s3318 + $0x1f8] sm:$0xff]
        %v3383 = vld [vmem:[%s3318 + $0x200] sm:$0xff]
        %v3384 = vld [vmem:[%s3318 + $0x208] sm:$0xff]
        %v3385 = vld [vmem:[%s3318 + $0x210] sm:$0xff]
        %v3386 = vld [vmem:[%s3318 + $0x218] sm:$0xff]
        %v3387 = vld [vmem:[%s3318 + $0x220] sm:$0xff]
        %v3388 = vld [vmem:[%s3318 + $0x228] sm:$0xff]
        %v3389 = vld [vmem:[%s3318 + $0x230] sm:$0xff]
        %v3390 = vld [vmem:[%s3318 + $0x238] sm:$0xff]
        %v3391 = vld [vmem:[%s3318 + $0x240] sm:$0xff]
        %v3392 = vld [vmem:[%s3318 + $0x248] sm:$0xff]
        %v3393 = vld [vmem:[%s3318 + $0x250] sm:$0xff]
        %v3394 = vld [vmem:[%s3318 + $0x258] sm:$0xff]
        %v3395 = vld [vmem:[%s3318 + $0x260] sm:$0xff]
        %v3396 = vld [vmem:[%s3318 + $0x268] sm:$0xff]
        %v3397 = vld [vmem:[%s3318 + $0x270] sm:$0xff]
        %v3398 = vld [vmem:[%s3318 + $0x278] sm:$0xff]
        %v3399 = vld [vmem:[%s3318 + $0x280] sm:$0xff]
        %v3400 = vld [vmem:[%s3318 + $0x288] sm:$0xff]
        %v3401 = vld [vmem:[%s3318 + $0x290] sm:$0xff]
        %v3402 = vld [vmem:[%s3318 + $0x298] sm:$0xff]
        %v3403 = vld [vmem:[%s3318 + $0x2a0] sm:$0xff]
        %v3404 = vld [vmem:[%s3318 + $0x2a8] sm:$0xff]
        %v3405 = vld [vmem:[%s3318 + $0x2b0] sm:$0xff]
        %v3406 = vld [vmem:[%s3318 + $0x2b8] sm:$0xff]
        %v3407 = vld [vmem:[%s3318 + $0x2c0] sm:$0xff]
        %v3408 = vld [vmem:[%s3318 + $0x2c8] sm:$0xff]
        %v3409 = vld [vmem:[%s3318 + $0x2d0] sm:$0xff]
        %v3410 = vld [vmem:[%s3318 + $0x2d8] sm:$0xff]
        %v3411 = vld [vmem:[%s3318 + $0x2e0] sm:$0xff]
        %v3412 = vld [vmem:[%s3318 + $0x2e8] sm:$0xff]
        %v3413 = vld [vmem:[%s3318 + $0x2f0] sm:$0xff]
        %v3414 = vld [vmem:[%s3318 + $0x2f8] sm:$0xff]
        %v3415 = vld [vmem:[%s3318 + $0x300] sm:$0xff]
        %v3416 = vld [vmem:[%s3318 + $0x308] sm:$0xff]
        %v3417 = vld [vmem:[%s3318 + $0x310] sm:$0xff]
        %v3418 = vld [vmem:[%s3318 + $0x318] sm:$0xff]
        %v3419 = vld [vmem:[%s3318 + $0x320] sm:$0xff]
        %v3420 = vld [vmem:[%s3318 + $0x328] sm:$0xff]
        %v3421 = vld [vmem:[%s3318 + $0x330] sm:$0xff]
        %v3422 = vld [vmem:[%s3318 + $0x338] sm:$0xff]
        %v3423 = vld [vmem:[%s3318 + $0x340] sm:$0xff]
        %v3424 = vld [vmem:[%s3318 + $0x348] sm:$0xff]
        %v3425 = vld [vmem:[%s3318 + $0x350] sm:$0xff]
        %v3426 = vld [vmem:[%s3318 + $0x358] sm:$0xff]
        %v3427 = vld [vmem:[%s3318 + $0x360] sm:$0xff]
        %v3428 = vld [vmem:[%s3318 + $0x368] sm:$0xff]
        %v3429 = vld [vmem:[%s3318 + $0x370] sm:$0xff]
        %v3430 = vld [vmem:[%s3318 + $0x378] sm:$0xff]
        %v3431 = vld [vmem:[%s3318 + $0x380] sm:$0xff]
        %v3432 = vld [vmem:[%s3318 + $0x388] sm:$0xff]
        %v3433 = vld [vmem:[%s3318 + $0x390] sm:$0xff]
        %v3434 = vld [vmem:[%s3318 + $0x398] sm:$0xff]
        %v3435 = vld [vmem:[%s3318 + $0x3a0] sm:$0xff]
        %v3436 = vld [vmem:[%s3318 + $0x3a8] sm:$0xff]
        %v3437 = vld [vmem:[%s3318 + $0x3b0] sm:$0xff]
        %v3438 = vld [vmem:[%s3318 + $0x3b8] sm:$0xff]
        %v3439 = vld [vmem:[%s3318 + $0x3c0] sm:$0xff]
        %v3440 = vld [vmem:[%s3318 + $0x3c8] sm:$0xff]
        %v3441 = vld [vmem:[%s3318 + $0x3d0] sm:$0xff]
        %v3442 = vld [vmem:[%s3318 + $0x3d8] sm:$0xff]
        %v3443 = vld [vmem:[%s3318 + $0x3e0] sm:$0xff]
        %v3444 = vld [vmem:[%s3318 + $0x3e8] sm:$0xff]
        %v3445 = vld [vmem:[%s3318 + $0x3f0] sm:$0xff]
        %v3446 = vld [vmem:[%s3318 + $0x3f8] sm:$0xff]
        %v3575 = vunpack.c.l.b16 %v3319
        %v3576 = vunpack.c.h.b16 %v3319
        %v3577 = vunpack.c.l.b16 %v3320
        %v3578 = vunpack.c.h.b16 %v3320
        %v3579 = vunpack.c.l.b16 %v3321
        %v3580 = vunpack.c.h.b16 %v3321
        %v3581 = vunpack.c.l.b16 %v3322
        %v3582 = vunpack.c.h.b16 %v3322
        %v3583 = vunpack.c.l.b16 %v3323
        %v3584 = vunpack.c.h.b16 %v3323
        %v3585 = vunpack.c.l.b16 %v3324
        %v3586 = vunpack.c.h.b16 %v3324
        %v3587 = vunpack.c.l.b16 %v3325
        %v3588 = vunpack.c.h.b16 %v3325
        %v3589 = vunpack.c.l.b16 %v3326
        %v3590 = vunpack.c.h.b16 %v3326
        %v3591 = vunpack.c.l.b16 %v3327
        %v3592 = vunpack.c.h.b16 %v3327
        %v3593 = vunpack.c.l.b16 %v3328
        %v3594 = vunpack.c.h.b16 %v3328
        %v3595 = vunpack.c.l.b16 %v3329
        %v3596 = vunpack.c.h.b16 %v3329
        %v3597 = vunpack.c.l.b16 %v3330
        %v3598 = vunpack.c.h.b16 %v3330
        %v3599 = vunpack.c.l.b16 %v3331
        %v3600 = vunpack.c.h.b16 %v3331
        %v3601 = vunpack.c.l.b16 %v3332
        %v3602 = vunpack.c.h.b16 %v3332
        %v3603 = vunpack.c.l.b16 %v3333
        %v3604 = vunpack.c.h.b16 %v3333
        %v3605 = vunpack.c.l.b16 %v3334
        %v3606 = vunpack.c.h.b16 %v3334
        %v3607 = vunpack.c.l.b16 %v3335
        %v3608 = vunpack.c.h.b16 %v3335
        %v3609 = vunpack.c.l.b16 %v3336
        %v3610 = vunpack.c.h.b16 %v3336
        %v3611 = vunpack.c.l.b16 %v3337
        %v3612 = vunpack.c.h.b16 %v3337
        %v3613 = vunpack.c.l.b16 %v3338
        %v3614 = vunpack.c.h.b16 %v3338
        %v3615 = vunpack.c.l.b16 %v3339
        %v3616 = vunpack.c.h.b16 %v3339
        %v3617 = vunpack.c.l.b16 %v3340
        %v3618 = vunpack.c.h.b16 %v3340
        %v3619 = vunpack.c.l.b16 %v3341
        %v3620 = vunpack.c.h.b16 %v3341
        %v3621 = vunpack.c.l.b16 %v3342
        %v3622 = vunpack.c.h.b16 %v3342
        %v3623 = vunpack.c.l.b16 %v3343
        %v3624 = vunpack.c.h.b16 %v3343
        %v3625 = vunpack.c.l.b16 %v3344
        %v3626 = vunpack.c.h.b16 %v3344
        %v3627 = vunpack.c.l.b16 %v3345
        %v3628 = vunpack.c.h.b16 %v3345
        %v3629 = vunpack.c.l.b16 %v3346
        %v3630 = vunpack.c.h.b16 %v3346
        %v3631 = vunpack.c.l.b16 %v3347
        %v3632 = vunpack.c.h.b16 %v3347
        %v3633 = vunpack.c.l.b16 %v3348
        %v3634 = vunpack.c.h.b16 %v3348
        %v3635 = vunpack.c.l.b16 %v3349
        %v3636 = vunpack.c.h.b16 %v3349
        %v3637 = vunpack.c.l.b16 %v3350
        %v3638 = vunpack.c.h.b16 %v3350
        %v3639 = vunpack.c.l.b16 %v3351
        %v3640 = vunpack.c.h.b16 %v3351
        %v3641 = vunpack.c.l.b16 %v3352
        %v3642 = vunpack.c.h.b16 %v3352
        %v3643 = vunpack.c.l.b16 %v3353
        %v3644 = vunpack.c.h.b16 %v3353
        %v3645 = vunpack.c.l.b16 %v3354
        %v3646 = vunpack.c.h.b16 %v3354
        %v3647 = vunpack.c.l.b16 %v3355
        %v3648 = vunpack.c.h.b16 %v3355
        %v3649 = vunpack.c.l.b16 %v3356
        %v3650 = vunpack.c.h.b16 %v3356
        %v3651 = vunpack.c.l.b16 %v3357
        %v3652 = vunpack.c.h.b16 %v3357
        %v3653 = vunpack.c.l.b16 %v3358
        %v3654 = vunpack.c.h.b16 %v3358
        %v3655 = vunpack.c.l.b16 %v3359
        %v3656 = vunpack.c.h.b16 %v3359
        %v3657 = vunpack.c.l.b16 %v3360
        %v3658 = vunpack.c.h.b16 %v3360
        %v3659 = vunpack.c.l.b16 %v3361
        %v3660 = vunpack.c.h.b16 %v3361
        %v3661 = vunpack.c.l.b16 %v3362
        %v3662 = vunpack.c.h.b16 %v3362
        %v3663 = vunpack.c.l.b16 %v3363
        %v3664 = vunpack.c.h.b16 %v3363
        %v3665 = vunpack.c.l.b16 %v3364
        %v3666 = vunpack.c.h.b16 %v3364
        %v3667 = vunpack.c.l.b16 %v3365
        %v3668 = vunpack.c.h.b16 %v3365
        %v3669 = vunpack.c.l.b16 %v3366
        %v3670 = vunpack.c.h.b16 %v3366
        %v3671 = vunpack.c.l.b16 %v3367
        %v3672 = vunpack.c.h.b16 %v3367
        %v3673 = vunpack.c.l.b16 %v3368
        %v3674 = vunpack.c.h.b16 %v3368
        %v3675 = vunpack.c.l.b16 %v3369
        %v3676 = vunpack.c.h.b16 %v3369
        %v3677 = vunpack.c.l.b16 %v3370
        %v3678 = vunpack.c.h.b16 %v3370
        %v3679 = vunpack.c.l.b16 %v3371
        %v3680 = vunpack.c.h.b16 %v3371
        %v3681 = vunpack.c.l.b16 %v3372
        %v3682 = vunpack.c.h.b16 %v3372
        %v3683 = vunpack.c.l.b16 %v3373
        %v3684 = vunpack.c.h.b16 %v3373
        %v3685 = vunpack.c.l.b16 %v3374
        %v3686 = vunpack.c.h.b16 %v3374
        %v3687 = vunpack.c.l.b16 %v3375
        %v3688 = vunpack.c.h.b16 %v3375
        %v3689 = vunpack.c.l.b16 %v3376
        %v3690 = vunpack.c.h.b16 %v3376
        %v3691 = vunpack.c.l.b16 %v3377
        %v3692 = vunpack.c.h.b16 %v3377
        %v3693 = vunpack.c.l.b16 %v3378
        %v3694 = vunpack.c.h.b16 %v3378
        %v3695 = vunpack.c.l.b16 %v3379
        %v3696 = vunpack.c.h.b16 %v3379
        %v3697 = vunpack.c.l.b16 %v3380
        %v3698 = vunpack.c.h.b16 %v3380
        %v3699 = vunpack.c.l.b16 %v3381
        %v3700 = vunpack.c.h.b16 %v3381
        %v3701 = vunpack.c.l.b16 %v3382
        %v3702 = vunpack.c.h.b16 %v3382
        %v3703 = vunpack.c.l.b16 %v3383
        %v3704 = vunpack.c.h.b16 %v3383
        %v3705 = vunpack.c.l.b16 %v3384
        %v3706 = vunpack.c.h.b16 %v3384
        %v3707 = vunpack.c.l.b16 %v3385
        %v3708 = vunpack.c.h.b16 %v3385
        %v3709 = vunpack.c.l.b16 %v3386
        %v3710 = vunpack.c.h.b16 %v3386
        %v3711 = vunpack.c.l.b16 %v3387
        %v3712 = vunpack.c.h.b16 %v3387
        %v3713 = vunpack.c.l.b16 %v3388
        %v3714 = vunpack.c.h.b16 %v3388
        %v3715 = vunpack.c.l.b16 %v3389
        %v3716 = vunpack.c.h.b16 %v3389
        %v3717 = vunpack.c.l.b16 %v3390
        %v3718 = vunpack.c.h.b16 %v3390
        %v3719 = vunpack.c.l.b16 %v3391
        %v3720 = vunpack.c.h.b16 %v3391
        %v3721 = vunpack.c.l.b16 %v3392
        %v3722 = vunpack.c.h.b16 %v3392
        %v3723 = vunpack.c.l.b16 %v3393
        %v3724 = vunpack.c.h.b16 %v3393
        %v3725 = vunpack.c.l.b16 %v3394
        %v3726 = vunpack.c.h.b16 %v3394
        %v3727 = vunpack.c.l.b16 %v3395
        %v3728 = vunpack.c.h.b16 %v3395
        %v3729 = vunpack.c.l.b16 %v3396
        %v3730 = vunpack.c.h.b16 %v3396
        %v3731 = vunpack.c.l.b16 %v3397
        %v3732 = vunpack.c.h.b16 %v3397
        %v3733 = vunpack.c.l.b16 %v3398
        %v3734 = vunpack.c.h.b16 %v3398
        %v3735 = vunpack.c.l.b16 %v3399
        %v3736 = vunpack.c.h.b16 %v3399
        %v3737 = vunpack.c.l.b16 %v3400
        %v3738 = vunpack.c.h.b16 %v3400
        %v3739 = vunpack.c.l.b16 %v3401
        %v3740 = vunpack.c.h.b16 %v3401
        %v3741 = vunpack.c.l.b16 %v3402
        %v3742 = vunpack.c.h.b16 %v3402
        %v3743 = vunpack.c.l.b16 %v3403
        %v3744 = vunpack.c.h.b16 %v3403
        %v3745 = vunpack.c.l.b16 %v3404
        %v3746 = vunpack.c.h.b16 %v3404
        %v3747 = vunpack.c.l.b16 %v3405
        %v3748 = vunpack.c.h.b16 %v3405
        %v3749 = vunpack.c.l.b16 %v3406
        %v3750 = vunpack.c.h.b16 %v3406
        %v3751 = vunpack.c.l.b16 %v3407
        %v3752 = vunpack.c.h.b16 %v3407
        %v3753 = vunpack.c.l.b16 %v3408
        %v3754 = vunpack.c.h.b16 %v3408
        %v3755 = vunpack.c.l.b16 %v3409
        %v3756 = vunpack.c.h.b16 %v3409
        %v3757 = vunpack.c.l.b16 %v3410
        %v3758 = vunpack.c.h.b16 %v3410
        %v3759 = vunpack.c.l.b16 %v3411
        %v3760 = vunpack.c.h.b16 %v3411
        %v3761 = vunpack.c.l.b16 %v3412
        %v3762 = vunpack.c.h.b16 %v3412
        %v3763 = vunpack.c.l.b16 %v3413
        %v3764 = vunpack.c.h.b16 %v3413
        %v3765 = vunpack.c.l.b16 %v3414
        %v3766 = vunpack.c.h.b16 %v3414
        %v3767 = vunpack.c.l.b16 %v3415
        %v3768 = vunpack.c.h.b16 %v3415
        %v3769 = vunpack.c.l.b16 %v3416
        %v3770 = vunpack.c.h.b16 %v3416
        %v3771 = vunpack.c.l.b16 %v3417
        %v3772 = vunpack.c.h.b16 %v3417
        %v3773 = vunpack.c.l.b16 %v3418
        %v3774 = vunpack.c.h.b16 %v3418
        %v3775 = vunpack.c.l.b16 %v3419
        %v3776 = vunpack.c.h.b16 %v3419
        %v3777 = vunpack.c.l.b16 %v3420
        %v3778 = vunpack.c.h.b16 %v3420
        %v3779 = vunpack.c.l.b16 %v3421
        %v3780 = vunpack.c.h.b16 %v3421
        %v3781 = vunpack.c.l.b16 %v3422
        %v3782 = vunpack.c.h.b16 %v3422
        %v3783 = vunpack.c.l.b16 %v3423
        %v3784 = vunpack.c.h.b16 %v3423
        %v3785 = vunpack.c.l.b16 %v3424
        %v3786 = vunpack.c.h.b16 %v3424
        %v3787 = vunpack.c.l.b16 %v3425
        %v3788 = vunpack.c.h.b16 %v3425
        %v3789 = vunpack.c.l.b16 %v3426
        %v3790 = vunpack.c.h.b16 %v3426
        %v3791 = vunpack.c.l.b16 %v3427
        %v3792 = vunpack.c.h.b16 %v3427
        %v3793 = vunpack.c.l.b16 %v3428
        %v3794 = vunpack.c.h.b16 %v3428
        %v3795 = vunpack.c.l.b16 %v3429
        %v3796 = vunpack.c.h.b16 %v3429
        %v3797 = vunpack.c.l.b16 %v3430
        %v3798 = vunpack.c.h.b16 %v3430
        %v3799 = vunpack.c.l.b16 %v3431
        %v3800 = vunpack.c.h.b16 %v3431
        %v3801 = vunpack.c.l.b16 %v3432
        %v3802 = vunpack.c.h.b16 %v3432
        %v3803 = vunpack.c.l.b16 %v3433
        %v3804 = vunpack.c.h.b16 %v3433
        %v3805 = vunpack.c.l.b16 %v3434
        %v3806 = vunpack.c.h.b16 %v3434
        %v3807 = vunpack.c.l.b16 %v3435
        %v3808 = vunpack.c.h.b16 %v3435
        %v3809 = vunpack.c.l.b16 %v3436
        %v3810 = vunpack.c.h.b16 %v3436
        %v3811 = vunpack.c.l.b16 %v3437
        %v3812 = vunpack.c.h.b16 %v3437
        %v3813 = vunpack.c.l.b16 %v3438
        %v3814 = vunpack.c.h.b16 %v3438
        %v3815 = vunpack.c.l.b16 %v3439
        %v3816 = vunpack.c.h.b16 %v3439
        %v3817 = vunpack.c.l.b16 %v3440
        %v3818 = vunpack.c.h.b16 %v3440
        %v3819 = vunpack.c.l.b16 %v3441
        %v3820 = vunpack.c.h.b16 %v3441
        %v3821 = vunpack.c.l.b16 %v3442
        %v3822 = vunpack.c.h.b16 %v3442
        %v3823 = vunpack.c.l.b16 %v3443
        %v3824 = vunpack.c.h.b16 %v3443
        %v3825 = vunpack.c.l.b16 %v3444
        %v3826 = vunpack.c.h.b16 %v3444
        %v3827 = vunpack.c.l.b16 %v3445
        %v3828 = vunpack.c.h.b16 %v3445
        %v3829 = vunpack.c.l.b16 %v3446
        %v3830 = vunpack.c.h.b16 %v3446
        %v3831 = vpack.c.b16 %v3579, %v3575
        %v3832 = vpack.c.b16 %v3580, %v3576
        %v3833 = vpack.c.b16 %v3581, %v3577
        %v3834 = vpack.c.b16 %v3582, %v3578
        %v3835 = vpack.c.b16 %v3587, %v3583
        %v3836 = vpack.c.b16 %v3588, %v3584
        %v3837 = vpack.c.b16 %v3589, %v3585
        %v3838 = vpack.c.b16 %v3590, %v3586
        %v3839 = vpack.c.b16 %v3595, %v3591
        %v3840 = vpack.c.b16 %v3596, %v3592
        %v3841 = vpack.c.b16 %v3597, %v3593
        %v3842 = vpack.c.b16 %v3598, %v3594
        %v3843 = vpack.c.b16 %v3603, %v3599
        %v3844 = vpack.c.b16 %v3604, %v3600
        %v3845 = vpack.c.b16 %v3605, %v3601
        %v3846 = vpack.c.b16 %v3606, %v3602
        %v3847 = vpack.c.b16 %v3611, %v3607
        %v3848 = vpack.c.b16 %v3612, %v3608
        %v3849 = vpack.c.b16 %v3613, %v3609
        %v3850 = vpack.c.b16 %v3614, %v3610
        %v3851 = vpack.c.b16 %v3619, %v3615
        %v3852 = vpack.c.b16 %v3620, %v3616
        %v3853 = vpack.c.b16 %v3621, %v3617
        %v3854 = vpack.c.b16 %v3622, %v3618
        %v3855 = vpack.c.b16 %v3627, %v3623
        %v3856 = vpack.c.b16 %v3628, %v3624
        %v3857 = vpack.c.b16 %v3629, %v3625
        %v3858 = vpack.c.b16 %v3630, %v3626
        %v3859 = vpack.c.b16 %v3635, %v3631
        %v3860 = vpack.c.b16 %v3636, %v3632
        %v3861 = vpack.c.b16 %v3637, %v3633
        %v3862 = vpack.c.b16 %v3638, %v3634
        %v3863 = vpack.c.b16 %v3643, %v3639
        %v3864 = vpack.c.b16 %v3644, %v3640
        %v3865 = vpack.c.b16 %v3645, %v3641
        %v3866 = vpack.c.b16 %v3646, %v3642
        %v3867 = vpack.c.b16 %v3651, %v3647
        %v3868 = vpack.c.b16 %v3652, %v3648
        %v3869 = vpack.c.b16 %v3653, %v3649
        %v3870 = vpack.c.b16 %v3654, %v3650
        %v3871 = vpack.c.b16 %v3659, %v3655
        %v3872 = vpack.c.b16 %v3660, %v3656
        %v3873 = vpack.c.b16 %v3661, %v3657
        %v3874 = vpack.c.b16 %v3662, %v3658
        %v3875 = vpack.c.b16 %v3667, %v3663
        %v3876 = vpack.c.b16 %v3668, %v3664
        %v3877 = vpack.c.b16 %v3669, %v3665
        %v3878 = vpack.c.b16 %v3670, %v3666
        %v3879 = vpack.c.b16 %v3675, %v3671
        %v3880 = vpack.c.b16 %v3676, %v3672
        %v3881 = vpack.c.b16 %v3677, %v3673
        %v3882 = vpack.c.b16 %v3678, %v3674
        %v3883 = vpack.c.b16 %v3683, %v3679
        %v3884 = vpack.c.b16 %v3684, %v3680
        %v3885 = vpack.c.b16 %v3685, %v3681
        %v3886 = vpack.c.b16 %v3686, %v3682
        %v3887 = vpack.c.b16 %v3691, %v3687
        %v3888 = vpack.c.b16 %v3692, %v3688
        %v3889 = vpack.c.b16 %v3693, %v3689
        %v3890 = vpack.c.b16 %v3694, %v3690
        %v3891 = vpack.c.b16 %v3699, %v3695
        %v3892 = vpack.c.b16 %v3700, %v3696
        %v3893 = vpack.c.b16 %v3701, %v3697
        %v3894 = vpack.c.b16 %v3702, %v3698
        %v3895 = vpack.c.b16 %v3707, %v3703
        %v3896 = vpack.c.b16 %v3708, %v3704
        %v3897 = vpack.c.b16 %v3709, %v3705
        %v3898 = vpack.c.b16 %v3710, %v3706
        %v3899 = vpack.c.b16 %v3715, %v3711
        %v3900 = vpack.c.b16 %v3716, %v3712
        %v3901 = vpack.c.b16 %v3717, %v3713
        %v3902 = vpack.c.b16 %v3718, %v3714
        %v3903 = vpack.c.b16 %v3723, %v3719
        %v3904 = vpack.c.b16 %v3724, %v3720
        %v3905 = vpack.c.b16 %v3725, %v3721
        %v3906 = vpack.c.b16 %v3726, %v3722
        %v3907 = vpack.c.b16 %v3731, %v3727
        %v3908 = vpack.c.b16 %v3732, %v3728
        %v3909 = vpack.c.b16 %v3733, %v3729
        %v3910 = vpack.c.b16 %v3734, %v3730
        %v3911 = vpack.c.b16 %v3739, %v3735
        %v3912 = vpack.c.b16 %v3740, %v3736
        %v3913 = vpack.c.b16 %v3741, %v3737
        %v3914 = vpack.c.b16 %v3742, %v3738
        %v3915 = vpack.c.b16 %v3747, %v3743
        %v3916 = vpack.c.b16 %v3748, %v3744
        %v3917 = vpack.c.b16 %v3749, %v3745
        %v3918 = vpack.c.b16 %v3750, %v3746
        %v3919 = vpack.c.b16 %v3755, %v3751
        %v3920 = vpack.c.b16 %v3756, %v3752
        %v3921 = vpack.c.b16 %v3757, %v3753
        %v3922 = vpack.c.b16 %v3758, %v3754
        %v3923 = vpack.c.b16 %v3763, %v3759
        %v3924 = vpack.c.b16 %v3764, %v3760
        %v3925 = vpack.c.b16 %v3765, %v3761
        %v3926 = vpack.c.b16 %v3766, %v3762
        %v3927 = vpack.c.b16 %v3771, %v3767
        %v3928 = vpack.c.b16 %v3772, %v3768
        %v3929 = vpack.c.b16 %v3773, %v3769
        %v3930 = vpack.c.b16 %v3774, %v3770
        %v3931 = vpack.c.b16 %v3779, %v3775
        %v3932 = vpack.c.b16 %v3780, %v3776
        %v3933 = vpack.c.b16 %v3781, %v3777
        %v3934 = vpack.c.b16 %v3782, %v3778
        %v3935 = vpack.c.b16 %v3787, %v3783
        %v3936 = vpack.c.b16 %v3788, %v3784
        %v3937 = vpack.c.b16 %v3789, %v3785
        %v3938 = vpack.c.b16 %v3790, %v3786
        %v3939 = vpack.c.b16 %v3795, %v3791
        %v3940 = vpack.c.b16 %v3796, %v3792
        %v3941 = vpack.c.b16 %v3797, %v3793
        %v3942 = vpack.c.b16 %v3798, %v3794
        %v3943 = vpack.c.b16 %v3803, %v3799
        %v3944 = vpack.c.b16 %v3804, %v3800
        %v3945 = vpack.c.b16 %v3805, %v3801
        %v3946 = vpack.c.b16 %v3806, %v3802
        %v3947 = vpack.c.b16 %v3811, %v3807
        %v3948 = vpack.c.b16 %v3812, %v3808
        %v3949 = vpack.c.b16 %v3813, %v3809
        %v3950 = vpack.c.b16 %v3814, %v3810
        %v3951 = vpack.c.b16 %v3819, %v3815
        %v3952 = vpack.c.b16 %v3820, %v3816
        %v3953 = vpack.c.b16 %v3821, %v3817
        %v3954 = vpack.c.b16 %v3822, %v3818
        %v3955 = vpack.c.b16 %v3827, %v3823
        %v3956 = vpack.c.b16 %v3828, %v3824
        %v3957 = vpack.c.b16 %v3829, %v3825
        %v3958 = vpack.c.b16 %v3830, %v3826
        %4087 = vmatprep.subr.bf16.mxu0 %v3832
        %4088 = vmatpush1.bf16.msra.mxu0 %v3831
        %4089 = vmatprep.subr.bf16.mxu0 %v3836
        %4090 = vmatpush1.bf16.msra.mxu0 %v3835
        %4091 = vmatprep.subr.bf16.mxu0 %v3840
        %4092 = vmatpush1.bf16.msra.mxu0 %v3839
        %4093 = vmatprep.subr.bf16.mxu0 %v3844
        %4094 = vmatpush1.bf16.msra.mxu0 %v3843
        %4095 = vmatprep.subr.bf16.mxu0 %v3848
        %4096 = vmatpush1.bf16.msra.mxu0 %v3847
        %4097 = vmatprep.subr.bf16.mxu0 %v3852
        %4098 = vmatpush1.bf16.msra.mxu0 %v3851
        %4099 = vmatprep.subr.bf16.mxu0 %v3856
        %4100 = vmatpush1.bf16.msra.mxu0 %v3855
        %4101 = vmatprep.subr.bf16.mxu0 %v3860
        %4102 = vmatpush1.bf16.msra.mxu0 %v3859
        %4103 = vmatprep.subr.bf16.mxu0 %v3864
        %4104 = vmatpush1.bf16.msra.mxu0 %v3863
        %4105 = vmatprep.subr.bf16.mxu0 %v3868
        %4106 = vmatpush1.bf16.msra.mxu0 %v3867
        %4107 = vmatprep.subr.bf16.mxu0 %v3872
        %4108 = vmatpush1.bf16.msra.mxu0 %v3871
        %4109 = vmatprep.subr.bf16.mxu0 %v3876
        %4110 = vmatpush1.bf16.msra.mxu0 %v3875
        %4111 = vmatprep.subr.bf16.mxu0 %v3880
        %4112 = vmatpush1.bf16.msra.mxu0 %v3879
        %4113 = vmatprep.subr.bf16.mxu0 %v3884
        %4114 = vmatpush1.bf16.msra.mxu0 %v3883
        %4115 = vmatprep.subr.bf16.mxu0 %v3888
        %4116 = vmatpush1.bf16.msra.mxu0 %v3887
        %4117 = vmatprep.subr.bf16.mxu0 %v3892
        %4118 = vmatpush1.bf16.msra.mxu0 %v3891
        %4119 = vmatprep.mubr.bf16.mxu0 %v1434
        %4120 = vmatmul.mubr.bf16.gmra.mrb[0].mxu0 %v1433
        %v4121 = vpop.f32.mrb[0].mxu0
        %v4122 = vadd.f32 0.0, %v4121
        %v4123 = vpop.f32.mrb[0].mxu0
        %v4124 = vadd.f32 0.0, %v4123
        %v4125 = vpop.f32.mrb[0].mxu0
        %v4126 = vadd.f32 0.0, %v4125
        %v4127 = vpop.f32.mrb[0].mxu0
        %v4128 = vadd.f32 0.0, %v4127
        %4129 = vdwg.mxu0
        %4130 = vmatprep.subr.bf16.mxu0 %v3896
        %4131 = vmatpush1.bf16.msra.mxu0 %v3895
        %4132 = vmatprep.subr.bf16.mxu0 %v3900
        %4133 = vmatpush1.bf16.msra.mxu0 %v3899
        %4134 = vmatprep.subr.bf16.mxu0 %v3904
        %4135 = vmatpush1.bf16.msra.mxu0 %v3903
        %4136 = vmatprep.subr.bf16.mxu0 %v3908
        %4137 = vmatpush1.bf16.msra.mxu0 %v3907
        %4138 = vmatprep.subr.bf16.mxu0 %v3912
        %4139 = vmatpush1.bf16.msra.mxu0 %v3911
        %4140 = vmatprep.subr.bf16.mxu0 %v3916
        %4141 = vmatpush1.bf16.msra.mxu0 %v3915
        %4142 = vmatprep.subr.bf16.mxu0 %v3920
        %4143 = vmatpush1.bf16.msra.mxu0 %v3919
        %4144 = vmatprep.subr.bf16.mxu0 %v3924
        %4145 = vmatpush1.bf16.msra.mxu0 %v3923
        %4146 = vmatprep.subr.bf16.mxu0 %v3928
        %4147 = vmatpush1.bf16.msra.mxu0 %v3927
        %4148 = vmatprep.subr.bf16.mxu0 %v3932
        %4149 = vmatpush1.bf16.msra.mxu0 %v3931
        %4150 = vmatprep.subr.bf16.mxu0 %v3936
        %4151 = vmatpush1.bf16.msra.mxu0 %v3935
        %4152 = vmatprep.subr.bf16.mxu0 %v3940
        %4153 = vmatpush1.bf16.msra.mxu0 %v3939
        %4154 = vmatprep.subr.bf16.mxu0 %v3944
        %4155 = vmatpush1.bf16.msra.mxu0 %v3943
        %4156 = vmatprep.subr.bf16.mxu0 %v3948
        %4157 = vmatpush1.bf16.msra.mxu0 %v3947
        %4158 = vmatprep.subr.bf16.mxu0 %v3952
        %4159 = vmatpush1.bf16.msra.mxu0 %v3951
        %4160 = vmatprep.subr.bf16.mxu0 %v3956
        %4161 = vmatpush1.bf16.msra.mxu0 %v3955
        %4162 = vmatprep.mubr.bf16.mxu0 %v1436
        %4163 = vmatmul.mubr.bf16.gmra.mrb[0].mxu0 %v1435
        %v4164 = vpop.f32.mrb[0].mxu0
        %v4165 = vadd.f32 %v4122, %v4164
        %v4166 = vpop.f32.mrb[0].mxu0
        %v4167 = vadd.f32 %v4124, %v4166
        %v4168 = vpop.f32.mrb[0].mxu0
        %v4169 = vadd.f32 %v4126, %v4168
        %v4170 = vpop.f32.mrb[0].mxu0
        %v4171 = vadd.f32 %v4128, %v4170
        %4172 = vdwg.mxu0
        %4173 = vmatprep.subr.bf16.mxu0 %v3834
        %4174 = vmatpush1.bf16.msra.mxu0 %v3833
        %4175 = vmatprep.subr.bf16.mxu0 %v3838
        %4176 = vmatpush1.bf16.msra.mxu0 %v3837
        %4177 = vmatprep.subr.bf16.mxu0 %v3842
        %4178 = vmatpush1.bf16.msra.mxu0 %v3841
        %4179 = vmatprep.subr.bf16.mxu0 %v3846
        %4180 = vmatpush1.bf16.msra.mxu0 %v3845
        %4181 = vmatprep.subr.bf16.mxu0 %v3850
        %4182 = vmatpush1.bf16.msra.mxu0 %v3849
        %4183 = vmatprep.subr.bf16.mxu0 %v3854
        %4184 = vmatpush1.bf16.msra.mxu0 %v3853
        %4185 = vmatprep.subr.bf16.mxu0 %v3858
        %4186 = vmatpush1.bf16.msra.mxu0 %v3857
        %4187 = vmatprep.subr.bf16.mxu0 %v3862
        %4188 = vmatpush1.bf16.msra.mxu0 %v3861
        %4189 = vmatprep.subr.bf16.mxu0 %v3866
        %4190 = vmatpush1.bf16.msra.mxu0 %v3865
        %4191 = vmatprep.subr.bf16.mxu0 %v3870
        %4192 = vmatpush1.bf16.msra.mxu0 %v3869
        %4193 = vmatprep.subr.bf16.mxu0 %v3874
        %4194 = vmatpush1.bf16.msra.mxu0 %v3873
        %4195 = vmatprep.subr.bf16.mxu0 %v3878
        %4196 = vmatpush1.bf16.msra.mxu0 %v3877
        %4197 = vmatprep.subr.bf16.mxu0 %v3882
        %4198 = vmatpush1.bf16.msra.mxu0 %v3881
        %4199 = vmatprep.subr.bf16.mxu0 %v3886
        %4200 = vmatpush1.bf16.msra.mxu0 %v3885
        %4201 = vmatprep.subr.bf16.mxu0 %v3890
        %4202 = vmatpush1.bf16.msra.mxu0 %v3889
        %4203 = vmatprep.subr.bf16.mxu0 %v3894
        %4204 = vmatpush1.bf16.msra.mxu0 %v3893
        %4205 = vmatprep.mubr.bf16.mxu0 %v1434
        %4206 = vmatmul.mubr.bf16.gmra.mrb[0].mxu0 %v1433
        %v4207 = vpop.f32.mrb[0].mxu0
        %v4208 = vadd.f32 0.0, %v4207
        %v4209 = vpop.f32.mrb[0].mxu0
        %v4210 = vadd.f32 0.0, %v4209
        %v4211 = vpop.f32.mrb[0].mxu0
        %v4212 = vadd.f32 0.0, %v4211
        %v4213 = vpop.f32.mrb[0].mxu0
        %v4214 = vadd.f32 0.0, %v4213
        %4215 = vdwg.mxu0
        %4216 = vmatprep.subr.bf16.mxu0 %v3898
        %4217 = vmatpush1.bf16.msra.mxu0 %v3897
        %4218 = vmatprep.subr.bf16.mxu0 %v3902
        %4219 = vmatpush1.bf16.msra.mxu0 %v3901
        %4220 = vmatprep.subr.bf16.mxu0 %v3906
        %4221 = vmatpush1.bf16.msra.mxu0 %v3905
        %4222 = vmatprep.subr.bf16.mxu0 %v3910
        %4223 = vmatpush1.bf16.msra.mxu0 %v3909
        %4224 = vmatprep.subr.bf16.mxu0 %v3914
        %4225 = vmatpush1.bf16.msra.mxu0 %v3913
        %4226 = vmatprep.subr.bf16.mxu0 %v3918
        %4227 = vmatpush1.bf16.msra.mxu0 %v3917
        %4228 = vmatprep.subr.bf16.mxu0 %v3922
        %4229 = vmatpush1.bf16.msra.mxu0 %v3921
        %4230 = vmatprep.subr.bf16.mxu0 %v3926
        %4231 = vmatpush1.bf16.msra.mxu0 %v3925
        %4232 = vmatprep.subr.bf16.mxu0 %v3930
        %4233 = vmatpush1.bf16.msra.mxu0 %v3929
        %4234 = vmatprep.subr.bf16.mxu0 %v3934
        %4235 = vmatpush1.bf16.msra.mxu0 %v3933
        %4236 = vmatprep.subr.bf16.mxu0 %v3938
        %4237 = vmatpush1.bf16.msra.mxu0 %v3937
        %4238 = vmatprep.subr.bf16.mxu0 %v3942
        %4239 = vmatpush1.bf16.msra.mxu0 %v3941
        %4240 = vmatprep.subr.bf16.mxu0 %v3946
        %4241 = vmatpush1.bf16.msra.mxu0 %v3945
        %4242 = vmatprep.subr.bf16.mxu0 %v3950
        %4243 = vmatpush1.bf16.msra.mxu0 %v3949
        %4244 = vmatprep.subr.bf16.mxu0 %v3954
        %4245 = vmatpush1.bf16.msra.mxu0 %v3953
        %4246 = vmatprep.subr.bf16.mxu0 %v3958
        %4247 = vmatpush1.bf16.msra.mxu0 %v3957
        %4248 = vmatprep.mubr.bf16.mxu0 %v1436
        %4249 = vmatmul.mubr.bf16.gmra.mrb[0].mxu0 %v1435
        %v4250 = vpop.f32.mrb[0].mxu0
        %v4251 = vadd.f32 %v4208, %v4250
        %v4252 = vpop.f32.mrb[0].mxu0
        %v4253 = vadd.f32 %v4210, %v4252
        %v4254 = vpop.f32.mrb[0].mxu0
        %v4255 = vadd.f32 %v4212, %v4254
        %v4256 = vpop.f32.mrb[0].mxu0
        %v4257 = vadd.f32 %v4214, %v4256
        %4258 = vdwg.mxu0
        %v4259 = vadd.f32 %v3224, %v4165
        %v4260 = vadd.f32 %v3226, %v4167
        %v4261 = vadd.f32 %v3310, %v4251
        %v4262 = vadd.f32 %v3312, %v4253
        %v4263 = vadd.f32 %v3228, %v4169
        %v4264 = vadd.f32 %v3230, %v4171
        %v4265 = vadd.f32 %v3314, %v4255
        %v4266 = vadd.f32 %v3316, %v4257
        %v4267 = vld [vmem:[#allocation14] sm:$0xf]
        %v4269 = vlaneseq
        %v4270 = vshrl.u32 %v4269, 7
        %v4271 = vsub.s32 0, %v4270
        %v4272 = vrot.slane %v4267, %v4271
        %v4273 = vlaneseq
        %v4274 = vshrl.u32 %v4273, 7
        %v4275 = vsub.s32 1, %v4274
        %v4276 = vrot.slane %v4267, %v4275
        %v4277 = vlaneseq
        %v4278 = vshrl.u32 %v4277, 7
        %v4279 = vsub.s32 2, %v4278
        %v4280 = vrot.slane %v4267, %v4279
        %v4281 = vlaneseq
        %v4282 = vshrl.u32 %v4281, 7
        %v4283 = vsub.s32 3, %v4282
        %v4284 = vrot.slane %v4267, %v4283
        %v4289 = vmul.f32 %v4259, %v4272
        %v4290 = vmul.f32 %v4260, %v4276
        %v4291 = vmul.f32 %v4261, %v4280
        %v4292 = vmul.f32 %v4262, %v4284
        %v4293 = vmul.f32 %v4263, %v4272
        %v4294 = vmul.f32 %v4264, %v4276
        %v4295 = vmul.f32 %v4265, %v4280
        %v4296 = vmul.f32 %v4266, %v4284
        %v4297 = vld [vmem:[#allocation16] sm:$0xf]
        %v4299 = vlaneseq
        %v4300 = vshrl.u32 %v4299, 7
        %v4301 = vsub.s32 0, %v4300
        %v4302 = vrot.slane %v4297, %v4301
        %v4303 = vlaneseq
        %v4304 = vshrl.u32 %v4303, 7
        %v4305 = vsub.s32 1, %v4304
        %v4306 = vrot.slane %v4297, %v4305
        %v4307 = vlaneseq
        %v4308 = vshrl.u32 %v4307, 7
        %v4309 = vsub.s32 2, %v4308
        %v4310 = vrot.slane %v4297, %v4309
        %v4311 = vlaneseq
        %v4312 = vshrl.u32 %v4311, 7
        %v4313 = vsub.s32 3, %v4312
        %v4314 = vrot.slane %v4297, %v4313
        %v4319 = vadd.f32 %v4289, %v4302
        %v4320 = vadd.f32 %v4290, %v4306
        %v4321 = vadd.f32 %v4291, %v4310
        %v4322 = vadd.f32 %v4292, %v4314
        %v4323 = vadd.f32 %v4293, %v4302
        %v4324 = vadd.f32 %v4294, %v4306
        %v4325 = vadd.f32 %v4295, %v4310
        %v4326 = vadd.f32 %v4296, %v4314
        %v4327 = vsub.f32 0.0, %v4319
        %v4328 = vsub.f32 0.0, %v4320
        %v4329 = vsub.f32 0.0, %v4321
        %v4330 = vsub.f32 0.0, %v4322
        %v4331 = vsub.f32 0.0, %v4323
        %v4332 = vsub.f32 0.0, %v4324
        %v4333 = vsub.f32 0.0, %v4325
        %v4334 = vsub.f32 0.0, %v4326
        %v4335 = vmul.f32 %v4327, 1.442695
        %v4336 = vpow.pop %v4335
        %v4337 = vmul.f32 %v4328, 1.442695
        %v4338 = vpow.pop %v4337
        %v4339 = vmul.f32 %v4329, 1.442695
        %v4340 = vpow.pop %v4339
        %v4341 = vmul.f32 %v4330, 1.442695
        %v4342 = vpow.pop %v4341
        %v4343 = vmul.f32 %v4331, 1.442695
        %v4344 = vpow.pop %v4343
        %v4345 = vmul.f32 %v4332, 1.442695
        %v4346 = vpow.pop %v4345
        %v4347 = vmul.f32 %v4333, 1.442695
        %v4348 = vpow.pop %v4347
        %v4349 = vmul.f32 %v4334, 1.442695
        %v4350 = vpow.pop %v4349
        %v4351 = vadd.f32 %v4336, 1.0
        %v4352 = vadd.f32 %v4338, 1.0
        %v4353 = vadd.f32 %v4340, 1.0
        %v4354 = vadd.f32 %v4342, 1.0
        %v4355 = vadd.f32 %v4344, 1.0
        %v4356 = vadd.f32 %v4346, 1.0
        %v4357 = vadd.f32 %v4348, 1.0
        %v4358 = vadd.f32 %v4350, 1.0
        %v4359 = vrcp.pop %v4351
        %v4360 = vmul.f32 1.0, %v4359
        %v4361 = vrcp.pop %v4352
        %v4362 = vmul.f32 1.0, %v4361
        %v4363 = vrcp.pop %v4353
        %v4364 = vmul.f32 1.0, %v4363
        %v4365 = vrcp.pop %v4354
        %v4366 = vmul.f32 1.0, %v4365
        %v4367 = vrcp.pop %v4355
        %v4368 = vmul.f32 1.0, %v4367
        %v4369 = vrcp.pop %v4356
        %v4370 = vmul.f32 1.0, %v4369
        %v4371 = vrcp.pop %v4357
        %v4372 = vmul.f32 1.0, %v4371
        %v4373 = vrcp.pop %v4358
        %v4374 = vmul.f32 1.0, %v4373
        %v4375 = vmul.f32 %v4319, %v4360
        %v4376 = vmul.f32 %v4320, %v4362
        %v4377 = vmul.f32 %v4321, %v4364
        %v4378 = vmul.f32 %v4322, %v4366
        %v4379 = vmul.f32 %v4323, %v4368
        %v4380 = vmul.f32 %v4324, %v4370
        %v4381 = vmul.f32 %v4325, %v4372
        %v4382 = vmul.f32 %v4326, %v4374
        %v4383 = vld [vmem:[#allocation5] sm:$0xff]
        %v4384 = vld [vmem:[#allocation5 + $0x8] sm:$0xff]
        %v4385 = vld [vmem:[#allocation5 + $0x10] sm:$0xff]
        %v4386 = vld [vmem:[#allocation5 + $0x18] sm:$0xff]
        %v4387 = vld [vmem:[#allocation5 + $0x20] sm:$0xff]
        %v4388 = vld [vmem:[#allocation5 + $0x28] sm:$0xff]
        %v4389 = vld [vmem:[#allocation5 + $0x30] sm:$0xff]
        %v4390 = vld [vmem:[#allocation5 + $0x38] sm:$0xff]
        %v4391 = vld [vmem:[#allocation5 + $0x40] sm:$0xff]
        %v4392 = vld [vmem:[#allocation5 + $0x48] sm:$0xff]
        %v4393 = vld [vmem:[#allocation5 + $0x50] sm:$0xff]
        %v4394 = vld [vmem:[#allocation5 + $0x58] sm:$0xff]
        %v4395 = vld [vmem:[#allocation5 + $0x60] sm:$0xff]
        %v4396 = vld [vmem:[#allocation5 + $0x68] sm:$0xff]
        %v4397 = vld [vmem:[#allocation5 + $0x70] sm:$0xff]
        %v4398 = vld [vmem:[#allocation5 + $0x78] sm:$0xff]
        %v4399 = vld [vmem:[#allocation7] sm:$0xf]
        %v4401 = vlaneseq
        %v4402 = vshrl.u32 %v4401, 7
        %v4403 = vsub.s32 0, %v4402
        %v4404 = vrot.slane %v4399, %v4403
        %v4405 = vlaneseq
        %v4406 = vshrl.u32 %v4405, 7
        %v4407 = vsub.s32 1, %v4406
        %v4408 = vrot.slane %v4399, %v4407
        %v4409 = vlaneseq
        %v4410 = vshrl.u32 %v4409, 7
        %v4411 = vsub.s32 2, %v4410
        %v4412 = vrot.slane %v4399, %v4411
        %v4413 = vlaneseq
        %v4414 = vshrl.u32 %v4413, 7
        %v4415 = vsub.s32 3, %v4414
        %v4416 = vrot.slane %v4399, %v4415
        %v4437 = vunpack.c.l.b16 %v4383
        %v4438 = vunpack.c.h.b16 %v4383
        %v4439 = vunpack.c.l.b16 %v4384
        %v4440 = vunpack.c.h.b16 %v4384
        %v4441 = vunpack.c.l.b16 %v4385
        %v4442 = vunpack.c.h.b16 %v4385
        %v4443 = vunpack.c.l.b16 %v4386
        %v4444 = vunpack.c.h.b16 %v4386
        %v4445 = vunpack.c.l.b16 %v4387
        %v4446 = vunpack.c.h.b16 %v4387
        %v4447 = vunpack.c.l.b16 %v4388
        %v4448 = vunpack.c.h.b16 %v4388
        %v4449 = vunpack.c.l.b16 %v4389
        %v4450 = vunpack.c.h.b16 %v4389
        %v4451 = vunpack.c.l.b16 %v4390
        %v4452 = vunpack.c.h.b16 %v4390
        %v4453 = vunpack.c.l.b16 %v4391
        %v4454 = vunpack.c.h.b16 %v4391
        %v4455 = vunpack.c.l.b16 %v4392
        %v4456 = vunpack.c.h.b16 %v4392
        %v4457 = vunpack.c.l.b16 %v4393
        %v4458 = vunpack.c.h.b16 %v4393
        %v4459 = vunpack.c.l.b16 %v4394
        %v4460 = vunpack.c.h.b16 %v4394
        %v4461 = vunpack.c.l.b16 %v4395
        %v4462 = vunpack.c.h.b16 %v4395
        %v4463 = vunpack.c.l.b16 %v4396
        %v4464 = vunpack.c.h.b16 %v4396
        %v4465 = vunpack.c.l.b16 %v4397
        %v4466 = vunpack.c.h.b16 %v4397
        %v4467 = vunpack.c.l.b16 %v4398
        %v4468 = vunpack.c.h.b16 %v4398
        %v4469 = vpack.c.b16 %v4441, %v4437
        %v4470 = vpack.c.b16 %v4442, %v4438
        %v4471 = vpack.c.b16 %v4443, %v4439
        %v4472 = vpack.c.b16 %v4444, %v4440
        %v4473 = vpack.c.b16 %v4449, %v4445
        %v4474 = vpack.c.b16 %v4450, %v4446
        %v4475 = vpack.c.b16 %v4451, %v4447
        %v4476 = vpack.c.b16 %v4452, %v4448
        %v4477 = vpack.c.b16 %v4457, %v4453
        %v4478 = vpack.c.b16 %v4458, %v4454
        %v4479 = vpack.c.b16 %v4459, %v4455
        %v4480 = vpack.c.b16 %v4460, %v4456
        %v4481 = vpack.c.b16 %v4465, %v4461
        %v4482 = vpack.c.b16 %v4466, %v4462
        %v4483 = vpack.c.b16 %v4467, %v4463
        %v4484 = vpack.c.b16 %v4468, %v4464
        %4501 = vmatprep.subr.bf16.mxu0 %v4470
        %4502 = vmatpush1.bf16.msra.mxu0 %v4469
        %4503 = vmatprep.subr.bf16.mxu0 %v4474
        %4504 = vmatpush1.bf16.msra.mxu0 %v4473
        %4505 = vmatprep.subr.bf16.mxu0 %v4478
        %4506 = vmatpush1.bf16.msra.mxu0 %v4477
        %4507 = vmatprep.subr.bf16.mxu0 %v4482
        %4508 = vmatpush1.bf16.msra.mxu0 %v4481
        %4509 = vmatprep.subr.bf16.mxu0 0
        %4510 = vmatpush1.bf16.msra.mxu0 0
        %4511 = vmatprep.subr.bf16.mxu0 0
        %4512 = vmatpush1.bf16.msra.mxu0 0
        %4513 = vmatprep.subr.bf16.mxu0 0
        %4514 = vmatpush1.bf16.msra.mxu0 0
        %4515 = vmatprep.subr.bf16.mxu0 0
        %4516 = vmatpush1.bf16.msra.mxu0 0
        %4517 = vmatprep.subr.bf16.mxu0 0
        %4518 = vmatpush1.bf16.msra.mxu0 0
        %4519 = vmatprep.subr.bf16.mxu0 0
        %4520 = vmatpush1.bf16.msra.mxu0 0
        %4521 = vmatprep.subr.bf16.mxu0 0
        %4522 = vmatpush1.bf16.msra.mxu0 0
        %4523 = vmatprep.subr.bf16.mxu0 0
        %4524 = vmatpush1.bf16.msra.mxu0 0
        %4525 = vmatprep.subr.bf16.mxu0 0
        %4526 = vmatpush1.bf16.msra.mxu0 0
        %4527 = vmatprep.subr.bf16.mxu0 0
        %4528 = vmatpush1.bf16.msra.mxu0 0
        %4529 = vmatprep.subr.bf16.mxu0 0
        %4530 = vmatpush1.bf16.msra.mxu0 0
        %4531 = vmatprep.subr.bf16.mxu0 0
        %4532 = vmatpush1.bf16.msra.mxu0 0
        %4533 = vmatprep.mubr.bf16.mxu0 0
        %4534 = vmatmul.mubr.bf16.gmra.mrb[0].mxu0 %v686
        %v4535 = vpop.f32.mrb[0].mxu0
        %v4536 = vadd.f32 %v4404, %v4535
        %v4537 = vpop.f32.mrb[0].mxu0
        %v4538 = vadd.f32 %v4408, %v4537
        %v4539 = vpop.f32.mrb[0].mxu0
        %v4540 = vadd.f32 %v4404, %v4539
        %v4541 = vpop.f32.mrb[0].mxu0
        %v4542 = vadd.f32 %v4408, %v4541
        %4543 = vdwg.mxu0
        %4544 = vmatprep.subr.bf16.mxu0 %v4472
        %4545 = vmatpush1.bf16.msra.mxu0 %v4471
        %4546 = vmatprep.subr.bf16.mxu0 %v4476
        %4547 = vmatpush1.bf16.msra.mxu0 %v4475
        %4548 = vmatprep.subr.bf16.mxu0 %v4480
        %4549 = vmatpush1.bf16.msra.mxu0 %v4479
        %4550 = vmatprep.subr.bf16.mxu0 %v4484
        %4551 = vmatpush1.bf16.msra.mxu0 %v4483
        %4552 = vmatprep.subr.bf16.mxu0 0
        %4553 = vmatpush1.bf16.msra.mxu0 0
        %4554 = vmatprep.subr.bf16.mxu0 0
        %4555 = vmatpush1.bf16.msra.mxu0 0
        %4556 = vmatprep.subr.bf16.mxu0 0
        %4557 = vmatpush1.bf16.msra.mxu0 0
        %4558 = vmatprep.subr.bf16.mxu0 0
        %4559 = vmatpush1.bf16.msra.mxu0 0
        %4560 = vmatprep.subr.bf16.mxu0 0
        %4561 = vmatpush1.bf16.msra.mxu0 0
        %4562 = vmatprep.subr.bf16.mxu0 0
        %4563 = vmatpush1.bf16.msra.mxu0 0
        %4564 = vmatprep.subr.bf16.mxu0 0
        %4565 = vmatpush1.bf16.msra.mxu0 0
        %4566 = vmatprep.subr.bf16.mxu0 0
        %4567 = vmatpush1.bf16.msra.mxu0 0
        %4568 = vmatprep.subr.bf16.mxu0 0
        %4569 = vmatpush1.bf16.msra.mxu0 0
        %4570 = vmatprep.subr.bf16.mxu0 0
        %4571 = vmatpush1.bf16.msra.mxu0 0
        %4572 = vmatprep.subr.bf16.mxu0 0
        %4573 = vmatpush1.bf16.msra.mxu0 0
        %4574 = vmatprep.subr.bf16.mxu0 0
        %4575 = vmatpush1.bf16.msra.mxu0 0
        %4576 = vmatprep.mubr.bf16.mxu0 0
        %4577 = vmatmul.mubr.bf16.gmra.mrb[0].mxu0 %v686
        %v4578 = vpop.f32.mrb[0].mxu0
        %v4579 = vadd.f32 %v4412, %v4578
        %v4580 = vpop.f32.mrb[0].mxu0
        %v4581 = vadd.f32 %v4416, %v4580
        %v4582 = vpop.f32.mrb[0].mxu0
        %v4583 = vadd.f32 %v4412, %v4582
        %v4584 = vpop.f32.mrb[0].mxu0
        %v4585 = vadd.f32 %v4416, %v4584
        %4586 = vdwg.mxu0
        %v4587 = vadd.f32 %v4375, %v4536
        %v4588 = vadd.f32 %v4376, %v4538
        %v4589 = vadd.f32 %v4377, %v4579
        %v4590 = vadd.f32 %v4378, %v4581
        %v4591 = vadd.f32 %v4379, %v4540
        %v4592 = vadd.f32 %v4380, %v4542
        %v4593 = vadd.f32 %v4381, %v4583
        %v4594 = vadd.f32 %v4382, %v4585
        %4595 = vst [vmem:[%s456] sm:$0xff] %v4587
        %4596 = vst [vmem:[%s456 + $0x8] sm:$0xff] %v4588
        %4597 = vst [vmem:[%s456 + $0x10] sm:$0xff] %v4589
        %4598 = vst [vmem:[%s456 + $0x18] sm:$0xff] %v4590
        %4599 = vst [vmem:[%s456 + $0x20] sm:$0xff] %v4591
        %4600 = vst [vmem:[%s456 + $0x28] sm:$0xff] %v4592
        %4601 = vst [vmem:[%s456 + $0x30] sm:$0xff] %v4593
        %4602 = vst [vmem:[%s456 + $0x38] sm:$0xff] %v4594
        %s4603 = sand.u32 %s232, 1
        %s4604 = scalar_lea.sflag [#allocation4], %s4603
        %s4605 = sand.u32 %s232, 1
        %s4606 = smul.addr %s4605, 64
        %s4607 = scalar_lea.vmem [#allocation17], %s4606
        // Predicated region
        $region93: #{tpu_custom_call.1} parent=55 // pred_check
          %p4608 = pneg %p242
        $region94: #{tpu_custom_call.1} parent=55 // pred_check_branch
          %4610 = sbr.rel (%p4608) target = $region96
        $region95: #{tpu_custom_call.1} parent=55 // pred_region
          %s4612 = ssub.s32 1024, 1024
          %4613 = vsyncadd %s4604, %s4612
          %s4614 = smul.addr %s30, 8
          %s4615 = smul.addr %s4614, 128
          %s4616 = scalar_lea.hbm %s9, %s4615
          %s4617 = sshll.u32 %s4607, 4
          %s4618 = int_to_ptr.vmem [resolvable:$true] %s4617
          %4623 = dma.vmem_to_hbm [thread:$0]  %s4618, 1024, %s4616, %s4604, 512, 512, 32
        $region96: #{tpu_custom_call.1} parent=55 // pred_fallthru
          _
      $region56: #{tpu_custom_call.1} parent=5 // pred_fallthru
        _
      %p4624 = scmp.le.s32.totalorder 2, %s25
      // Predicated region
      $region97: #{tpu_custom_call.1} parent=5 // pred_check
        %p4625 = pneg %p4624
      $region98: #{tpu_custom_call.1} parent=5 // pred_check_branch
        %4627 = sbr.rel (%p4625) target = $region100
      $region99: #{tpu_custom_call.1} parent=5 // pred_region
        %s4628 = ssub.s32 %s25, 2
        // Predicated region
        $region101: #{tpu_custom_call.1} parent=99 // pred_check
          %p4629 = pneg %p248
        $region102: #{tpu_custom_call.1} parent=99 // pred_check_branch
          %4631 = sbr.rel (%p4629) target = $region104
        $region103: #{tpu_custom_call.1} parent=99 // pred_region
          %s4632 = sand.u32 %s233, 1
          %s4633 = scalar_lea.sflag [#allocation4], %s4632
          %s4634 = sand.u32 %s233, 1
          %s4635 = smul.addr %s4634, 64
          %s4636 = scalar_lea.vmem [#allocation17], %s4635
          %4637 = dma.done %s4633, 1024
        $region104: #{tpu_custom_call.1} parent=99 // pred_fallthru
          _
      $region100: #{tpu_custom_call.1} parent=5 // pred_fallthru
        _
    $region6: #{tpu_custom_call.1} parent=1 // loop_footer
      %s29 = sadd.s32 1, %s25
    $region7: #{tpu_custom_call.1} parent=1 // loop_footer_branch
      %24 = sbr.rel target = $region3
    $region8: #{tpu_custom_call.1} parent=1 // loop_exit
      _
    %4638 = vsyncpa [#allocation3], 1
    %s4639 = scalar_lea.sflag [#allocation3], 1
    %4640 = vsyncpa %s4639, 1
    %4641 = vsyncpa [#allocation6], 1
    %4642 = vsyncpa [#allocation9], 1
    %4643 = vsyncpa [#allocation12], 1
    %4644 = vsyncpa [#allocation15], 1
    %4645 = vsyncpa [#allocation4], 1
    %s4646 = scalar_lea.sflag [#allocation4], 1
    %4647 = vsyncpa %s4646, 1

</llo_original>
